<compile_context>
chip_gen: v6e
topology: v6e:2x2x1
jax: 0.10.0
libtpu: 0.0.40
codegen_flags: <defaults>
</compile_context>

<pallas_src>
import math

import numpy as np
import jax
import jax.numpy as jnp
from jax.experimental import pallas as pl
from jax.experimental.pallas import tpu as pltpu


# ---------------------------------------------------------------------------
# In-kernel exact GELU (torch.nn.GELU(approximate='none')), computed in f32.
# erf via Abramowitz & Stegun 7.1.26; the 1/(1+p|x|) goes through the EUP
# approx reciprocal (error is damped by exp(-x^2), well below tolerance).
# ---------------------------------------------------------------------------
def _erf_f32(x):
    a1, a2, a3, a4, a5 = 0.254829592, -0.284496736, 1.421413741, -1.453152027, 1.061405429
    p = 0.3275911
    ax = jnp.abs(x)
    t = pl.reciprocal(1.0 + p * ax, approx=True)
    poly = ((((a5 * t + a4) * t + a3) * t + a2) * t + a1) * t
    y = 1.0 - poly * jnp.exp(-ax * ax)
    return jnp.where(x >= 0.0, y, -y)


def _gelu_exact(x):
    return 0.5 * x * (1.0 + _erf_f32(x * (1.0 / math.sqrt(2.0))))


# ---------------------------------------------------------------------------
# Fully fused encoder kernel (one batch element per grid step).
# Activations are lane-dense 2-D values (H, W*C) in bf16.
# ---------------------------------------------------------------------------
def _encoder_kernel(x_ref,
                    s1_ref, m1_ref, b1_ref,
                    m2_ref, b2_ref,
                    s3_ref, m3_ref, b3_ref,
                    m4_ref, b4_ref,
                    s5_ref, m5_ref, b5_ref,
                    wfc_ref, bfc_ref,
                    o_ref):
    def conv_down(xv, s_ref, m_ref, b_ref):
        # stride-2 3x3 conv (pad 1) + GELU.
        # Rows needed by tap kh (2*ho + kh - 1, zero-padded) are picked with a
        # 0/1 selection matmul; W taps + channel mixing live in m_ref[kh].
        acc = None
        for kh in range(3):
            rows = jnp.dot(s_ref[kh], xv, preferred_element_type=jnp.float32)
            rows = rows.astype(jnp.bfloat16)                    # exact (0/1 select)
            t = jnp.dot(rows, m_ref[kh], preferred_element_type=jnp.float32)
            acc = t if acc is None else acc + t
        return _gelu_exact(acc + b_ref[...]).astype(jnp.bfloat16)

    def conv_same(xv, m_ref, b_ref):
        # stride-1 3x3 conv (pad 1) + GELU: static row slices of a zero-row
        # padded value, 3 accumulating matmuls.
        h, l = xv.shape
        zr = jnp.zeros((1, l), xv.dtype)
        xp = jnp.concatenate([zr, xv, zr], axis=0)              # (h+2, l)
        acc = None
        for kh in range(3):
            t = jnp.dot(xp[kh:kh + h, :], m_ref[kh],
                        preferred_element_type=jnp.float32)
            acc = t if acc is None else acc + t
        return _gelu_exact(acc + b_ref[...]).astype(jnp.bfloat16)

    x = x_ref[0]                                                # (64, 64*Cin) bf16

    y = conv_down(x, s1_ref, m1_ref, b1_ref)                    # (32, 32*c)
    y = conv_same(y, m2_ref, b2_ref)                            # (32, 32*c)
    y = conv_down(y, s3_ref, m3_ref, b3_ref)                    # (16, 16*2c)
    y = conv_same(y, m4_ref, b4_ref)                            # (16, 16*2c)
    y = conv_down(y, s5_ref, m5_ref, b5_ref)                    # (8,   8*2c)

    # Fused [fc_mu | fc_log_var] head, done per output row (no reshape needed).
    acc = bfc_ref[...]                                          # (1, 2*latent) f32
    for h in range(y.shape[0]):
        acc = acc + jnp.dot(y[h:h + 1, :], wfc_ref[h],
                            preferred_element_type=jnp.float32)
    o_ref[0] = acc


# ---------------------------------------------------------------------------
# Host-side wrapper: single pallas_call, grid over batch.
# ---------------------------------------------------------------------------
@jax.jit
def encoder_forward(x_nchw, kparams):
    layers, (w_fc, b_fc) = kparams
    (s1, m1, b1), (_u2, m2, b2), (s3, m3, b3), (_u4, m4, b4), (s5, m5, b5) = layers
    n, cin, h_in, w_in = x_nchw.shape
    latent = w_fc.shape[-1] // 2

    # NCHW -> lane-dense (N, H, W*C) bf16 (one cheap XLA fusion on the raw input).
    x = jnp.transpose(x_nchw, (0, 2, 3, 1)).reshape(n, h_in, w_in * cin)
    x = x.astype(jnp.bfloat16)

    weights = [s1, m1, b1, m2, b2, s3, m3, b3, m4, b4, s5, m5, b5, w_fc, b_fc]

    def _const_spec(a):
        nd = a.ndim
        return pl.BlockSpec(a.shape, lambda i, _nd=nd: (0,) * _nd)

    out = pl.pallas_call(
        _encoder_kernel,
        out_shape=jax.ShapeDtypeStruct((n, 1, 2 * latent), jnp.float32),
        grid=(n,),
        in_specs=[pl.BlockSpec((1, h_in, w_in * cin), lambda i: (i, 0, 0))]
                 + [_const_spec(a) for a in weights],
        out_specs=pl.BlockSpec((1, 1, 2 * latent), lambda i: (i, 0, 0)),
        compiler_params=pltpu.CompilerParams(dimension_semantics=("parallel",)),
        cost_estimate=pl.CostEstimate(flops=46_000_000 * n,
                                      transcendentals=25_600 * n,
                                      bytes_accessed=1_800_000 + 25_000 * n),
    )(x, *weights)

    out = out[:, 0, :]
    return out[:, :latent], out[:, latent:]


# ---------------------------------------------------------------------------
# Parameter init (kaiming-normal-like, zero biases; apply_init_scale=True).
# ---------------------------------------------------------------------------
def init_params(key, c_in, c_hid, latent_dim):
    specs = [(c_in, c_hid, 2),
             (c_hid, c_hid, 1),
             (c_hid, 2 * c_hid, 2),
             (2 * c_hid, 2 * c_hid, 1),
             (2 * c_hid, 2 * c_hid, 2)]
    convs = []
    for i, (cin, cout, s) in enumerate(specs):
        k = jax.random.fold_in(key, i)
        fan_out = cout * 9
        w = jax.random.normal(k, (3, 3, cin, cout), jnp.float32) * math.sqrt(2.0 / fan_out)
        b = jnp.zeros((cout,), jnp.float32)
        convs.append((w, b, s))
    feat = 2 * 8 * 8 * c_hid                      # nn.Linear(2*8*8*c_hid, latent_dim)
    w_mu = jax.random.normal(jax.random.fold_in(key, 100), (feat, latent_dim),
                             jnp.float32) * math.sqrt(2.0 / feat)
    w_lv = jax.random.normal(jax.random.fold_in(key, 101), (feat, latent_dim),
                             jnp.float32) * math.sqrt(2.0 / feat)
    b_mu = jnp.zeros((latent_dim,), jnp.float32)
    b_lv = jnp.zeros((latent_dim,), jnp.float32)
    return convs, (w_mu, b_mu, w_lv, b_lv)


# ---------------------------------------------------------------------------
# One-time conversion into the kernel-side format:
#   * per conv: 3 structured matrices M_kh (W taps + channel mix + W padding
#     folded in), dense bias row, and (for stride-2) 3 row-selection matrices.
#   * fused, row-permuted FC weight reshaped to (H5, W5*C5, 2*latent).
# ---------------------------------------------------------------------------
def prepare_kernel_params(params, spatial=64):
    convs, (w_mu, b_mu, w_lv, b_lv) = params
    layers = []
    size = spatial
    for (w, b, s) in convs:
        w_np = np.asarray(w, np.float32)                     # (3, 3, cin, cout) HWIO
        cin, cout = int(w_np.shape[2]), int(w_np.shape[3])
        w_in = size
        w_out = (w_in + 2 - 3) // s + 1
        m = np.zeros((3, w_in * cin, w_out * cout), np.float32)
        for kh in range(3):
            for wo in range(w_out):
                for kw in range(3):
                    wi = s * wo + kw - 1                     # pad=1; OOB taps dropped
                    if 0 <= wi < w_in:
                        m[kh, wi * cin:(wi + 1) * cin,
                          wo * cout:(wo + 1) * cout] = w_np[kh, kw]
        bias = np.tile(np.asarray(b, np.float32), w_out)[None, :]
        if s == 2:
            sel = np.zeros((3, w_out, w_in), np.float32)
            for kh in range(3):
                for ho in range(w_out):
                    j = 2 * ho + kh - 1
                    if 0 <= j < w_in:
                        sel[kh, ho, j] = 1.0
            sel = jnp.asarray(sel, jnp.bfloat16)
        else:
            sel = None
        layers.append((sel, jnp.asarray(m, jnp.bfloat16), jnp.asarray(bias, jnp.float32)))
        size = w_out

    c5 = int(np.asarray(convs[-1][0]).shape[-1])
    feat = int(w_mu.shape[0])
    hw = size
    assert feat == hw * hw * c5
    # kernel feature order: h*(W*C) + w*C + c ; torch Flatten (NCHW): c*H*W + h*W + w
    perm = np.zeros((feat,), np.int64)
    for h in range(hw):
        for w_ in range(hw):
            for c in range(c5):
                perm[h * hw * c5 + w_ * c5 + c] = c * hw * hw + h * hw + w_
    w_fc = np.concatenate([np.asarray(w_mu, np.float32),
                           np.asarray(w_lv, np.float32)], axis=1)[perm, :]
    w_fc = w_fc.reshape(hw, hw * c5, -1)
    b_fc = np.concatenate([np.asarray(b_mu, np.float32),
                           np.asarray(b_lv, np.float32)])[None, :]
    return layers, (jnp.asarray(w_fc, jnp.bfloat16), jnp.asarray(b_fc, jnp.float32))


# ---------------------------------------------------------------------------
# References (correctness checks only)
# ---------------------------------------------------------------------------
def encoder_reference_f32(x_nchw, params):
    convs, (w_mu, b_mu, w_lv, b_lv) = params
    y = jnp.transpose(x_nchw, (0, 2, 3, 1))
    for (w, b, s) in convs:
        y = jax.lax.conv_general_dilated(
            y, w, window_strides=(s, s), padding=((1, 1), (1, 1)),
            dimension_numbers=("NHWC", "HWIO", "NHWC"),
            precision=jax.lax.Precision.HIGHEST) + b
        y = jax.nn.gelu(y, approximate=False)
    n = y.shape[0]
    flat = jnp.transpose(y, (0, 3, 1, 2)).reshape(n, -1)
    return flat @ w_mu + b_mu, flat @ w_lv + b_lv


def encoder_reference_bf16(x_nchw, params):
    """Mirrors the kernel's numerics (bf16 MXU inputs, f32 accumulation/GELU)."""
    convs, (w_mu, b_mu, w_lv, b_lv) = params
    y = jnp.transpose(x_nchw, (0, 2, 3, 1)).astype(jnp.bfloat16)
    for (w, b, s) in convs:
        acc = jax.lax.conv_general_dilated(
            y, w.astype(jnp.bfloat16), window_strides=(s, s),
            padding=((1, 1), (1, 1)),
            dimension_numbers=("NHWC", "HWIO", "NHWC"),
            preferred_element_type=jnp.float32) + b
        y = jax.nn.gelu(acc, approximate=False).astype(jnp.bfloat16)
    n = y.shape[0]
    flat = jnp.transpose(y, (0, 3, 1, 2)).reshape(n, -1)
    mu = jnp.dot(flat, w_mu.astype(jnp.bfloat16), preferred_element_type=jnp.float32) + b_mu
    lv = jnp.dot(flat, w_lv.astype(jnp.bfloat16), preferred_element_type=jnp.float32) + b_lv
    return mu, lv


if __name__ == "__main__":
    key = jax.random.PRNGKey(0)
    N, C_IN, H, W = 2, 3, 64, 64          # width=64 branch requires 64x64 input
    C_HID, LATENT = 8, 16

    params = init_params(key, C_IN, C_HID, LATENT)
    kparams = prepare_kernel_params(params, spatial=H)
    x = jax.random.normal(jax.random.fold_in(key, 999), (N, C_IN, H, W), jnp.float32)

    mu, log_var = encoder_forward(x, kparams)
    jax.block_until_ready((mu, log_var))
    assert mu.shape == (N, LATENT) and log_var.shape == (N, LATENT)

    # Structural check vs a reference with matching bf16/f32 numerics.
    mu_m, lv_m = encoder_reference_bf16(x, params)
    err_m = max(float(jnp.max(jnp.abs(mu - mu_m))),
                float(jnp.max(jnp.abs(log_var - lv_m))))
    assert err_m < 3e-2, f"mismatch vs bf16-matched reference: {err_m}"

    # Fidelity check vs the full-f32 reference (loose: accounts for bf16 MXU inputs).
    mu_f, lv_f = encoder_reference_f32(x, params)
    ok = bool(jnp.all(jnp.abs(mu - mu_f) <= 0.1 + 0.1 * jnp.abs(mu_f))
              & jnp.all(jnp.abs(log_var - lv_f) <= 0.1 + 0.1 * jnp.abs(lv_f)))
    assert ok, "mismatch vs f32 reference beyond expected bf16 tolerance"

    print("KERNEL_OK")
</pallas_src>

<mosaic_0001>
module attributes {stable_mosaic.version = 11 : i64} {
  func.func @_encoder_kernel(%arg0: i32, %arg1: memref<1x64x192xbf16, #tpu.memory_space<vmem>>, %arg2: memref<3x32x64xbf16, #tpu.memory_space<vmem>>, %arg3: memref<3x192x256xbf16, #tpu.memory_space<vmem>>, %arg4: memref<1x256xf32, #tpu.memory_space<vmem>>, %arg5: memref<3x256x256xbf16, #tpu.memory_space<vmem>>, %arg6: memref<1x256xf32, #tpu.memory_space<vmem>>, %arg7: memref<3x16x32xbf16, #tpu.memory_space<vmem>>, %arg8: memref<3x256x256xbf16, #tpu.memory_space<vmem>>, %arg9: memref<1x256xf32, #tpu.memory_space<vmem>>, %arg10: memref<3x256x256xbf16, #tpu.memory_space<vmem>>, %arg11: memref<1x256xf32, #tpu.memory_space<vmem>>, %arg12: memref<3x8x16xbf16, #tpu.memory_space<vmem>>, %arg13: memref<3x256x128xbf16, #tpu.memory_space<vmem>>, %arg14: memref<1x128xf32, #tpu.memory_space<vmem>>, %arg15: memref<8x128x32xbf16, #tpu.memory_space<vmem>>, %arg16: memref<1x32xf32, #tpu.memory_space<vmem>>, %arg17: memref<1x1x32xf32, #tpu.memory_space<vmem>>) attributes {dimension_semantics = [#tpu.dimension_semantics<parallel>], iteration_bounds = array<i64: 2>, scalar_prefetch = 0 : i64, scratch_operands = 0 : i64, tpu.core_type = #tpu.core_type<tc>, window_params = [{transform_indices = @transform_0, window_bounds = array<i64: 1, 64, 192>}, {pipeline_mode = #tpu.pipeline_mode<synchronous>, transform_indices = @transform_1, window_bounds = array<i64: 3, 32, 64>}, {pipeline_mode = #tpu.pipeline_mode<synchronous>, transform_indices = @transform_2, window_bounds = array<i64: 3, 192, 256>}, {pipeline_mode = #tpu.pipeline_mode<synchronous>, transform_indices = @transform_3, window_bounds = array<i64: 1, 256>}, {pipeline_mode = #tpu.pipeline_mode<synchronous>, transform_indices = @transform_4, window_bounds = array<i64: 3, 256, 256>}, {pipeline_mode = #tpu.pipeline_mode<synchronous>, transform_indices = @transform_5, window_bounds = array<i64: 1, 256>}, {pipeline_mode = #tpu.pipeline_mode<synchronous>, transform_indices = @transform_6, window_bounds = array<i64: 3, 16, 32>}, {pipeline_mode = #tpu.pipeline_mode<synchronous>, transform_indices = @transform_7, window_bounds = array<i64: 3, 256, 256>}, {pipeline_mode = #tpu.pipeline_mode<synchronous>, transform_indices = @transform_8, window_bounds = array<i64: 1, 256>}, {pipeline_mode = #tpu.pipeline_mode<synchronous>, transform_indices = @transform_9, window_bounds = array<i64: 3, 256, 256>}, {pipeline_mode = #tpu.pipeline_mode<synchronous>, transform_indices = @transform_10, window_bounds = array<i64: 1, 256>}, {pipeline_mode = #tpu.pipeline_mode<synchronous>, transform_indices = @transform_11, window_bounds = array<i64: 3, 8, 16>}, {pipeline_mode = #tpu.pipeline_mode<synchronous>, transform_indices = @transform_12, window_bounds = array<i64: 3, 256, 128>}, {pipeline_mode = #tpu.pipeline_mode<synchronous>, transform_indices = @transform_13, window_bounds = array<i64: 1, 128>}, {pipeline_mode = #tpu.pipeline_mode<synchronous>, transform_indices = @transform_14, window_bounds = array<i64: 8, 128, 32>}, {pipeline_mode = #tpu.pipeline_mode<synchronous>, transform_indices = @transform_15, window_bounds = array<i64: 1, 32>}, {transform_indices = @transform_16, window_bounds = array<i64: 1, 1, 32>}]} {
    %c0 = arith.constant 0 : index
    %c0_0 = arith.constant 0 : index
    %c0_1 = arith.constant 0 : index
    %0 = vector.load %arg1[%c0, %c0_0, %c0_1] : memref<1x64x192xbf16, #tpu.memory_space<vmem>>, vector<1x64x192xbf16>
    %1 = vector.shape_cast %0 : vector<1x64x192xbf16> to vector<64x192xbf16>
    %c0_2 = arith.constant 0 : index
    %c0_3 = arith.constant 0 : index
    %c0_4 = arith.constant 0 : index
    %2 = vector.load %arg2[%c0_2, %c0_3, %c0_4] : memref<3x32x64xbf16, #tpu.memory_space<vmem>>, vector<1x32x64xbf16>
    %3 = vector.shape_cast %2 : vector<1x32x64xbf16> to vector<32x64xbf16>
    %cst = arith.constant dense<0.000000e+00> : vector<32x192xf32>
    %4 = tpu.matmul %3, %1, %cst {dimension_numbers = #tpu.dot_dimension_numbers<[1], [0], [0], [1], [0, 0, 1, 1], [], []>} : vector<32x64xbf16>, vector<64x192xbf16>, vector<32x192xf32> -> vector<32x192xf32>
    %5 = arith.truncf %4 : vector<32x192xf32> to vector<32x192xbf16>
    %c0_5 = arith.constant 0 : index
    %c0_6 = arith.constant 0 : index
    %c0_7 = arith.constant 0 : index
    %6 = vector.load %arg3[%c0_5, %c0_6, %c0_7] : memref<3x192x256xbf16, #tpu.memory_space<vmem>>, vector<1x192x256xbf16>
    %7 = vector.shape_cast %6 : vector<1x192x256xbf16> to vector<192x256xbf16>
    %cst_8 = arith.constant dense<0.000000e+00> : vector<32x256xf32>
    %8 = tpu.matmul %5, %7, %cst_8 {dimension_numbers = #tpu.dot_dimension_numbers<[1], [0], [0], [1], [0, 0, 1, 1], [], []>} : vector<32x192xbf16>, vector<192x256xbf16>, vector<32x256xf32> -> vector<32x256xf32>
    %c1 = arith.constant 1 : index
    %c0_9 = arith.constant 0 : index
    %c0_10 = arith.constant 0 : index
    %9 = vector.load %arg2[%c1, %c0_9, %c0_10] : memref<3x32x64xbf16, #tpu.memory_space<vmem>>, vector<1x32x64xbf16>
    %10 = vector.shape_cast %9 : vector<1x32x64xbf16> to vector<32x64xbf16>
    %cst_11 = arith.constant dense<0.000000e+00> : vector<32x192xf32>
    %11 = tpu.matmul %10, %1, %cst_11 {dimension_numbers = #tpu.dot_dimension_numbers<[1], [0], [0], [1], [0, 0, 1, 1], [], []>} : vector<32x64xbf16>, vector<64x192xbf16>, vector<32x192xf32> -> vector<32x192xf32>
    %12 = arith.truncf %11 : vector<32x192xf32> to vector<32x192xbf16>
    %c1_12 = arith.constant 1 : index
    %c0_13 = arith.constant 0 : index
    %c0_14 = arith.constant 0 : index
    %13 = vector.load %arg3[%c1_12, %c0_13, %c0_14] : memref<3x192x256xbf16, #tpu.memory_space<vmem>>, vector<1x192x256xbf16>
    %14 = vector.shape_cast %13 : vector<1x192x256xbf16> to vector<192x256xbf16>
    %cst_15 = arith.constant dense<0.000000e+00> : vector<32x256xf32>
    %15 = tpu.matmul %12, %14, %cst_15 {dimension_numbers = #tpu.dot_dimension_numbers<[1], [0], [0], [1], [0, 0, 1, 1], [], []>} : vector<32x192xbf16>, vector<192x256xbf16>, vector<32x256xf32> -> vector<32x256xf32>
    %16 = arith.addf %8, %15 : vector<32x256xf32>
    %c2 = arith.constant 2 : index
    %c0_16 = arith.constant 0 : index
    %c0_17 = arith.constant 0 : index
    %17 = vector.load %arg2[%c2, %c0_16, %c0_17] : memref<3x32x64xbf16, #tpu.memory_space<vmem>>, vector<1x32x64xbf16>
    %18 = vector.shape_cast %17 : vector<1x32x64xbf16> to vector<32x64xbf16>
    %cst_18 = arith.constant dense<0.000000e+00> : vector<32x192xf32>
    %19 = tpu.matmul %18, %1, %cst_18 {dimension_numbers = #tpu.dot_dimension_numbers<[1], [0], [0], [1], [0, 0, 1, 1], [], []>} : vector<32x64xbf16>, vector<64x192xbf16>, vector<32x192xf32> -> vector<32x192xf32>
    %20 = arith.truncf %19 : vector<32x192xf32> to vector<32x192xbf16>
    %c2_19 = arith.constant 2 : index
    %c0_20 = arith.constant 0 : index
    %c0_21 = arith.constant 0 : index
    %21 = vector.load %arg3[%c2_19, %c0_20, %c0_21] : memref<3x192x256xbf16, #tpu.memory_space<vmem>>, vector<1x192x256xbf16>
    %22 = vector.shape_cast %21 : vector<1x192x256xbf16> to vector<192x256xbf16>
    %cst_22 = arith.constant dense<0.000000e+00> : vector<32x256xf32>
    %23 = tpu.matmul %20, %22, %cst_22 {dimension_numbers = #tpu.dot_dimension_numbers<[1], [0], [0], [1], [0, 0, 1, 1], [], []>} : vector<32x192xbf16>, vector<192x256xbf16>, vector<32x256xf32> -> vector<32x256xf32>
    %24 = arith.addf %16, %23 : vector<32x256xf32>
    %c0_23 = arith.constant 0 : index
    %c0_24 = arith.constant 0 : index
    %25 = vector.load %arg4[%c0_23, %c0_24] : memref<1x256xf32, #tpu.memory_space<vmem>>, vector<1x256xf32>
    %26 = vector.broadcast %25 : vector<1x256xf32> to vector<32x256xf32>
    %27 = arith.addf %24, %26 : vector<32x256xf32>
    %cst_25 = arith.constant 5.000000e-01 : f32
    %28 = vector.broadcast %cst_25 : f32 to vector<32x256xf32>
    %29 = arith.mulf %28, %27 : vector<32x256xf32>
    %cst_26 = arith.constant 0.707106769 : f32
    %30 = vector.broadcast %cst_26 : f32 to vector<32x256xf32>
    %31 = arith.mulf %27, %30 : vector<32x256xf32>
    %32 = math.absf %31 : vector<32x256xf32>
    %cst_27 = arith.constant 0.327591091 : f32
    %33 = vector.broadcast %cst_27 : f32 to vector<32x256xf32>
    %34 = arith.mulf %33, %32 : vector<32x256xf32>
    %cst_28 = arith.constant 1.000000e+00 : f32
    %35 = vector.broadcast %cst_28 : f32 to vector<32x256xf32>
    %36 = arith.addf %35, %34 : vector<32x256xf32>
    %37 = tpu.reciprocal %36 {approx = true} : vector<32x256xf32> -> vector<32x256xf32>
    %cst_29 = arith.constant 1.06140542 : f32
    %38 = vector.broadcast %cst_29 : f32 to vector<32x256xf32>
    %39 = arith.mulf %38, %37 : vector<32x256xf32>
    %cst_30 = arith.constant -1.45315206 : f32
    %40 = vector.broadcast %cst_30 : f32 to vector<32x256xf32>
    %41 = arith.addf %39, %40 : vector<32x256xf32>
    %42 = arith.mulf %41, %37 : vector<32x256xf32>
    %cst_31 = arith.constant 1.42141378 : f32
    %43 = vector.broadcast %cst_31 : f32 to vector<32x256xf32>
    %44 = arith.addf %42, %43 : vector<32x256xf32>
    %45 = arith.mulf %44, %37 : vector<32x256xf32>
    %cst_32 = arith.constant -0.284496725 : f32
    %46 = vector.broadcast %cst_32 : f32 to vector<32x256xf32>
    %47 = arith.addf %45, %46 : vector<32x256xf32>
    %48 = arith.mulf %47, %37 : vector<32x256xf32>
    %cst_33 = arith.constant 0.254829586 : f32
    %49 = vector.broadcast %cst_33 : f32 to vector<32x256xf32>
    %50 = arith.addf %48, %49 : vector<32x256xf32>
    %51 = arith.mulf %50, %37 : vector<32x256xf32>
    %cst_34 = arith.constant 0.000000e+00 : f32
    %52 = vector.broadcast %cst_34 : f32 to vector<32x256xf32>
    %53 = arith.subf %52, %32 : vector<32x256xf32>
    %54 = arith.mulf %53, %32 : vector<32x256xf32>
    %55 = math.exp %54 : vector<32x256xf32>
    %56 = arith.mulf %51, %55 : vector<32x256xf32>
    %cst_35 = arith.constant 1.000000e+00 : f32
    %57 = vector.broadcast %cst_35 : f32 to vector<32x256xf32>
    %58 = arith.subf %57, %56 : vector<32x256xf32>
    %cst_36 = arith.constant 0.000000e+00 : f32
    %59 = vector.broadcast %cst_36 : f32 to vector<32x256xf32>
    %60 = arith.cmpf oge, %31, %59 : vector<32x256xf32>
    %cst_37 = arith.constant 0.000000e+00 : f32
    %61 = vector.broadcast %cst_37 : f32 to vector<32x256xf32>
    %62 = arith.subf %61, %58 : vector<32x256xf32>
    %63 = arith.select %60, %58, %62 : vector<32x256xi1>, vector<32x256xf32>
    %cst_38 = arith.constant 1.000000e+00 : f32
    %64 = vector.broadcast %cst_38 : f32 to vector<32x256xf32>
    %65 = arith.addf %64, %63 : vector<32x256xf32>
    %66 = arith.mulf %29, %65 : vector<32x256xf32>
    %67 = arith.truncf %66 : vector<32x256xf32> to vector<32x256xbf16>
    %cst_39 = arith.constant 0.000000e+00 : bf16
    %68 = vector.broadcast %cst_39 : bf16 to vector<1x256xbf16>
    %69 = tpu.concatenate %68, %67, %68 in 0 : vector<1x256xbf16>, vector<32x256xbf16>, vector<1x256xbf16> -> vector<34x256xbf16>
    %70 = vector.extract_strided_slice %69 {offsets = [0, 0], sizes = [32, 256], strides = [1, 1]} : vector<34x256xbf16> to vector<32x256xbf16>
    %c0_40 = arith.constant 0 : index
    %c0_41 = arith.constant 0 : index
    %c0_42 = arith.constant 0 : index
    %71 = vector.load %arg5[%c0_40, %c0_41, %c0_42] : memref<3x256x256xbf16, #tpu.memory_space<vmem>>, vector<1x256x256xbf16>
    %72 = vector.shape_cast %71 : vector<1x256x256xbf16> to vector<256x256xbf16>
    %cst_43 = arith.constant dense<0.000000e+00> : vector<32x256xf32>
    %73 = tpu.matmul %70, %72, %cst_43 {dimension_numbers = #tpu.dot_dimension_numbers<[1], [0], [0], [1], [0, 0, 1, 1], [], []>} : vector<32x256xbf16>, vector<256x256xbf16>, vector<32x256xf32> -> vector<32x256xf32>
    %74 = vector.extract_strided_slice %69 {offsets = [1, 0], sizes = [32, 256], strides = [1, 1]} : vector<34x256xbf16> to vector<32x256xbf16>
    %c1_44 = arith.constant 1 : index
    %c0_45 = arith.constant 0 : index
    %c0_46 = arith.constant 0 : index
    %75 = vector.load %arg5[%c1_44, %c0_45, %c0_46] : memref<3x256x256xbf16, #tpu.memory_space<vmem>>, vector<1x256x256xbf16>
    %76 = vector.shape_cast %75 : vector<1x256x256xbf16> to vector<256x256xbf16>
    %cst_47 = arith.constant dense<0.000000e+00> : vector<32x256xf32>
    %77 = tpu.matmul %74, %76, %cst_47 {dimension_numbers = #tpu.dot_dimension_numbers<[1], [0], [0], [1], [0, 0, 1, 1], [], []>} : vector<32x256xbf16>, vector<256x256xbf16>, vector<32x256xf32> -> vector<32x256xf32>
    %78 = arith.addf %73, %77 : vector<32x256xf32>
    %79 = vector.extract_strided_slice %69 {offsets = [2, 0], sizes = [32, 256], strides = [1, 1]} : vector<34x256xbf16> to vector<32x256xbf16>
    %c2_48 = arith.constant 2 : index
    %c0_49 = arith.constant 0 : index
    %c0_50 = arith.constant 0 : index
    %80 = vector.load %arg5[%c2_48, %c0_49, %c0_50] : memref<3x256x256xbf16, #tpu.memory_space<vmem>>, vector<1x256x256xbf16>
    %81 = vector.shape_cast %80 : vector<1x256x256xbf16> to vector<256x256xbf16>
    %cst_51 = arith.constant dense<0.000000e+00> : vector<32x256xf32>
    %82 = tpu.matmul %79, %81, %cst_51 {dimension_numbers = #tpu.dot_dimension_numbers<[1], [0], [0], [1], [0, 0, 1, 1], [], []>} : vector<32x256xbf16>, vector<256x256xbf16>, vector<32x256xf32> -> vector<32x256xf32>
    %83 = arith.addf %78, %82 : vector<32x256xf32>
    %c0_52 = arith.constant 0 : index
    %c0_53 = arith.constant 0 : index
    %84 = vector.load %arg6[%c0_52, %c0_53] : memref<1x256xf32, #tpu.memory_space<vmem>>, vector<1x256xf32>
    %85 = vector.broadcast %84 : vector<1x256xf32> to vector<32x256xf32>
    %86 = arith.addf %83, %85 : vector<32x256xf32>
    %cst_54 = arith.constant 5.000000e-01 : f32
    %87 = vector.broadcast %cst_54 : f32 to vector<32x256xf32>
    %88 = arith.mulf %87, %86 : vector<32x256xf32>
    %cst_55 = arith.constant 0.707106769 : f32
    %89 = vector.broadcast %cst_55 : f32 to vector<32x256xf32>
    %90 = arith.mulf %86, %89 : vector<32x256xf32>
    %91 = math.absf %90 : vector<32x256xf32>
    %cst_56 = arith.constant 0.327591091 : f32
    %92 = vector.broadcast %cst_56 : f32 to vector<32x256xf32>
    %93 = arith.mulf %92, %91 : vector<32x256xf32>
    %cst_57 = arith.constant 1.000000e+00 : f32
    %94 = vector.broadcast %cst_57 : f32 to vector<32x256xf32>
    %95 = arith.addf %94, %93 : vector<32x256xf32>
    %96 = tpu.reciprocal %95 {approx = true} : vector<32x256xf32> -> vector<32x256xf32>
    %cst_58 = arith.constant 1.06140542 : f32
    %97 = vector.broadcast %cst_58 : f32 to vector<32x256xf32>
    %98 = arith.mulf %97, %96 : vector<32x256xf32>
    %cst_59 = arith.constant -1.45315206 : f32
    %99 = vector.broadcast %cst_59 : f32 to vector<32x256xf32>
    %100 = arith.addf %98, %99 : vector<32x256xf32>
    %101 = arith.mulf %100, %96 : vector<32x256xf32>
    %cst_60 = arith.constant 1.42141378 : f32
    %102 = vector.broadcast %cst_60 : f32 to vector<32x256xf32>
    %103 = arith.addf %101, %102 : vector<32x256xf32>
    %104 = arith.mulf %103, %96 : vector<32x256xf32>
    %cst_61 = arith.constant -0.284496725 : f32
    %105 = vector.broadcast %cst_61 : f32 to vector<32x256xf32>
    %106 = arith.addf %104, %105 : vector<32x256xf32>
    %107 = arith.mulf %106, %96 : vector<32x256xf32>
    %cst_62 = arith.constant 0.254829586 : f32
    %108 = vector.broadcast %cst_62 : f32 to vector<32x256xf32>
    %109 = arith.addf %107, %108 : vector<32x256xf32>
    %110 = arith.mulf %109, %96 : vector<32x256xf32>
    %cst_63 = arith.constant 0.000000e+00 : f32
    %111 = vector.broadcast %cst_63 : f32 to vector<32x256xf32>
    %112 = arith.subf %111, %91 : vector<32x256xf32>
    %113 = arith.mulf %112, %91 : vector<32x256xf32>
    %114 = math.exp %113 : vector<32x256xf32>
    %115 = arith.mulf %110, %114 : vector<32x256xf32>
    %cst_64 = arith.constant 1.000000e+00 : f32
    %116 = vector.broadcast %cst_64 : f32 to vector<32x256xf32>
    %117 = arith.subf %116, %115 : vector<32x256xf32>
    %cst_65 = arith.constant 0.000000e+00 : f32
    %118 = vector.broadcast %cst_65 : f32 to vector<32x256xf32>
    %119 = arith.cmpf oge, %90, %118 : vector<32x256xf32>
    %cst_66 = arith.constant 0.000000e+00 : f32
    %120 = vector.broadcast %cst_66 : f32 to vector<32x256xf32>
    %121 = arith.subf %120, %117 : vector<32x256xf32>
    %122 = arith.select %119, %117, %121 : vector<32x256xi1>, vector<32x256xf32>
    %cst_67 = arith.constant 1.000000e+00 : f32
    %123 = vector.broadcast %cst_67 : f32 to vector<32x256xf32>
    %124 = arith.addf %123, %122 : vector<32x256xf32>
    %125 = arith.mulf %88, %124 : vector<32x256xf32>
    %126 = arith.truncf %125 : vector<32x256xf32> to vector<32x256xbf16>
    %c0_68 = arith.constant 0 : index
    %c0_69 = arith.constant 0 : index
    %c0_70 = arith.constant 0 : index
    %127 = vector.load %arg7[%c0_68, %c0_69, %c0_70] : memref<3x16x32xbf16, #tpu.memory_space<vmem>>, vector<1x16x32xbf16>
    %128 = vector.shape_cast %127 : vector<1x16x32xbf16> to vector<16x32xbf16>
    %cst_71 = arith.constant dense<0.000000e+00> : vector<16x256xf32>
    %129 = tpu.matmul %128, %126, %cst_71 {dimension_numbers = #tpu.dot_dimension_numbers<[1], [0], [0], [1], [0, 0, 1, 1], [], []>} : vector<16x32xbf16>, vector<32x256xbf16>, vector<16x256xf32> -> vector<16x256xf32>
    %130 = arith.truncf %129 : vector<16x256xf32> to vector<16x256xbf16>
    %c0_72 = arith.constant 0 : index
    %c0_73 = arith.constant 0 : index
    %c0_74 = arith.constant 0 : index
    %131 = vector.load %arg8[%c0_72, %c0_73, %c0_74] : memref<3x256x256xbf16, #tpu.memory_space<vmem>>, vector<1x256x256xbf16>
    %132 = vector.shape_cast %131 : vector<1x256x256xbf16> to vector<256x256xbf16>
    %cst_75 = arith.constant dense<0.000000e+00> : vector<16x256xf32>
    %133 = tpu.matmul %130, %132, %cst_75 {dimension_numbers = #tpu.dot_dimension_numbers<[1], [0], [0], [1], [0, 0, 1, 1], [], []>} : vector<16x256xbf16>, vector<256x256xbf16>, vector<16x256xf32> -> vector<16x256xf32>
    %c1_76 = arith.constant 1 : index
    %c0_77 = arith.constant 0 : index
    %c0_78 = arith.constant 0 : index
    %134 = vector.load %arg7[%c1_76, %c0_77, %c0_78] : memref<3x16x32xbf16, #tpu.memory_space<vmem>>, vector<1x16x32xbf16>
    %135 = vector.shape_cast %134 : vector<1x16x32xbf16> to vector<16x32xbf16>
    %cst_79 = arith.constant dense<0.000000e+00> : vector<16x256xf32>
    %136 = tpu.matmul %135, %126, %cst_79 {dimension_numbers = #tpu.dot_dimension_numbers<[1], [0], [0], [1], [0, 0, 1, 1], [], []>} : vector<16x32xbf16>, vector<32x256xbf16>, vector<16x256xf32> -> vector<16x256xf32>
    %137 = arith.truncf %136 : vector<16x256xf32> to vector<16x256xbf16>
    %c1_80 = arith.constant 1 : index
    %c0_81 = arith.constant 0 : index
    %c0_82 = arith.constant 0 : index
    %138 = vector.load %arg8[%c1_80, %c0_81, %c0_82] : memref<3x256x256xbf16, #tpu.memory_space<vmem>>, vector<1x256x256xbf16>
    %139 = vector.shape_cast %138 : vector<1x256x256xbf16> to vector<256x256xbf16>
    %cst_83 = arith.constant dense<0.000000e+00> : vector<16x256xf32>
    %140 = tpu.matmul %137, %139, %cst_83 {dimension_numbers = #tpu.dot_dimension_numbers<[1], [0], [0], [1], [0, 0, 1, 1], [], []>} : vector<16x256xbf16>, vector<256x256xbf16>, vector<16x256xf32> -> vector<16x256xf32>
    %141 = arith.addf %133, %140 : vector<16x256xf32>
    %c2_84 = arith.constant 2 : index
    %c0_85 = arith.constant 0 : index
    %c0_86 = arith.constant 0 : index
    %142 = vector.load %arg7[%c2_84, %c0_85, %c0_86] : memref<3x16x32xbf16, #tpu.memory_space<vmem>>, vector<1x16x32xbf16>
    %143 = vector.shape_cast %142 : vector<1x16x32xbf16> to vector<16x32xbf16>
    %cst_87 = arith.constant dense<0.000000e+00> : vector<16x256xf32>
    %144 = tpu.matmul %143, %126, %cst_87 {dimension_numbers = #tpu.dot_dimension_numbers<[1], [0], [0], [1], [0, 0, 1, 1], [], []>} : vector<16x32xbf16>, vector<32x256xbf16>, vector<16x256xf32> -> vector<16x256xf32>
    %145 = arith.truncf %144 : vector<16x256xf32> to vector<16x256xbf16>
    %c2_88 = arith.constant 2 : index
    %c0_89 = arith.constant 0 : index
    %c0_90 = arith.constant 0 : index
    %146 = vector.load %arg8[%c2_88, %c0_89, %c0_90] : memref<3x256x256xbf16, #tpu.memory_space<vmem>>, vector<1x256x256xbf16>
    %147 = vector.shape_cast %146 : vector<1x256x256xbf16> to vector<256x256xbf16>
    %cst_91 = arith.constant dense<0.000000e+00> : vector<16x256xf32>
    %148 = tpu.matmul %145, %147, %cst_91 {dimension_numbers = #tpu.dot_dimension_numbers<[1], [0], [0], [1], [0, 0, 1, 1], [], []>} : vector<16x256xbf16>, vector<256x256xbf16>, vector<16x256xf32> -> vector<16x256xf32>
    %149 = arith.addf %141, %148 : vector<16x256xf32>
    %c0_92 = arith.constant 0 : index
    %c0_93 = arith.constant 0 : index
    %150 = vector.load %arg9[%c0_92, %c0_93] : memref<1x256xf32, #tpu.memory_space<vmem>>, vector<1x256xf32>
    %151 = vector.broadcast %150 : vector<1x256xf32> to vector<16x256xf32>
    %152 = arith.addf %149, %151 : vector<16x256xf32>
    %cst_94 = arith.constant 5.000000e-01 : f32
    %153 = vector.broadcast %cst_94 : f32 to vector<16x256xf32>
    %154 = arith.mulf %153, %152 : vector<16x256xf32>
    %cst_95 = arith.constant 0.707106769 : f32
    %155 = vector.broadcast %cst_95 : f32 to vector<16x256xf32>
    %156 = arith.mulf %152, %155 : vector<16x256xf32>
    %157 = math.absf %156 : vector<16x256xf32>
    %cst_96 = arith.constant 0.327591091 : f32
    %158 = vector.broadcast %cst_96 : f32 to vector<16x256xf32>
    %159 = arith.mulf %158, %157 : vector<16x256xf32>
    %cst_97 = arith.constant 1.000000e+00 : f32
    %160 = vector.broadcast %cst_97 : f32 to vector<16x256xf32>
    %161 = arith.addf %160, %159 : vector<16x256xf32>
    %162 = tpu.reciprocal %161 {approx = true} : vector<16x256xf32> -> vector<16x256xf32>
    %cst_98 = arith.constant 1.06140542 : f32
    %163 = vector.broadcast %cst_98 : f32 to vector<16x256xf32>
    %164 = arith.mulf %163, %162 : vector<16x256xf32>
    %cst_99 = arith.constant -1.45315206 : f32
    %165 = vector.broadcast %cst_99 : f32 to vector<16x256xf32>
    %166 = arith.addf %164, %165 : vector<16x256xf32>
    %167 = arith.mulf %166, %162 : vector<16x256xf32>
    %cst_100 = arith.constant 1.42141378 : f32
    %168 = vector.broadcast %cst_100 : f32 to vector<16x256xf32>
    %169 = arith.addf %167, %168 : vector<16x256xf32>
    %170 = arith.mulf %169, %162 : vector<16x256xf32>
    %cst_101 = arith.constant -0.284496725 : f32
    %171 = vector.broadcast %cst_101 : f32 to vector<16x256xf32>
    %172 = arith.addf %170, %171 : vector<16x256xf32>
    %173 = arith.mulf %172, %162 : vector<16x256xf32>
    %cst_102 = arith.constant 0.254829586 : f32
    %174 = vector.broadcast %cst_102 : f32 to vector<16x256xf32>
    %175 = arith.addf %173, %174 : vector<16x256xf32>
    %176 = arith.mulf %175, %162 : vector<16x256xf32>
    %cst_103 = arith.constant 0.000000e+00 : f32
    %177 = vector.broadcast %cst_103 : f32 to vector<16x256xf32>
    %178 = arith.subf %177, %157 : vector<16x256xf32>
    %179 = arith.mulf %178, %157 : vector<16x256xf32>
    %180 = math.exp %179 : vector<16x256xf32>
    %181 = arith.mulf %176, %180 : vector<16x256xf32>
    %cst_104 = arith.constant 1.000000e+00 : f32
    %182 = vector.broadcast %cst_104 : f32 to vector<16x256xf32>
    %183 = arith.subf %182, %181 : vector<16x256xf32>
    %cst_105 = arith.constant 0.000000e+00 : f32
    %184 = vector.broadcast %cst_105 : f32 to vector<16x256xf32>
    %185 = arith.cmpf oge, %156, %184 : vector<16x256xf32>
    %cst_106 = arith.constant 0.000000e+00 : f32
    %186 = vector.broadcast %cst_106 : f32 to vector<16x256xf32>
    %187 = arith.subf %186, %183 : vector<16x256xf32>
    %188 = arith.select %185, %183, %187 : vector<16x256xi1>, vector<16x256xf32>
    %cst_107 = arith.constant 1.000000e+00 : f32
    %189 = vector.broadcast %cst_107 : f32 to vector<16x256xf32>
    %190 = arith.addf %189, %188 : vector<16x256xf32>
    %191 = arith.mulf %154, %190 : vector<16x256xf32>
    %192 = arith.truncf %191 : vector<16x256xf32> to vector<16x256xbf16>
    %cst_108 = arith.constant 0.000000e+00 : bf16
    %193 = vector.broadcast %cst_108 : bf16 to vector<1x256xbf16>
    %194 = tpu.concatenate %193, %192, %193 in 0 : vector<1x256xbf16>, vector<16x256xbf16>, vector<1x256xbf16> -> vector<18x256xbf16>
    %195 = vector.extract_strided_slice %194 {offsets = [0, 0], sizes = [16, 256], strides = [1, 1]} : vector<18x256xbf16> to vector<16x256xbf16>
    %c0_109 = arith.constant 0 : index
    %c0_110 = arith.constant 0 : index
    %c0_111 = arith.constant 0 : index
    %196 = vector.load %arg10[%c0_109, %c0_110, %c0_111] : memref<3x256x256xbf16, #tpu.memory_space<vmem>>, vector<1x256x256xbf16>
    %197 = vector.shape_cast %196 : vector<1x256x256xbf16> to vector<256x256xbf16>
    %cst_112 = arith.constant dense<0.000000e+00> : vector<16x256xf32>
    %198 = tpu.matmul %195, %197, %cst_112 {dimension_numbers = #tpu.dot_dimension_numbers<[1], [0], [0], [1], [0, 0, 1, 1], [], []>} : vector<16x256xbf16>, vector<256x256xbf16>, vector<16x256xf32> -> vector<16x256xf32>
    %199 = vector.extract_strided_slice %194 {offsets = [1, 0], sizes = [16, 256], strides = [1, 1]} : vector<18x256xbf16> to vector<16x256xbf16>
    %c1_113 = arith.constant 1 : index
    %c0_114 = arith.constant 0 : index
    %c0_115 = arith.constant 0 : index
    %200 = vector.load %arg10[%c1_113, %c0_114, %c0_115] : memref<3x256x256xbf16, #tpu.memory_space<vmem>>, vector<1x256x256xbf16>
    %201 = vector.shape_cast %200 : vector<1x256x256xbf16> to vector<256x256xbf16>
    %cst_116 = arith.constant dense<0.000000e+00> : vector<16x256xf32>
    %202 = tpu.matmul %199, %201, %cst_116 {dimension_numbers = #tpu.dot_dimension_numbers<[1], [0], [0], [1], [0, 0, 1, 1], [], []>} : vector<16x256xbf16>, vector<256x256xbf16>, vector<16x256xf32> -> vector<16x256xf32>
    %203 = arith.addf %198, %202 : vector<16x256xf32>
    %204 = vector.extract_strided_slice %194 {offsets = [2, 0], sizes = [16, 256], strides = [1, 1]} : vector<18x256xbf16> to vector<16x256xbf16>
    %c2_117 = arith.constant 2 : index
    %c0_118 = arith.constant 0 : index
    %c0_119 = arith.constant 0 : index
    %205 = vector.load %arg10[%c2_117, %c0_118, %c0_119] : memref<3x256x256xbf16, #tpu.memory_space<vmem>>, vector<1x256x256xbf16>
    %206 = vector.shape_cast %205 : vector<1x256x256xbf16> to vector<256x256xbf16>
    %cst_120 = arith.constant dense<0.000000e+00> : vector<16x256xf32>
    %207 = tpu.matmul %204, %206, %cst_120 {dimension_numbers = #tpu.dot_dimension_numbers<[1], [0], [0], [1], [0, 0, 1, 1], [], []>} : vector<16x256xbf16>, vector<256x256xbf16>, vector<16x256xf32> -> vector<16x256xf32>
    %208 = arith.addf %203, %207 : vector<16x256xf32>
    %c0_121 = arith.constant 0 : index
    %c0_122 = arith.constant 0 : index
    %209 = vector.load %arg11[%c0_121, %c0_122] : memref<1x256xf32, #tpu.memory_space<vmem>>, vector<1x256xf32>
    %210 = vector.broadcast %209 : vector<1x256xf32> to vector<16x256xf32>
    %211 = arith.addf %208, %210 : vector<16x256xf32>
    %cst_123 = arith.constant 5.000000e-01 : f32
    %212 = vector.broadcast %cst_123 : f32 to vector<16x256xf32>
    %213 = arith.mulf %212, %211 : vector<16x256xf32>
    %cst_124 = arith.constant 0.707106769 : f32
    %214 = vector.broadcast %cst_124 : f32 to vector<16x256xf32>
    %215 = arith.mulf %211, %214 : vector<16x256xf32>
    %216 = math.absf %215 : vector<16x256xf32>
    %cst_125 = arith.constant 0.327591091 : f32
    %217 = vector.broadcast %cst_125 : f32 to vector<16x256xf32>
    %218 = arith.mulf %217, %216 : vector<16x256xf32>
    %cst_126 = arith.constant 1.000000e+00 : f32
    %219 = vector.broadcast %cst_126 : f32 to vector<16x256xf32>
    %220 = arith.addf %219, %218 : vector<16x256xf32>
    %221 = tpu.reciprocal %220 {approx = true} : vector<16x256xf32> -> vector<16x256xf32>
    %cst_127 = arith.constant 1.06140542 : f32
    %222 = vector.broadcast %cst_127 : f32 to vector<16x256xf32>
    %223 = arith.mulf %222, %221 : vector<16x256xf32>
    %cst_128 = arith.constant -1.45315206 : f32
    %224 = vector.broadcast %cst_128 : f32 to vector<16x256xf32>
    %225 = arith.addf %223, %224 : vector<16x256xf32>
    %226 = arith.mulf %225, %221 : vector<16x256xf32>
    %cst_129 = arith.constant 1.42141378 : f32
    %227 = vector.broadcast %cst_129 : f32 to vector<16x256xf32>
    %228 = arith.addf %226, %227 : vector<16x256xf32>
    %229 = arith.mulf %228, %221 : vector<16x256xf32>
    %cst_130 = arith.constant -0.284496725 : f32
    %230 = vector.broadcast %cst_130 : f32 to vector<16x256xf32>
    %231 = arith.addf %229, %230 : vector<16x256xf32>
    %232 = arith.mulf %231, %221 : vector<16x256xf32>
    %cst_131 = arith.constant 0.254829586 : f32
    %233 = vector.broadcast %cst_131 : f32 to vector<16x256xf32>
    %234 = arith.addf %232, %233 : vector<16x256xf32>
    %235 = arith.mulf %234, %221 : vector<16x256xf32>
    %cst_132 = arith.constant 0.000000e+00 : f32
    %236 = vector.broadcast %cst_132 : f32 to vector<16x256xf32>
    %237 = arith.subf %236, %216 : vector<16x256xf32>
    %238 = arith.mulf %237, %216 : vector<16x256xf32>
    %239 = math.exp %238 : vector<16x256xf32>
    %240 = arith.mulf %235, %239 : vector<16x256xf32>
    %cst_133 = arith.constant 1.000000e+00 : f32
    %241 = vector.broadcast %cst_133 : f32 to vector<16x256xf32>
    %242 = arith.subf %241, %240 : vector<16x256xf32>
    %cst_134 = arith.constant 0.000000e+00 : f32
    %243 = vector.broadcast %cst_134 : f32 to vector<16x256xf32>
    %244 = arith.cmpf oge, %215, %243 : vector<16x256xf32>
    %cst_135 = arith.constant 0.000000e+00 : f32
    %245 = vector.broadcast %cst_135 : f32 to vector<16x256xf32>
    %246 = arith.subf %245, %242 : vector<16x256xf32>
    %247 = arith.select %244, %242, %246 : vector<16x256xi1>, vector<16x256xf32>
    %cst_136 = arith.constant 1.000000e+00 : f32
    %248 = vector.broadcast %cst_136 : f32 to vector<16x256xf32>
    %249 = arith.addf %248, %247 : vector<16x256xf32>
    %250 = arith.mulf %213, %249 : vector<16x256xf32>
    %251 = arith.truncf %250 : vector<16x256xf32> to vector<16x256xbf16>
    %c0_137 = arith.constant 0 : index
    %c0_138 = arith.constant 0 : index
    %c0_139 = arith.constant 0 : index
    %252 = vector.load %arg12[%c0_137, %c0_138, %c0_139] : memref<3x8x16xbf16, #tpu.memory_space<vmem>>, vector<1x8x16xbf16>
    %253 = vector.shape_cast %252 : vector<1x8x16xbf16> to vector<8x16xbf16>
    %cst_140 = arith.constant dense<0.000000e+00> : vector<8x256xf32>
    %254 = tpu.matmul %253, %251, %cst_140 {dimension_numbers = #tpu.dot_dimension_numbers<[1], [0], [0], [1], [0, 0, 1, 1], [], []>} : vector<8x16xbf16>, vector<16x256xbf16>, vector<8x256xf32> -> vector<8x256xf32>
    %255 = arith.truncf %254 : vector<8x256xf32> to vector<8x256xbf16>
    %c0_141 = arith.constant 0 : index
    %c0_142 = arith.constant 0 : index
    %c0_143 = arith.constant 0 : index
    %256 = vector.load %arg13[%c0_141, %c0_142, %c0_143] : memref<3x256x128xbf16, #tpu.memory_space<vmem>>, vector<1x256x128xbf16>
    %257 = vector.shape_cast %256 : vector<1x256x128xbf16> to vector<256x128xbf16>
    %cst_144 = arith.constant dense<0.000000e+00> : vector<8x128xf32>
    %258 = tpu.matmul %255, %257, %cst_144 {dimension_numbers = #tpu.dot_dimension_numbers<[1], [0], [0], [1], [0, 0, 1, 1], [], []>} : vector<8x256xbf16>, vector<256x128xbf16>, vector<8x128xf32> -> vector<8x128xf32>
    %c1_145 = arith.constant 1 : index
    %c0_146 = arith.constant 0 : index
    %c0_147 = arith.constant 0 : index
    %259 = vector.load %arg12[%c1_145, %c0_146, %c0_147] : memref<3x8x16xbf16, #tpu.memory_space<vmem>>, vector<1x8x16xbf16>
    %260 = vector.shape_cast %259 : vector<1x8x16xbf16> to vector<8x16xbf16>
    %cst_148 = arith.constant dense<0.000000e+00> : vector<8x256xf32>
    %261 = tpu.matmul %260, %251, %cst_148 {dimension_numbers = #tpu.dot_dimension_numbers<[1], [0], [0], [1], [0, 0, 1, 1], [], []>} : vector<8x16xbf16>, vector<16x256xbf16>, vector<8x256xf32> -> vector<8x256xf32>
    %262 = arith.truncf %261 : vector<8x256xf32> to vector<8x256xbf16>
    %c1_149 = arith.constant 1 : index
    %c0_150 = arith.constant 0 : index
    %c0_151 = arith.constant 0 : index
    %263 = vector.load %arg13[%c1_149, %c0_150, %c0_151] : memref<3x256x128xbf16, #tpu.memory_space<vmem>>, vector<1x256x128xbf16>
    %264 = vector.shape_cast %263 : vector<1x256x128xbf16> to vector<256x128xbf16>
    %cst_152 = arith.constant dense<0.000000e+00> : vector<8x128xf32>
    %265 = tpu.matmul %262, %264, %cst_152 {dimension_numbers = #tpu.dot_dimension_numbers<[1], [0], [0], [1], [0, 0, 1, 1], [], []>} : vector<8x256xbf16>, vector<256x128xbf16>, vector<8x128xf32> -> vector<8x128xf32>
    %266 = arith.addf %258, %265 : vector<8x128xf32>
    %c2_153 = arith.constant 2 : index
    %c0_154 = arith.constant 0 : index
    %c0_155 = arith.constant 0 : index
    %267 = vector.load %arg12[%c2_153, %c0_154, %c0_155] : memref<3x8x16xbf16, #tpu.memory_space<vmem>>, vector<1x8x16xbf16>
    %268 = vector.shape_cast %267 : vector<1x8x16xbf16> to vector<8x16xbf16>
    %cst_156 = arith.constant dense<0.000000e+00> : vector<8x256xf32>
    %269 = tpu.matmul %268, %251, %cst_156 {dimension_numbers = #tpu.dot_dimension_numbers<[1], [0], [0], [1], [0, 0, 1, 1], [], []>} : vector<8x16xbf16>, vector<16x256xbf16>, vector<8x256xf32> -> vector<8x256xf32>
    %270 = arith.truncf %269 : vector<8x256xf32> to vector<8x256xbf16>
    %c2_157 = arith.constant 2 : index
    %c0_158 = arith.constant 0 : index
    %c0_159 = arith.constant 0 : index
    %271 = vector.load %arg13[%c2_157, %c0_158, %c0_159] : memref<3x256x128xbf16, #tpu.memory_space<vmem>>, vector<1x256x128xbf16>
    %272 = vector.shape_cast %271 : vector<1x256x128xbf16> to vector<256x128xbf16>
    %cst_160 = arith.constant dense<0.000000e+00> : vector<8x128xf32>
    %273 = tpu.matmul %270, %272, %cst_160 {dimension_numbers = #tpu.dot_dimension_numbers<[1], [0], [0], [1], [0, 0, 1, 1], [], []>} : vector<8x256xbf16>, vector<256x128xbf16>, vector<8x128xf32> -> vector<8x128xf32>
    %274 = arith.addf %266, %273 : vector<8x128xf32>
    %c0_161 = arith.constant 0 : index
    %c0_162 = arith.constant 0 : index
    %275 = vector.load %arg14[%c0_161, %c0_162] : memref<1x128xf32, #tpu.memory_space<vmem>>, vector<1x128xf32>
    %276 = vector.broadcast %275 : vector<1x128xf32> to vector<8x128xf32>
    %277 = arith.addf %274, %276 : vector<8x128xf32>
    %cst_163 = arith.constant 5.000000e-01 : f32
    %278 = vector.broadcast %cst_163 : f32 to vector<8x128xf32>
    %279 = arith.mulf %278, %277 : vector<8x128xf32>
    %cst_164 = arith.constant 0.707106769 : f32
    %280 = vector.broadcast %cst_164 : f32 to vector<8x128xf32>
    %281 = arith.mulf %277, %280 : vector<8x128xf32>
    %282 = math.absf %281 : vector<8x128xf32>
    %cst_165 = arith.constant 0.327591091 : f32
    %283 = vector.broadcast %cst_165 : f32 to vector<8x128xf32>
    %284 = arith.mulf %283, %282 : vector<8x128xf32>
    %cst_166 = arith.constant 1.000000e+00 : f32
    %285 = vector.broadcast %cst_166 : f32 to vector<8x128xf32>
    %286 = arith.addf %285, %284 : vector<8x128xf32>
    %287 = tpu.reciprocal %286 {approx = true} : vector<8x128xf32> -> vector<8x128xf32>
    %cst_167 = arith.constant 1.06140542 : f32
    %288 = vector.broadcast %cst_167 : f32 to vector<8x128xf32>
    %289 = arith.mulf %288, %287 : vector<8x128xf32>
    %cst_168 = arith.constant -1.45315206 : f32
    %290 = vector.broadcast %cst_168 : f32 to vector<8x128xf32>
    %291 = arith.addf %289, %290 : vector<8x128xf32>
    %292 = arith.mulf %291, %287 : vector<8x128xf32>
    %cst_169 = arith.constant 1.42141378 : f32
    %293 = vector.broadcast %cst_169 : f32 to vector<8x128xf32>
    %294 = arith.addf %292, %293 : vector<8x128xf32>
    %295 = arith.mulf %294, %287 : vector<8x128xf32>
    %cst_170 = arith.constant -0.284496725 : f32
    %296 = vector.broadcast %cst_170 : f32 to vector<8x128xf32>
    %297 = arith.addf %295, %296 : vector<8x128xf32>
    %298 = arith.mulf %297, %287 : vector<8x128xf32>
    %cst_171 = arith.constant 0.254829586 : f32
    %299 = vector.broadcast %cst_171 : f32 to vector<8x128xf32>
    %300 = arith.addf %298, %299 : vector<8x128xf32>
    %301 = arith.mulf %300, %287 : vector<8x128xf32>
    %cst_172 = arith.constant 0.000000e+00 : f32
    %302 = vector.broadcast %cst_172 : f32 to vector<8x128xf32>
    %303 = arith.subf %302, %282 : vector<8x128xf32>
    %304 = arith.mulf %303, %282 : vector<8x128xf32>
    %305 = math.exp %304 : vector<8x128xf32>
    %306 = arith.mulf %301, %305 : vector<8x128xf32>
    %cst_173 = arith.constant 1.000000e+00 : f32
    %307 = vector.broadcast %cst_173 : f32 to vector<8x128xf32>
    %308 = arith.subf %307, %306 : vector<8x128xf32>
    %cst_174 = arith.constant 0.000000e+00 : f32
    %309 = vector.broadcast %cst_174 : f32 to vector<8x128xf32>
    %310 = arith.cmpf oge, %281, %309 : vector<8x128xf32>
    %cst_175 = arith.constant 0.000000e+00 : f32
    %311 = vector.broadcast %cst_175 : f32 to vector<8x128xf32>
    %312 = arith.subf %311, %308 : vector<8x128xf32>
    %313 = arith.select %310, %308, %312 : vector<8x128xi1>, vector<8x128xf32>
    %cst_176 = arith.constant 1.000000e+00 : f32
    %314 = vector.broadcast %cst_176 : f32 to vector<8x128xf32>
    %315 = arith.addf %314, %313 : vector<8x128xf32>
    %316 = arith.mulf %279, %315 : vector<8x128xf32>
    %317 = arith.truncf %316 : vector<8x128xf32> to vector<8x128xbf16>
    %c0_177 = arith.constant 0 : index
    %c0_178 = arith.constant 0 : index
    %318 = vector.load %arg16[%c0_177, %c0_178] : memref<1x32xf32, #tpu.memory_space<vmem>>, vector<1x32xf32>
    %319 = vector.extract_strided_slice %317 {offsets = [0, 0], sizes = [1, 128], strides = [1, 1]} : vector<8x128xbf16> to vector<1x128xbf16>
    %c0_179 = arith.constant 0 : index
    %c0_180 = arith.constant 0 : index
    %c0_181 = arith.constant 0 : index
    %320 = vector.load %arg15[%c0_179, %c0_180, %c0_181] : memref<8x128x32xbf16, #tpu.memory_space<vmem>>, vector<1x128x32xbf16>
    %321 = vector.shape_cast %320 : vector<1x128x32xbf16> to vector<128x32xbf16>
    %cst_182 = arith.constant dense<0.000000e+00> : vector<1x32xf32>
    %322 = tpu.matmul %319, %321, %cst_182 {dimension_numbers = #tpu.dot_dimension_numbers<[1], [0], [0], [1], [0, 0, 1, 1], [], []>} : vector<1x128xbf16>, vector<128x32xbf16>, vector<1x32xf32> -> vector<1x32xf32>
    %323 = arith.addf %318, %322 : vector<1x32xf32>
    %324 = vector.extract_strided_slice %317 {offsets = [1, 0], sizes = [1, 128], strides = [1, 1]} : vector<8x128xbf16> to vector<1x128xbf16>
    %c1_183 = arith.constant 1 : index
    %c0_184 = arith.constant 0 : index
    %c0_185 = arith.constant 0 : index
    %325 = vector.load %arg15[%c1_183, %c0_184, %c0_185] : memref<8x128x32xbf16, #tpu.memory_space<vmem>>, vector<1x128x32xbf16>
    %326 = vector.shape_cast %325 : vector<1x128x32xbf16> to vector<128x32xbf16>
    %cst_186 = arith.constant dense<0.000000e+00> : vector<1x32xf32>
    %327 = tpu.matmul %324, %326, %cst_186 {dimension_numbers = #tpu.dot_dimension_numbers<[1], [0], [0], [1], [0, 0, 1, 1], [], []>} : vector<1x128xbf16>, vector<128x32xbf16>, vector<1x32xf32> -> vector<1x32xf32>
    %328 = arith.addf %323, %327 : vector<1x32xf32>
    %329 = vector.extract_strided_slice %317 {offsets = [2, 0], sizes = [1, 128], strides = [1, 1]} : vector<8x128xbf16> to vector<1x128xbf16>
    %c2_187 = arith.constant 2 : index
    %c0_188 = arith.constant 0 : index
    %c0_189 = arith.constant 0 : index
    %330 = vector.load %arg15[%c2_187, %c0_188, %c0_189] : memref<8x128x32xbf16, #tpu.memory_space<vmem>>, vector<1x128x32xbf16>
    %331 = vector.shape_cast %330 : vector<1x128x32xbf16> to vector<128x32xbf16>
    %cst_190 = arith.constant dense<0.000000e+00> : vector<1x32xf32>
    %332 = tpu.matmul %329, %331, %cst_190 {dimension_numbers = #tpu.dot_dimension_numbers<[1], [0], [0], [1], [0, 0, 1, 1], [], []>} : vector<1x128xbf16>, vector<128x32xbf16>, vector<1x32xf32> -> vector<1x32xf32>
    %333 = arith.addf %328, %332 : vector<1x32xf32>
    %334 = vector.extract_strided_slice %317 {offsets = [3, 0], sizes = [1, 128], strides = [1, 1]} : vector<8x128xbf16> to vector<1x128xbf16>
    %c3 = arith.constant 3 : index
    %c0_191 = arith.constant 0 : index
    %c0_192 = arith.constant 0 : index
    %335 = vector.load %arg15[%c3, %c0_191, %c0_192] : memref<8x128x32xbf16, #tpu.memory_space<vmem>>, vector<1x128x32xbf16>
    %336 = vector.shape_cast %335 : vector<1x128x32xbf16> to vector<128x32xbf16>
    %cst_193 = arith.constant dense<0.000000e+00> : vector<1x32xf32>
    %337 = tpu.matmul %334, %336, %cst_193 {dimension_numbers = #tpu.dot_dimension_numbers<[1], [0], [0], [1], [0, 0, 1, 1], [], []>} : vector<1x128xbf16>, vector<128x32xbf16>, vector<1x32xf32> -> vector<1x32xf32>
    %338 = arith.addf %333, %337 : vector<1x32xf32>
    %339 = vector.extract_strided_slice %317 {offsets = [4, 0], sizes = [1, 128], strides = [1, 1]} : vector<8x128xbf16> to vector<1x128xbf16>
    %c4 = arith.constant 4 : index
    %c0_194 = arith.constant 0 : index
    %c0_195 = arith.constant 0 : index
    %340 = vector.load %arg15[%c4, %c0_194, %c0_195] : memref<8x128x32xbf16, #tpu.memory_space<vmem>>, vector<1x128x32xbf16>
    %341 = vector.shape_cast %340 : vector<1x128x32xbf16> to vector<128x32xbf16>
    %cst_196 = arith.constant dense<0.000000e+00> : vector<1x32xf32>
    %342 = tpu.matmul %339, %341, %cst_196 {dimension_numbers = #tpu.dot_dimension_numbers<[1], [0], [0], [1], [0, 0, 1, 1], [], []>} : vector<1x128xbf16>, vector<128x32xbf16>, vector<1x32xf32> -> vector<1x32xf32>
    %343 = arith.addf %338, %342 : vector<1x32xf32>
    %344 = vector.extract_strided_slice %317 {offsets = [5, 0], sizes = [1, 128], strides = [1, 1]} : vector<8x128xbf16> to vector<1x128xbf16>
    %c5 = arith.constant 5 : index
    %c0_197 = arith.constant 0 : index
    %c0_198 = arith.constant 0 : index
    %345 = vector.load %arg15[%c5, %c0_197, %c0_198] : memref<8x128x32xbf16, #tpu.memory_space<vmem>>, vector<1x128x32xbf16>
    %346 = vector.shape_cast %345 : vector<1x128x32xbf16> to vector<128x32xbf16>
    %cst_199 = arith.constant dense<0.000000e+00> : vector<1x32xf32>
    %347 = tpu.matmul %344, %346, %cst_199 {dimension_numbers = #tpu.dot_dimension_numbers<[1], [0], [0], [1], [0, 0, 1, 1], [], []>} : vector<1x128xbf16>, vector<128x32xbf16>, vector<1x32xf32> -> vector<1x32xf32>
    %348 = arith.addf %343, %347 : vector<1x32xf32>
    %349 = vector.extract_strided_slice %317 {offsets = [6, 0], sizes = [1, 128], strides = [1, 1]} : vector<8x128xbf16> to vector<1x128xbf16>
    %c6 = arith.constant 6 : index
    %c0_200 = arith.constant 0 : index
    %c0_201 = arith.constant 0 : index
    %350 = vector.load %arg15[%c6, %c0_200, %c0_201] : memref<8x128x32xbf16, #tpu.memory_space<vmem>>, vector<1x128x32xbf16>
    %351 = vector.shape_cast %350 : vector<1x128x32xbf16> to vector<128x32xbf16>
    %cst_202 = arith.constant dense<0.000000e+00> : vector<1x32xf32>
    %352 = tpu.matmul %349, %351, %cst_202 {dimension_numbers = #tpu.dot_dimension_numbers<[1], [0], [0], [1], [0, 0, 1, 1], [], []>} : vector<1x128xbf16>, vector<128x32xbf16>, vector<1x32xf32> -> vector<1x32xf32>
    %353 = arith.addf %348, %352 : vector<1x32xf32>
    %354 = vector.extract_strided_slice %317 {offsets = [7, 0], sizes = [1, 128], strides = [1, 1]} : vector<8x128xbf16> to vector<1x128xbf16>
    %c7 = arith.constant 7 : index
    %c0_203 = arith.constant 0 : index
    %c0_204 = arith.constant 0 : index
    %355 = vector.load %arg15[%c7, %c0_203, %c0_204] : memref<8x128x32xbf16, #tpu.memory_space<vmem>>, vector<1x128x32xbf16>
    %356 = vector.shape_cast %355 : vector<1x128x32xbf16> to vector<128x32xbf16>
    %cst_205 = arith.constant dense<0.000000e+00> : vector<1x32xf32>
    %357 = tpu.matmul %354, %356, %cst_205 {dimension_numbers = #tpu.dot_dimension_numbers<[1], [0], [0], [1], [0, 0, 1, 1], [], []>} : vector<1x128xbf16>, vector<128x32xbf16>, vector<1x32xf32> -> vector<1x32xf32>
    %358 = arith.addf %353, %357 : vector<1x32xf32>
    %c0_206 = arith.constant 0 : index
    %c0_207 = arith.constant 0 : index
    %c0_208 = arith.constant 0 : index
    %359 = vector.load %arg17[%c0_206, %c0_207, %c0_208] : memref<1x1x32xf32, #tpu.memory_space<vmem>>, vector<1x1x32xf32>
    %360 = vector.shape_cast %359 : vector<1x1x32xf32> to vector<1x32xf32>
    %361 = vector.shape_cast %358 : vector<1x32xf32> to vector<1x1x32xf32>
    tpu.vector_store %arg17[%c0_206, %c0_207, %c0_208], %361 {strides = array<i32>} : memref<1x1x32xf32, #tpu.memory_space<vmem>>, vector<1x1x32xf32>,
    return
  }
  func.func @transform_0(%arg0: i32) -> (i32, i32, i32) {
    %c0_i32 = arith.constant 0 : i32
    %c0_i32_0 = arith.constant 0 : i32
    %c0_i32_1 = arith.constant 0 : i32
    return %arg0, %c0_i32, %c0_i32_0 : i32, i32, i32
  }
  func.func @transform_1(%arg0: i32) -> (i32, i32, i32) {
    %c0_i32 = arith.constant 0 : i32
    %c0_i32_0 = arith.constant 0 : i32
    %c0_i32_1 = arith.constant 0 : i32
    %c0_i32_2 = arith.constant 0 : i32
    return %c0_i32, %c0_i32_0, %c0_i32_1 : i32, i32, i32
  }
  func.func @transform_2(%arg0: i32) -> (i32, i32, i32) {
    %c0_i32 = arith.constant 0 : i32
    %c0_i32_0 = arith.constant 0 : i32
    %c0_i32_1 = arith.constant 0 : i32
    %c0_i32_2 = arith.constant 0 : i32
    return %c0_i32, %c0_i32_0, %c0_i32_1 : i32, i32, i32
  }
  func.func @transform_3(%arg0: i32) -> (i32, i32) {
    %c0_i32 = arith.constant 0 : i32
    %c0_i32_0 = arith.constant 0 : i32
    %c0_i32_1 = arith.constant 0 : i32
    return %c0_i32, %c0_i32_0 : i32, i32
  }
  func.func @transform_4(%arg0: i32) -> (i32, i32, i32) {
    %c0_i32 = arith.constant 0 : i32
    %c0_i32_0 = arith.constant 0 : i32
    %c0_i32_1 = arith.constant 0 : i32
    %c0_i32_2 = arith.constant 0 : i32
    return %c0_i32, %c0_i32_0, %c0_i32_1 : i32, i32, i32
  }
  func.func @transform_5(%arg0: i32) -> (i32, i32) {
    %c0_i32 = arith.constant 0 : i32
    %c0_i32_0 = arith.constant 0 : i32
    %c0_i32_1 = arith.constant 0 : i32
    return %c0_i32, %c0_i32_0 : i32, i32
  }
  func.func @transform_6(%arg0: i32) -> (i32, i32, i32) {
    %c0_i32 = arith.constant 0 : i32
    %c0_i32_0 = arith.constant 0 : i32
    %c0_i32_1 = arith.constant 0 : i32
    %c0_i32_2 = arith.constant 0 : i32
    return %c0_i32, %c0_i32_0, %c0_i32_1 : i32, i32, i32
  }
  func.func @transform_7(%arg0: i32) -> (i32, i32, i32) {
    %c0_i32 = arith.constant 0 : i32
    %c0_i32_0 = arith.constant 0 : i32
    %c0_i32_1 = arith.constant 0 : i32
    %c0_i32_2 = arith.constant 0 : i32
    return %c0_i32, %c0_i32_0, %c0_i32_1 : i32, i32, i32
  }
  func.func @transform_8(%arg0: i32) -> (i32, i32) {
    %c0_i32 = arith.constant 0 : i32
    %c0_i32_0 = arith.constant 0 : i32
    %c0_i32_1 = arith.constant 0 : i32
    return %c0_i32, %c0_i32_0 : i32, i32
  }
  func.func @transform_9(%arg0: i32) -> (i32, i32, i32) {
    %c0_i32 = arith.constant 0 : i32
    %c0_i32_0 = arith.constant 0 : i32
    %c0_i32_1 = arith.constant 0 : i32
    %c0_i32_2 = arith.constant 0 : i32
    return %c0_i32, %c0_i32_0, %c0_i32_1 : i32, i32, i32
  }
  func.func @transform_10(%arg0: i32) -> (i32, i32) {
    %c0_i32 = arith.constant 0 : i32
    %c0_i32_0 = arith.constant 0 : i32
    %c0_i32_1 = arith.constant 0 : i32
    return %c0_i32, %c0_i32_0 : i32, i32
  }
  func.func @transform_11(%arg0: i32) -> (i32, i32, i32) {
    %c0_i32 = arith.constant 0 : i32
    %c0_i32_0 = arith.constant 0 : i32
    %c0_i32_1 = arith.constant 0 : i32
    %c0_i32_2 = arith.constant 0 : i32
    return %c0_i32, %c0_i32_0, %c0_i32_1 : i32, i32, i32
  }
  func.func @transform_12(%arg0: i32) -> (i32, i32, i32) {
    %c0_i32 = arith.constant 0 : i32
    %c0_i32_0 = arith.constant 0 : i32
    %c0_i32_1 = arith.constant 0 : i32
    %c0_i32_2 = arith.constant 0 : i32
    return %c0_i32, %c0_i32_0, %c0_i32_1 : i32, i32, i32
  }
  func.func @transform_13(%arg0: i32) -> (i32, i32) {
    %c0_i32 = arith.constant 0 : i32
    %c0_i32_0 = arith.constant 0 : i32
    %c0_i32_1 = arith.constant 0 : i32
    return %c0_i32, %c0_i32_0 : i32, i32
  }
  func.func @transform_14(%arg0: i32) -> (i32, i32, i32) {
    %c0_i32 = arith.constant 0 : i32
    %c0_i32_0 = arith.constant 0 : i32
    %c0_i32_1 = arith.constant 0 : i32
    %c0_i32_2 = arith.constant 0 : i32
    return %c0_i32, %c0_i32_0, %c0_i32_1 : i32, i32, i32
  }
  func.func @transform_15(%arg0: i32) -> (i32, i32) {
    %c0_i32 = arith.constant 0 : i32
    %c0_i32_0 = arith.constant 0 : i32
    %c0_i32_1 = arith.constant 0 : i32
    return %c0_i32, %c0_i32_0 : i32, i32
  }
  func.func @transform_16(%arg0: i32) -> (i32, i32, i32) {
    %c0_i32 = arith.constant 0 : i32
    %c0_i32_0 = arith.constant 0 : i32
    %c0_i32_1 = arith.constant 0 : i32
    return %arg0, %c0_i32, %c0_i32_0 : i32, i32, i32
  }
}

</mosaic_0001>

<llo_original>
// kernel: encoder_forward.1
$region0: #{encoder_forward.1}
  #allocation0 [shape = 'u32[]', space=smem, size = 0x4, offset = 0x4, fixed_abs, tag = 'smem constant byte address 0x4 - core index']
  #allocation1 [shape = 'u32[144,128]{1,0:T(1,128)}', space=vmem, size = 0x12000, scoped, tag = 'internal scratch']
  %s0 = inlined_call_operand.vmem [shape: bf16[2,64,192], index: 0, kind: input, shape index: {}]
  %s1 = inlined_call_operand.hbm [shape: bf16[3,32,64], index: 1, kind: input, shape index: {}]
  %s2 = inlined_call_operand.hbm [shape: bf16[3,192,256], index: 2, kind: input, shape index: {}]
  %s3 = inlined_call_operand.hbm [shape: f32[1,256], index: 3, kind: input, shape index: {}]
  %s4 = inlined_call_operand.vmem [shape: bf16[3,256,256], index: 4, kind: input, shape index: {}]
  %s5 = inlined_call_operand.hbm [shape: f32[1,256], index: 5, kind: input, shape index: {}]
  %s6 = inlined_call_operand.hbm [shape: bf16[3,16,32], index: 6, kind: input, shape index: {}]
  %s7 = inlined_call_operand.vmem [shape: bf16[3,256,256], index: 7, kind: input, shape index: {}]
  %s8 = inlined_call_operand.hbm [shape: f32[1,256], index: 8, kind: input, shape index: {}]
  %s9 = inlined_call_operand.hbm [shape: bf16[3,256,256], index: 9, kind: input, shape index: {}]
  %s10 = inlined_call_operand.hbm [shape: f32[1,256], index: 10, kind: input, shape index: {}]
  %s11 = inlined_call_operand.vmem [shape: bf16[3,8,16], index: 11, kind: input, shape index: {}]
  %s12 = inlined_call_operand.vmem [shape: bf16[3,256,128], index: 12, kind: input, shape index: {}]
  %s13 = inlined_call_operand.vmem [shape: f32[1,128], index: 13, kind: input, shape index: {}]
  %s14 = inlined_call_operand.vmem [shape: bf16[8,128,32], index: 14, kind: input, shape index: {}]
  %s15 = inlined_call_operand.vmem [shape: f32[1,32], index: 15, kind: input, shape index: {}]
  %s16 = inlined_call_operand.vmem [shape: f32[2,1,32], index: 16, kind: output, shape index: {}]
  %s17 = sld [smem:[#allocation0]]
  $region129: #{encoder_forward.1} parent=0
    _
  %s19 = ssub.s32 1, %s17
  %s20 = scalar_select 0, %s19, %s17
  $region1: #{encoder_forward.1} parent=0
    #allocation2 [shape = 'u8[24576]{0}', space=vmem, size = 0x6000, scoped, tag = 'input window, operand 1, single buffered']
    #allocation3 [shape = 's32[2]{0}', space=sflag, size = 0x8, scoped, tag = 'scoped memory for encoder_forward.1']
    #allocation4 [shape = 'u8[294912]{0}', space=vmem, size = 0x48000, scoped, tag = 'input window, operand 2, single buffered']
    #allocation5 [shape = 's32[1]{0}', space=sflag, size = 0x4, scoped, tag = 'scoped memory for encoder_forward.1']
    #allocation6 [shape = 'u8[1024]{0}', space=vmem, size = 0x400, scoped, tag = 'input window, operand 3, single buffered']
    #allocation7 [shape = 'u8[1024]{0}', space=vmem, size = 0x400, scoped, tag = 'input window, operand 5, single buffered']
    #allocation8 [shape = 's32[1]{0}', space=sflag, size = 0x4, scoped, tag = 'scoped memory for encoder_forward.1']
    #allocation9 [shape = 'u8[12288]{0}', space=vmem, size = 0x3000, scoped, tag = 'input window, operand 6, single buffered']
    #allocation10 [shape = 'u8[1024]{0}', space=vmem, size = 0x400, scoped, tag = 'input window, operand 8, single buffered']
    #allocation11 [shape = 's32[1]{0}', space=sflag, size = 0x4, scoped, tag = 'scoped memory for encoder_forward.1']
    #allocation12 [shape = 'u8[393216]{0}', space=vmem, size = 0x60000, scoped, tag = 'input window, operand 9, single buffered']
    #allocation13 [shape = 'u8[1024]{0}', space=vmem, size = 0x400, scoped, tag = 'input window, operand 10, single buffered']
    #allocation14 [shape = 's32[1]{0}', space=sflag, size = 0x4, scoped, tag = 'scoped memory for encoder_forward.1']
    %21 = vsyncpa [#allocation3], 0
    %22 = vsyncpa [#allocation5], 0
    %23 = vsyncpa [#allocation8], 0
    %24 = vsyncpa [#allocation11], 0
    %25 = vsyncpa [#allocation14], 0
    loop: start=0, step=1, limit=4
    $region2: #{encoder_forward.1} parent=1 // loop_pre_header
      _
    $region3: #{encoder_forward.1} parent=1 // loop_header
      %s27 = sphi 0, %s31
      %p28 = scmp.ge.s32.totalorder %s27, 4
      %s37 = sphi 0, %s39
      %s40 = sphi 0, %s37
      %s41 = sphi 0, %s40
      %s57 = sphi 0, %s41
      %s61 = sphi 0, %s61
      %s63 = sphi 0, %s61
      %s64 = sphi 0, %s63
      %s78 = sphi 0, %s64
      %s82 = sphi 0, %s82
      %s84 = sphi 0, %s82
      %s85 = sphi 0, %s84
      %s99 = sphi 0, %s85
      %s103 = sphi 0, %s103
      %s105 = sphi 0, %s103
      %s106 = sphi 0, %s105
      %s120 = sphi 0, %s106
      %s124 = sphi 0, %s124
      %s126 = sphi 0, %s124
      %s127 = sphi 0, %s126
      %s141 = sphi 0, %s127
      %s145 = sphi 0, %s145
      %s147 = sphi 0, %s145
      %s148 = sphi 0, %s147
      %s162 = sphi 0, %s148
      %s166 = sphi 0, %s166
      %s168 = sphi 0, %s166
      %s169 = sphi 0, %s168
      %s183 = sphi 0, %s169
      %s187 = sphi 0, %s187
      %s189 = sphi 0, %s187
      %s190 = sphi 0, %s189
      %s204 = sphi 0, %s190
      %s208 = sphi 0, %s208
      %s210 = sphi 0, %s208
      %s211 = sphi 0, %s210
      %s225 = sphi 0, %s211
      %s229 = sphi 0, %s229
      %s231 = sphi 0, %s229
      %s232 = sphi 0, %s231
      %s246 = sphi 0, %s232
      %s250 = sphi 0, %s250
      %s252 = sphi 0, %s250
      %s253 = sphi 0, %s252
      %s267 = sphi 0, %s253
      %s271 = sphi 0, %s271
      %s273 = sphi 0, %s271
      %s274 = sphi 0, %s273
      %s288 = sphi 0, %s274
      %s292 = sphi 0, %s292
      %s294 = sphi 0, %s292
      %s295 = sphi 0, %s294
      %s309 = sphi 0, %s295
      %s313 = sphi 0, %s313
      %s315 = sphi 0, %s313
      %s316 = sphi 0, %s315
      %s330 = sphi 0, %s316
      %s334 = sphi 0, %s334
      %s336 = sphi 0, %s334
      %s337 = sphi 0, %s336
      %s351 = sphi 0, %s337
      %s355 = sphi 0, %s355
      %s357 = sphi 0, %s355
      %s358 = sphi 0, %s357
      %s372 = sphi 0, %s358
      %s378 = sphi 0, %s380
      %s381 = sphi 0, %s378
      %s382 = sphi 0, %s381
      %s398 = sphi 0, %s382
    $region4: #{encoder_forward.1} parent=1 // loop_header_branch
      %30 = sbr.rel (%p28) target = $region8
    $region5: #{encoder_forward.1} parent=1 // loop_body
      %s32 = ssub.s32 %s27, 1
      %s33 = ssub.s32 %s27, 2
      %s34 = sadd.s32 %s27, 1
      %s35 = ssub.s32 %s27, %s34
      %p36 = scmp.eq.s32.totalorder %s35, 0
      %s38 = sadd.s32 %s37, 1
      %s39 = scalar_select %p36, %s37, %s38
      %p42 = pneg %p36
      %p43 = scmp.eq.s32.totalorder %s27, 1
      %p44 = por %p42, %p43
      %p45 = scmp.ne.s32.totalorder %s37, %s40
      %p46 = scmp.eq.s32.totalorder %s27, 0
      %p47 = por %p45, %p46
      %p48 = scmp.ne.s32.totalorder %s37, %s40
      %p49 = scmp.eq.s32.totalorder %s32, 1
      %p50 = por %p48, %p49
      %p51 = scmp.ne.s32.totalorder %s40, %s41
      %p52 = scmp.eq.s32.totalorder %s32, 0
      %p53 = por %p51, %p52
      %p54 = scmp.ne.s32.totalorder %s40, %s41
      %p55 = scmp.eq.s32.totalorder %s33, 1
      %p56 = por %p54, %p55
      %p58 = scmp.ne.s32.totalorder %s41, %s57
      %p59 = scmp.eq.s32.totalorder %s33, 0
      %p60 = por %p58, %p59
      %s62 = sadd.s32 %s61, 1
      %p65 = scmp.eq.s32.totalorder %s27, 1
      %p66 = scmp.ne.s32.totalorder %s61, %s63
      %p67 = scmp.eq.s32.totalorder %s27, 0
      %p68 = por %p66, %p67
      %p69 = scmp.ne.s32.totalorder %s61, %s63
      %p70 = scmp.eq.s32.totalorder %s32, 1
      %p71 = por %p69, %p70
      %p72 = scmp.ne.s32.totalorder %s63, %s64
      %p73 = scmp.eq.s32.totalorder %s32, 0
      %p74 = por %p72, %p73
      %p75 = scmp.ne.s32.totalorder %s63, %s64
      %p76 = scmp.eq.s32.totalorder %s33, 1
      %p77 = por %p75, %p76
      %p79 = scmp.ne.s32.totalorder %s64, %s78
      %p80 = scmp.eq.s32.totalorder %s33, 0
      %p81 = por %p79, %p80
      %s83 = sadd.s32 %s82, 1
      %p86 = scmp.eq.s32.totalorder %s27, 1
      %p87 = scmp.ne.s32.totalorder %s82, %s84
      %p88 = scmp.eq.s32.totalorder %s27, 0
      %p89 = por %p87, %p88
      %p90 = scmp.ne.s32.totalorder %s82, %s84
      %p91 = scmp.eq.s32.totalorder %s32, 1
      %p92 = por %p90, %p91
      %p93 = scmp.ne.s32.totalorder %s84, %s85
      %p94 = scmp.eq.s32.totalorder %s32, 0
      %p95 = por %p93, %p94
      %p96 = scmp.ne.s32.totalorder %s84, %s85
      %p97 = scmp.eq.s32.totalorder %s33, 1
      %p98 = por %p96, %p97
      %p100 = scmp.ne.s32.totalorder %s85, %s99
      %p101 = scmp.eq.s32.totalorder %s33, 0
      %p102 = por %p100, %p101
      %s104 = sadd.s32 %s103, 1
      %p107 = scmp.eq.s32.totalorder %s27, 1
      %p108 = scmp.ne.s32.totalorder %s103, %s105
      %p109 = scmp.eq.s32.totalorder %s27, 0
      %p110 = por %p108, %p109
      %p111 = scmp.ne.s32.totalorder %s103, %s105
      %p112 = scmp.eq.s32.totalorder %s32, 1
      %p113 = por %p111, %p112
      %p114 = scmp.ne.s32.totalorder %s105, %s106
      %p115 = scmp.eq.s32.totalorder %s32, 0
      %p116 = por %p114, %p115
      %p117 = scmp.ne.s32.totalorder %s105, %s106
      %p118 = scmp.eq.s32.totalorder %s33, 1
      %p119 = por %p117, %p118
      %p121 = scmp.ne.s32.totalorder %s106, %s120
      %p122 = scmp.eq.s32.totalorder %s33, 0
      %p123 = por %p121, %p122
      %s125 = sadd.s32 %s124, 1
      %p128 = scmp.eq.s32.totalorder %s27, 1
      %p129 = scmp.ne.s32.totalorder %s124, %s126
      %p130 = scmp.eq.s32.totalorder %s27, 0
      %p131 = por %p129, %p130
      %p132 = scmp.ne.s32.totalorder %s124, %s126
      %p133 = scmp.eq.s32.totalorder %s32, 1
      %p134 = por %p132, %p133
      %p135 = scmp.ne.s32.totalorder %s126, %s127
      %p136 = scmp.eq.s32.totalorder %s32, 0
      %p137 = por %p135, %p136
      %p138 = scmp.ne.s32.totalorder %s126, %s127
      %p139 = scmp.eq.s32.totalorder %s33, 1
      %p140 = por %p138, %p139
      %p142 = scmp.ne.s32.totalorder %s127, %s141
      %p143 = scmp.eq.s32.totalorder %s33, 0
      %p144 = por %p142, %p143
      %s146 = sadd.s32 %s145, 1
      %p149 = scmp.eq.s32.totalorder %s27, 1
      %p150 = scmp.ne.s32.totalorder %s145, %s147
      %p151 = scmp.eq.s32.totalorder %s27, 0
      %p152 = por %p150, %p151
      %p153 = scmp.ne.s32.totalorder %s145, %s147
      %p154 = scmp.eq.s32.totalorder %s32, 1
      %p155 = por %p153, %p154
      %p156 = scmp.ne.s32.totalorder %s147, %s148
      %p157 = scmp.eq.s32.totalorder %s32, 0
      %p158 = por %p156, %p157
      %p159 = scmp.ne.s32.totalorder %s147, %s148
      %p160 = scmp.eq.s32.totalorder %s33, 1
      %p161 = por %p159, %p160
      %p163 = scmp.ne.s32.totalorder %s148, %s162
      %p164 = scmp.eq.s32.totalorder %s33, 0
      %p165 = por %p163, %p164
      %s167 = sadd.s32 %s166, 1
      %p170 = scmp.eq.s32.totalorder %s27, 1
      %p171 = scmp.ne.s32.totalorder %s166, %s168
      %p172 = scmp.eq.s32.totalorder %s27, 0
      %p173 = por %p171, %p172
      %p174 = scmp.ne.s32.totalorder %s166, %s168
      %p175 = scmp.eq.s32.totalorder %s32, 1
      %p176 = por %p174, %p175
      %p177 = scmp.ne.s32.totalorder %s168, %s169
      %p178 = scmp.eq.s32.totalorder %s32, 0
      %p179 = por %p177, %p178
      %p180 = scmp.ne.s32.totalorder %s168, %s169
      %p181 = scmp.eq.s32.totalorder %s33, 1
      %p182 = por %p180, %p181
      %p184 = scmp.ne.s32.totalorder %s169, %s183
      %p185 = scmp.eq.s32.totalorder %s33, 0
      %p186 = por %p184, %p185
      %s188 = sadd.s32 %s187, 1
      %p191 = scmp.eq.s32.totalorder %s27, 1
      %p192 = scmp.ne.s32.totalorder %s187, %s189
      %p193 = scmp.eq.s32.totalorder %s27, 0
      %p194 = por %p192, %p193
      %p195 = scmp.ne.s32.totalorder %s187, %s189
      %p196 = scmp.eq.s32.totalorder %s32, 1
      %p197 = por %p195, %p196
      %p198 = scmp.ne.s32.totalorder %s189, %s190
      %p199 = scmp.eq.s32.totalorder %s32, 0
      %p200 = por %p198, %p199
      %p201 = scmp.ne.s32.totalorder %s189, %s190
      %p202 = scmp.eq.s32.totalorder %s33, 1
      %p203 = por %p201, %p202
      %p205 = scmp.ne.s32.totalorder %s190, %s204
      %p206 = scmp.eq.s32.totalorder %s33, 0
      %p207 = por %p205, %p206
      %s209 = sadd.s32 %s208, 1
      %p212 = scmp.eq.s32.totalorder %s27, 1
      %p213 = scmp.ne.s32.totalorder %s208, %s210
      %p214 = scmp.eq.s32.totalorder %s27, 0
      %p215 = por %p213, %p214
      %p216 = scmp.ne.s32.totalorder %s208, %s210
      %p217 = scmp.eq.s32.totalorder %s32, 1
      %p218 = por %p216, %p217
      %p219 = scmp.ne.s32.totalorder %s210, %s211
      %p220 = scmp.eq.s32.totalorder %s32, 0
      %p221 = por %p219, %p220
      %p222 = scmp.ne.s32.totalorder %s210, %s211
      %p223 = scmp.eq.s32.totalorder %s33, 1
      %p224 = por %p222, %p223
      %p226 = scmp.ne.s32.totalorder %s211, %s225
      %p227 = scmp.eq.s32.totalorder %s33, 0
      %p228 = por %p226, %p227
      %s230 = sadd.s32 %s229, 1
      %p233 = scmp.eq.s32.totalorder %s27, 1
      %p234 = scmp.ne.s32.totalorder %s229, %s231
      %p235 = scmp.eq.s32.totalorder %s27, 0
      %p236 = por %p234, %p235
      %p237 = scmp.ne.s32.totalorder %s229, %s231
      %p238 = scmp.eq.s32.totalorder %s32, 1
      %p239 = por %p237, %p238
      %p240 = scmp.ne.s32.totalorder %s231, %s232
      %p241 = scmp.eq.s32.totalorder %s32, 0
      %p242 = por %p240, %p241
      %p243 = scmp.ne.s32.totalorder %s231, %s232
      %p244 = scmp.eq.s32.totalorder %s33, 1
      %p245 = por %p243, %p244
      %p247 = scmp.ne.s32.totalorder %s232, %s246
      %p248 = scmp.eq.s32.totalorder %s33, 0
      %p249 = por %p247, %p248
      %s251 = sadd.s32 %s250, 1
      %p254 = scmp.eq.s32.totalorder %s27, 1
      %p255 = scmp.ne.s32.totalorder %s250, %s252
      %p256 = scmp.eq.s32.totalorder %s27, 0
      %p257 = por %p255, %p256
      %p258 = scmp.ne.s32.totalorder %s250, %s252
      %p259 = scmp.eq.s32.totalorder %s32, 1
      %p260 = por %p258, %p259
      %p261 = scmp.ne.s32.totalorder %s252, %s253
      %p262 = scmp.eq.s32.totalorder %s32, 0
      %p263 = por %p261, %p262
      %p264 = scmp.ne.s32.totalorder %s252, %s253
      %p265 = scmp.eq.s32.totalorder %s33, 1
      %p266 = por %p264, %p265
      %p268 = scmp.ne.s32.totalorder %s253, %s267
      %p269 = scmp.eq.s32.totalorder %s33, 0
      %p270 = por %p268, %p269
      %s272 = sadd.s32 %s271, 1
      %p275 = scmp.eq.s32.totalorder %s27, 1
      %p276 = scmp.ne.s32.totalorder %s271, %s273
      %p277 = scmp.eq.s32.totalorder %s27, 0
      %p278 = por %p276, %p277
      %p279 = scmp.ne.s32.totalorder %s271, %s273
      %p280 = scmp.eq.s32.totalorder %s32, 1
      %p281 = por %p279, %p280
      %p282 = scmp.ne.s32.totalorder %s273, %s274
      %p283 = scmp.eq.s32.totalorder %s32, 0
      %p284 = por %p282, %p283
      %p285 = scmp.ne.s32.totalorder %s273, %s274
      %p286 = scmp.eq.s32.totalorder %s33, 1
      %p287 = por %p285, %p286
      %p289 = scmp.ne.s32.totalorder %s274, %s288
      %p290 = scmp.eq.s32.totalorder %s33, 0
      %p291 = por %p289, %p290
      %s293 = sadd.s32 %s292, 1
      %p296 = scmp.eq.s32.totalorder %s27, 1
      %p297 = scmp.ne.s32.totalorder %s292, %s294
      %p298 = scmp.eq.s32.totalorder %s27, 0
      %p299 = por %p297, %p298
      %p300 = scmp.ne.s32.totalorder %s292, %s294
      %p301 = scmp.eq.s32.totalorder %s32, 1
      %p302 = por %p300, %p301
      %p303 = scmp.ne.s32.totalorder %s294, %s295
      %p304 = scmp.eq.s32.totalorder %s32, 0
      %p305 = por %p303, %p304
      %p306 = scmp.ne.s32.totalorder %s294, %s295
      %p307 = scmp.eq.s32.totalorder %s33, 1
      %p308 = por %p306, %p307
      %p310 = scmp.ne.s32.totalorder %s295, %s309
      %p311 = scmp.eq.s32.totalorder %s33, 0
      %p312 = por %p310, %p311
      %s314 = sadd.s32 %s313, 1
      %p317 = scmp.eq.s32.totalorder %s27, 1
      %p318 = scmp.ne.s32.totalorder %s313, %s315
      %p319 = scmp.eq.s32.totalorder %s27, 0
      %p320 = por %p318, %p319
      %p321 = scmp.ne.s32.totalorder %s313, %s315
      %p322 = scmp.eq.s32.totalorder %s32, 1
      %p323 = por %p321, %p322
      %p324 = scmp.ne.s32.totalorder %s315, %s316
      %p325 = scmp.eq.s32.totalorder %s32, 0
      %p326 = por %p324, %p325
      %p327 = scmp.ne.s32.totalorder %s315, %s316
      %p328 = scmp.eq.s32.totalorder %s33, 1
      %p329 = por %p327, %p328
      %p331 = scmp.ne.s32.totalorder %s316, %s330
      %p332 = scmp.eq.s32.totalorder %s33, 0
      %p333 = por %p331, %p332
      %s335 = sadd.s32 %s334, 1
      %p338 = scmp.eq.s32.totalorder %s27, 1
      %p339 = scmp.ne.s32.totalorder %s334, %s336
      %p340 = scmp.eq.s32.totalorder %s27, 0
      %p341 = por %p339, %p340
      %p342 = scmp.ne.s32.totalorder %s334, %s336
      %p343 = scmp.eq.s32.totalorder %s32, 1
      %p344 = por %p342, %p343
      %p345 = scmp.ne.s32.totalorder %s336, %s337
      %p346 = scmp.eq.s32.totalorder %s32, 0
      %p347 = por %p345, %p346
      %p348 = scmp.ne.s32.totalorder %s336, %s337
      %p349 = scmp.eq.s32.totalorder %s33, 1
      %p350 = por %p348, %p349
      %p352 = scmp.ne.s32.totalorder %s337, %s351
      %p353 = scmp.eq.s32.totalorder %s33, 0
      %p354 = por %p352, %p353
      %s356 = sadd.s32 %s355, 1
      %p359 = scmp.eq.s32.totalorder %s27, 1
      %p360 = scmp.ne.s32.totalorder %s355, %s357
      %p361 = scmp.eq.s32.totalorder %s27, 0
      %p362 = por %p360, %p361
      %p363 = scmp.ne.s32.totalorder %s355, %s357
      %p364 = scmp.eq.s32.totalorder %s32, 1
      %p365 = por %p363, %p364
      %p366 = scmp.ne.s32.totalorder %s357, %s358
      %p367 = scmp.eq.s32.totalorder %s32, 0
      %p368 = por %p366, %p367
      %p369 = scmp.ne.s32.totalorder %s357, %s358
      %p370 = scmp.eq.s32.totalorder %s33, 1
      %p371 = por %p369, %p370
      %p373 = scmp.ne.s32.totalorder %s358, %s372
      %p374 = scmp.eq.s32.totalorder %s33, 0
      %p375 = por %p373, %p374
      %s376 = ssub.s32 %s27, %s34
      %p377 = scmp.eq.s32.totalorder %s376, 0
      %s379 = sadd.s32 %s378, 1
      %s380 = scalar_select %p377, %s378, %s379
      %p383 = pneg %p377
      %p384 = scmp.eq.s32.totalorder %s27, 1
      %p385 = por %p383, %p384
      %p386 = scmp.ne.s32.totalorder %s378, %s381
      %p387 = scmp.eq.s32.totalorder %s27, 0
      %p388 = por %p386, %p387
      %p389 = scmp.ne.s32.totalorder %s378, %s381
      %p390 = scmp.eq.s32.totalorder %s32, 1
      %p391 = por %p389, %p390
      %p392 = scmp.ne.s32.totalorder %s381, %s382
      %p393 = scmp.eq.s32.totalorder %s32, 0
      %p394 = por %p392, %p393
      %p395 = scmp.ne.s32.totalorder %s381, %s382
      %p396 = scmp.eq.s32.totalorder %s33, 1
      %p397 = por %p395, %p396
      %p399 = scmp.ne.s32.totalorder %s382, %s398
      %p400 = scmp.eq.s32.totalorder %s33, 0
      %p401 = por %p399, %p400
      %p402 = scmp.le.s32.totalorder 1, %s27
      %p403 = scmp.lt.s32.totalorder %s27, 3
      %p404 = pnand %p402, %p403
      %p405 = pneg %p404
      // Predicated region
      $region9: #{encoder_forward.1} parent=5 // pred_check
        _
      $region10: #{encoder_forward.1} parent=5 // pred_check_branch
        %407 = sbr.rel (%p404) target = $region12
      $region11: #{encoder_forward.1} parent=5 // pred_region
        %s408 = ssub.s32 %s27, 1
        // Predicated region
        $region13: #{encoder_forward.1} parent=11 // pred_check
          %p409 = pneg %p74
        $region14: #{encoder_forward.1} parent=11 // pred_check_branch
          %411 = sbr.rel (%p409) target = $region16
        $region15: #{encoder_forward.1} parent=11 // pred_region
          %s413 = ssub.s32 768, 768
          %414 = vsyncadd [#allocation3], %s413
          %s415 = sshll.u32 [#allocation2], 4
          %s416 = int_to_ptr.vmem [resolvable:$true] %s415
          %421 = dma.hbm_to_vmem [thread:$0]  %s1, 768, %s416, [#allocation3], 64, 64, 4
        $region16: #{encoder_forward.1} parent=11 // pred_fallthru
          _
        // Predicated region
        $region17: #{encoder_forward.1} parent=11 // pred_check
          %p422 = pneg %p95
        $region18: #{encoder_forward.1} parent=11 // pred_check_branch
          %424 = sbr.rel (%p422) target = $region20
        $region19: #{encoder_forward.1} parent=11 // pred_region
          %s426 = ssub.s32 9216, 9216
          %427 = vsyncadd [#allocation5], %s426
          %s428 = sshll.u32 [#allocation4], 4
          %s429 = int_to_ptr.vmem [resolvable:$true] %s428
          %434 = dma.hbm_to_vmem [thread:$0]  %s2, 9216, %s429, [#allocation5], 128, 128, 8
        $region20: #{encoder_forward.1} parent=11 // pred_fallthru
          _
        // Predicated region
        $region21: #{encoder_forward.1} parent=11 // pred_check
          %p435 = pneg %p116
        $region22: #{encoder_forward.1} parent=11 // pred_check_branch
          %437 = sbr.rel (%p435) target = $region24
        $region23: #{encoder_forward.1} parent=11 // pred_region
          %s439 = ssub.s32 32, 32
          %440 = vsyncadd [#allocation5], %s439
          %s442 = sshll.u32 [#allocation6], 4
          %s443 = int_to_ptr.vmem [resolvable:$true] %s442
          %445 = dma.hbm_to_vmem [thread:$0]  %s3, 32, %s443, [#allocation5]
        $region24: #{encoder_forward.1} parent=11 // pred_fallthru
          _
        // Predicated region
        $region25: #{encoder_forward.1} parent=11 // pred_check
          %p446 = pneg %p137
        $region26: #{encoder_forward.1} parent=11 // pred_check_branch
          %448 = sbr.rel (%p446) target = $region28
        $region27: #{encoder_forward.1} parent=11 // pred_region
          _
        $region28: #{encoder_forward.1} parent=11 // pred_fallthru
          _
        // Predicated region
        $region29: #{encoder_forward.1} parent=11 // pred_check
          %p449 = pneg %p158
        $region30: #{encoder_forward.1} parent=11 // pred_check_branch
          %451 = sbr.rel (%p449) target = $region32
        $region31: #{encoder_forward.1} parent=11 // pred_region
          %s453 = ssub.s32 32, 32
          %454 = vsyncadd [#allocation8], %s453
          %s456 = sshll.u32 [#allocation7], 4
          %s457 = int_to_ptr.vmem [resolvable:$true] %s456
          %459 = dma.hbm_to_vmem [thread:$0]  %s5, 32, %s457, [#allocation8]
        $region32: #{encoder_forward.1} parent=11 // pred_fallthru
          _
        // Predicated region
        $region33: #{encoder_forward.1} parent=11 // pred_check
          %p460 = pneg %p179
        $region34: #{encoder_forward.1} parent=11 // pred_check_branch
          %462 = sbr.rel (%p460) target = $region36
        $region35: #{encoder_forward.1} parent=11 // pred_region
          %s464 = ssub.s32 384, 384
          %465 = vsyncadd [#allocation8], %s464
          %s466 = sshll.u32 [#allocation9], 4
          %s467 = int_to_ptr.vmem [resolvable:$true] %s466
          %472 = dma.hbm_to_vmem [thread:$0]  %s6, 384, %s467, [#allocation8], 64, 64, 4
        $region36: #{encoder_forward.1} parent=11 // pred_fallthru
          _
        // Predicated region
        $region37: #{encoder_forward.1} parent=11 // pred_check
          %p473 = pneg %p200
        $region38: #{encoder_forward.1} parent=11 // pred_check_branch
          %475 = sbr.rel (%p473) target = $region40
        $region39: #{encoder_forward.1} parent=11 // pred_region
          _
        $region40: #{encoder_forward.1} parent=11 // pred_fallthru
          _
        // Predicated region
        $region41: #{encoder_forward.1} parent=11 // pred_check
          %p476 = pneg %p221
        $region42: #{encoder_forward.1} parent=11 // pred_check_branch
          %478 = sbr.rel (%p476) target = $region44
        $region43: #{encoder_forward.1} parent=11 // pred_region
          %s480 = ssub.s32 32, 32
          %481 = vsyncadd [#allocation11], %s480
          %s483 = sshll.u32 [#allocation10], 4
          %s484 = int_to_ptr.vmem [resolvable:$true] %s483
          %486 = dma.hbm_to_vmem [thread:$0]  %s8, 32, %s484, [#allocation11]
        $region44: #{encoder_forward.1} parent=11 // pred_fallthru
          _
        // Predicated region
        $region45: #{encoder_forward.1} parent=11 // pred_check
          %p487 = pneg %p242
        $region46: #{encoder_forward.1} parent=11 // pred_check_branch
          %489 = sbr.rel (%p487) target = $region48
        $region47: #{encoder_forward.1} parent=11 // pred_region
          %s491 = ssub.s32 12288, 12288
          %492 = vsyncadd [#allocation11], %s491
          %s493 = sshll.u32 [#allocation12], 4
          %s494 = int_to_ptr.vmem [resolvable:$true] %s493
          %499 = dma.hbm_to_vmem [thread:$0]  %s9, 12288, %s494, [#allocation11], 128, 128, 8
        $region48: #{encoder_forward.1} parent=11 // pred_fallthru
          _
        // Predicated region
        $region49: #{encoder_forward.1} parent=11 // pred_check
          %p500 = pneg %p263
        $region50: #{encoder_forward.1} parent=11 // pred_check_branch
          %502 = sbr.rel (%p500) target = $region52
        $region51: #{encoder_forward.1} parent=11 // pred_region
          %s504 = ssub.s32 32, 32
          %505 = vsyncadd [#allocation14], %s504
          %s507 = sshll.u32 [#allocation13], 4
          %s508 = int_to_ptr.vmem [resolvable:$true] %s507
          %510 = dma.hbm_to_vmem [thread:$0]  %s10, 32, %s508, [#allocation14]
        $region52: #{encoder_forward.1} parent=11 // pred_fallthru
          _
        // Predicated region
        $region53: #{encoder_forward.1} parent=11 // pred_check
          %p511 = pneg %p284
        $region54: #{encoder_forward.1} parent=11 // pred_check_branch
          %513 = sbr.rel (%p511) target = $region56
        $region55: #{encoder_forward.1} parent=11 // pred_region
          _
        $region56: #{encoder_forward.1} parent=11 // pred_fallthru
          _
        // Predicated region
        $region57: #{encoder_forward.1} parent=11 // pred_check
          %p514 = pneg %p305
        $region58: #{encoder_forward.1} parent=11 // pred_check_branch
          %516 = sbr.rel (%p514) target = $region60
        $region59: #{encoder_forward.1} parent=11 // pred_region
          _
        $region60: #{encoder_forward.1} parent=11 // pred_fallthru
          _
        // Predicated region
        $region61: #{encoder_forward.1} parent=11 // pred_check
          %p517 = pneg %p326
        $region62: #{encoder_forward.1} parent=11 // pred_check_branch
          %519 = sbr.rel (%p517) target = $region64
        $region63: #{encoder_forward.1} parent=11 // pred_region
          _
        $region64: #{encoder_forward.1} parent=11 // pred_fallthru
          _
        // Predicated region
        $region65: #{encoder_forward.1} parent=11 // pred_check
          %p520 = pneg %p347
        $region66: #{encoder_forward.1} parent=11 // pred_check_branch
          %522 = sbr.rel (%p520) target = $region68
        $region67: #{encoder_forward.1} parent=11 // pred_region
          _
        $region68: #{encoder_forward.1} parent=11 // pred_fallthru
          _
        // Predicated region
        $region69: #{encoder_forward.1} parent=11 // pred_check
          %p523 = pneg %p368
        $region70: #{encoder_forward.1} parent=11 // pred_check_branch
          %525 = sbr.rel (%p523) target = $region72
        $region71: #{encoder_forward.1} parent=11 // pred_region
          _
        $region72: #{encoder_forward.1} parent=11 // pred_fallthru
          _
      $region12: #{encoder_forward.1} parent=5 // pred_fallthru
        _
      %p526 = scmp.lt.s32.totalorder %s27, 2
      // Predicated region
      $region73: #{encoder_forward.1} parent=5 // pred_check
        %p527 = pneg %p526
      $region74: #{encoder_forward.1} parent=5 // pred_check_branch
        %529 = sbr.rel (%p527) target = $region76
      $region75: #{encoder_forward.1} parent=5 // pred_region
        // Predicated region
        $region77: #{encoder_forward.1} parent=75 // pred_check
          %p530 = pneg %p47
        $region78: #{encoder_forward.1} parent=75 // pred_check_branch
          %532 = sbr.rel (%p530) target = $region80
        $region79: #{encoder_forward.1} parent=75 // pred_region
          %p533 = scmp.lt.s32.totalorder %s27, 1
          %s534 = scalar_select %p533, %s27, 1
          %s535 = smul.addr %s534, 16
          %s536 = smul.addr %s535, 4
          %s537 = scalar_lea.vmem %s0, %s536
        $region80: #{encoder_forward.1} parent=75 // pred_fallthru
          _
      $region76: #{encoder_forward.1} parent=5 // pred_fallthru
        _
      %p538 = scmp.le.s32.totalorder 1, %s27
      %p539 = scmp.lt.s32.totalorder %s27, 3
      %p540 = pnand %p538, %p539
      %p541 = pneg %p540
      // Predicated region
      $region81: #{encoder_forward.1} parent=5 // pred_check
        _
      $region82: #{encoder_forward.1} parent=5 // pred_check_branch
        %543 = sbr.rel (%p540) target = $region84
      $region83: #{encoder_forward.1} parent=5 // pred_region
        %s544 = ssub.s32 %s27, 1
        // Predicated region
        $region85: #{encoder_forward.1} parent=83 // pred_check
          %p545 = pneg %p74
        $region86: #{encoder_forward.1} parent=83 // pred_check_branch
          %547 = sbr.rel (%p545) target = $region88
        $region87: #{encoder_forward.1} parent=83 // pred_region
          %548 = dma.done [#allocation3], 768
        $region88: #{encoder_forward.1} parent=83 // pred_fallthru
          _
        // Predicated region
        $region89: #{encoder_forward.1} parent=83 // pred_check
          %p549 = pneg %p95
        $region90: #{encoder_forward.1} parent=83 // pred_check_branch
          %551 = sbr.rel (%p549) target = $region92
        $region91: #{encoder_forward.1} parent=83 // pred_region
          %552 = dma.done [#allocation5], 9216
        $region92: #{encoder_forward.1} parent=83 // pred_fallthru
          _
        // Predicated region
        $region93: #{encoder_forward.1} parent=83 // pred_check
          %p553 = pneg %p116
        $region94: #{encoder_forward.1} parent=83 // pred_check_branch
          %555 = sbr.rel (%p553) target = $region96
        $region95: #{encoder_forward.1} parent=83 // pred_region
          %556 = dma.done [#allocation5], 32
        $region96: #{encoder_forward.1} parent=83 // pred_fallthru
          _
        // Predicated region
        $region97: #{encoder_forward.1} parent=83 // pred_check
          %p557 = pneg %p158
        $region98: #{encoder_forward.1} parent=83 // pred_check_branch
          %559 = sbr.rel (%p557) target = $region100
        $region99: #{encoder_forward.1} parent=83 // pred_region
          %560 = dma.done [#allocation8], 32
        $region100: #{encoder_forward.1} parent=83 // pred_fallthru
          _
        // Predicated region
        $region101: #{encoder_forward.1} parent=83 // pred_check
          %p561 = pneg %p179
        $region102: #{encoder_forward.1} parent=83 // pred_check_branch
          %563 = sbr.rel (%p561) target = $region104
        $region103: #{encoder_forward.1} parent=83 // pred_region
          %564 = dma.done [#allocation8], 384
        $region104: #{encoder_forward.1} parent=83 // pred_fallthru
          _
        // Predicated region
        $region105: #{encoder_forward.1} parent=83 // pred_check
          %p565 = pneg %p221
        $region106: #{encoder_forward.1} parent=83 // pred_check_branch
          %567 = sbr.rel (%p565) target = $region108
        $region107: #{encoder_forward.1} parent=83 // pred_region
          %568 = dma.done [#allocation11], 32
        $region108: #{encoder_forward.1} parent=83 // pred_fallthru
          _
        // Predicated region
        $region109: #{encoder_forward.1} parent=83 // pred_check
          %p569 = pneg %p242
        $region110: #{encoder_forward.1} parent=83 // pred_check_branch
          %571 = sbr.rel (%p569) target = $region112
        $region111: #{encoder_forward.1} parent=83 // pred_region
          %572 = dma.done [#allocation11], 12288
        $region112: #{encoder_forward.1} parent=83 // pred_fallthru
          _
        // Predicated region
        $region113: #{encoder_forward.1} parent=83 // pred_check
          %p573 = pneg %p263
        $region114: #{encoder_forward.1} parent=83 // pred_check_branch
          %575 = sbr.rel (%p573) target = $region116
        $region115: #{encoder_forward.1} parent=83 // pred_region
          %576 = dma.done [#allocation14], 32
        $region116: #{encoder_forward.1} parent=83 // pred_fallthru
          _
        %p577 = scmp.lt.s32.totalorder %s32, 1
        %s578 = scalar_select %p577, %s32, 1
        %s579 = smul.addr %s578, 16
        %s580 = smul.addr %s579, 4
        %s581 = scalar_lea.vmem %s0, %s580
        %p582 = pneg %p53
        %p583 = pneg %p50
        %p584 = pneg %p74
        %p585 = pneg %p71
        %p586 = pneg %p95
        %p587 = pneg %p92
        %p588 = pneg %p116
        %p589 = pneg %p113
        %p590 = pneg %p137
        %p591 = pneg %p134
        %p592 = pneg %p158
        %p593 = pneg %p155
        %p594 = pneg %p179
        %p595 = pneg %p176
        %p596 = pneg %p200
        %p597 = pneg %p197
        %p598 = pneg %p221
        %p599 = pneg %p218
        %p600 = pneg %p242
        %p601 = pneg %p239
        %p602 = pneg %p263
        %p603 = pneg %p260
        %p604 = pneg %p284
        %p605 = pneg %p281
        %p606 = pneg %p305
        %p607 = pneg %p302
        %p608 = pneg %p326
        %p609 = pneg %p323
        %p610 = pneg %p347
        %p611 = pneg %p344
        %p612 = pneg %p368
        %p613 = pneg %p365
        %p614 = pneg %p394
        %p615 = pneg %p391
        %p616 = scmp.lt.s32.totalorder %s32, 1
        %s617 = scalar_select %p616, %s32, 1
        %s618 = scalar_lea.vmem %s16, %s617
        %p619 = scmp.lt.s32.totalorder %s32, 1
        %s620 = scalar_select %p619, %s32, 1
        %s621 = smul.addr %s620, 16
        %s622 = smul.addr %s621, 4
        %s623 = scalar_lea.vmem %s0, %s622
        %p624 = scmp.lt.s32.totalorder %s32, 1
        %s625 = scalar_select %p624, %s32, 1
        %s626 = scalar_lea.vmem %s16, %s625
        %v628 = vld [vmem:[%s623] sm:$0xff]
        %v629 = vld [vmem:[%s623 + $0x8] sm:$0xff]
        %v630 = vld [vmem:[%s623 + $0x10] sm:$0xff]
        %v631 = vld [vmem:[%s623 + $0x18] sm:$0xff]
        %v632 = vld [vmem:[%s623 + $0x20] sm:$0xff]
        %v633 = vld [vmem:[%s623 + $0x28] sm:$0xff]
        %v634 = vld [vmem:[%s623 + $0x30] sm:$0xff]
        %v635 = vld [vmem:[%s623 + $0x38] sm:$0xff]
        %v636 = vld [vmem:[#allocation2] sm:$0xf]
        %v637 = vld [vmem:[#allocation2 + $0x4] sm:$0xf]
        %v638 = vld [vmem:[#allocation2 + $0x8] sm:$0xf]
        %v639 = vld [vmem:[#allocation2 + $0xc] sm:$0xf]
        %v644 = vunpack.c.l.b16 %v636
        %v645 = vunpack.c.l.b16 %v637
        %v646 = vunpack.c.l.b16 %v638
        %v647 = vunpack.c.l.b16 %v639
        %v648 = vpack.c.b16 %v645, %v644
        %v649 = vpack.c.b16 %v647, %v646
        %v658 = vunpack.c.l.b16 %v628
        %v659 = vunpack.c.h.b16 %v628
        %v660 = vunpack.c.l.b16 %v629
        %v661 = vunpack.c.h.b16 %v629
        %v662 = vunpack.c.l.b16 %v630
        %v663 = vunpack.c.h.b16 %v630
        %v664 = vunpack.c.l.b16 %v631
        %v665 = vunpack.c.h.b16 %v631
        %v666 = vunpack.c.l.b16 %v632
        %v667 = vunpack.c.h.b16 %v632
        %v668 = vunpack.c.l.b16 %v633
        %v669 = vunpack.c.h.b16 %v633
        %v670 = vunpack.c.l.b16 %v634
        %v671 = vunpack.c.h.b16 %v634
        %v672 = vunpack.c.l.b16 %v635
        %v673 = vunpack.c.h.b16 %v635
        %v674 = vpack.c.b16 %v660, %v658
        %v675 = vpack.c.b16 %v661, %v659
        %v676 = vpack.c.b16 %v664, %v662
        %v677 = vpack.c.b16 %v665, %v663
        %v678 = vpack.c.b16 %v668, %v666
        %v679 = vpack.c.b16 %v669, %v667
        %v680 = vpack.c.b16 %v672, %v670
        %v681 = vpack.c.b16 %v673, %v671
        %vm690 = vcmask 523264
        %v692 = vsel %vm690, %v648, 0
        %v695 = vsel %vm690, %v649, 0
        %697 = vmatprep.subr.bf16.mxu0 0
        %698 = vmatpush1.bf16.msra.mxu0 0
        %699 = vmatprep.subr.bf16.mxu0 0
        %700 = vmatpush1.bf16.msra.mxu0 0
        %701 = vmatprep.subr.bf16.mxu0 0
        %702 = vmatpush1.bf16.msra.mxu0 0
        %703 = vmatprep.subr.bf16.mxu0 0
        %704 = vmatpush1.bf16.msra.mxu0 0
        %705 = vmatprep.subr.bf16.mxu0 %v681
        %706 = vmatpush1.bf16.msra.mxu0 %v680
        %707 = vmatprep.subr.bf16.mxu0 %v679
        %708 = vmatpush1.bf16.msra.mxu0 %v678
        %709 = vmatprep.subr.bf16.mxu0 %v677
        %710 = vmatpush1.bf16.msra.mxu0 %v676
        %711 = vmatprep.subr.bf16.mxu0 %v675
        %712 = vmatpush1.bf16.msra.mxu0 %v674
        %713 = vmatprep.subr.bf16.mxu0 0
        %714 = vmatpush2.bf16.msra.mxu0 0
        %715 = vmatprep.subr.bf16.mxu0 0
        %716 = vmatpush2.bf16.msra.mxu0 0
        %717 = vmatprep.subr.bf16.mxu0 0
        %718 = vmatpush2.bf16.msra.mxu0 0
        %719 = vmatprep.subr.bf16.mxu0 0
        %720 = vmatpush2.bf16.msra.mxu0 0
        %721 = vmatprep.subr.bf16.mxu0 0
        %722 = vmatpush2.bf16.msra.mxu0 0
        %723 = vmatprep.subr.bf16.mxu0 0
        %724 = vmatpush2.bf16.msra.mxu0 0
        %725 = vmatprep.subr.bf16.mxu0 0
        %726 = vmatpush2.bf16.msra.mxu0 0
        %727 = vmatprep.subr.bf16.mxu0 0
        %728 = vmatpush2.bf16.msra.mxu0 0
        %729 = vmatprep.mubr.bf16.mxu0 0
        %730 = vmatmul.mubr.bf16.gmra.mxu0 %v692
        %v731 = vpop.f32.mrf.mxu0
        %v732 = vadd.f32 0.0, %v731
        %v733 = vpop.f32.mrf.mxu0
        %v734 = vadd.f32 0.0, %v733
        %v735 = vpop.f32.mrf.mxu0
        %v736 = vadd.f32 0.0, %v735
        %v737 = vpop.f32.mrf.mxu0
        %v738 = vadd.f32 0.0, %v737
        %739 = vmatprep.mubr.bf16.mxu0 0
        %740 = vmatmul.mubr.bf16.gmra.mxu0 %v695
        %v741 = vpop.f32.mrf.mxu0
        %v742 = vadd.f32 0.0, %v741
        %v743 = vpop.f32.mrf.mxu0
        %v744 = vadd.f32 0.0, %v743
        %v745 = vpop.f32.mrf.mxu0
        %v746 = vadd.f32 0.0, %v745
        %v747 = vpop.f32.mrf.mxu0
        %v748 = vadd.f32 0.0, %v747
        %749 = vdwg.mxu0
        %v750 = vpack.c.bf16 %v736, %v732
        %v751 = vpack.c.bf16 %v738, %v734
        %v752 = vpack.c.bf16 %v746, %v742
        %v753 = vpack.c.bf16 %v748, %v744
        %v754 = vld [vmem:[#allocation4] sm:$0xff]
        %v755 = vld [vmem:[#allocation4 + $0x8] sm:$0xff]
        %v756 = vld [vmem:[#allocation4 + $0x10] sm:$0xff]
        %v757 = vld [vmem:[#allocation4 + $0x18] sm:$0xff]
        %v758 = vld [vmem:[#allocation4 + $0x20] sm:$0xff]
        %v759 = vld [vmem:[#allocation4 + $0x28] sm:$0xff]
        %v760 = vld [vmem:[#allocation4 + $0x30] sm:$0xff]
        %v761 = vld [vmem:[#allocation4 + $0x38] sm:$0xff]
        %v762 = vld [vmem:[#allocation4 + $0x40] sm:$0xff]
        %v763 = vld [vmem:[#allocation4 + $0x48] sm:$0xff]
        %v764 = vld [vmem:[#allocation4 + $0x50] sm:$0xff]
        %v765 = vld [vmem:[#allocation4 + $0x58] sm:$0xff]
        %v766 = vld [vmem:[#allocation4 + $0x60] sm:$0xff]
        %v767 = vld [vmem:[#allocation4 + $0x68] sm:$0xff]
        %v768 = vld [vmem:[#allocation4 + $0x70] sm:$0xff]
        %v769 = vld [vmem:[#allocation4 + $0x78] sm:$0xff]
        %v770 = vld [vmem:[#allocation4 + $0x80] sm:$0xff]
        %v771 = vld [vmem:[#allocation4 + $0x88] sm:$0xff]
        %v772 = vld [vmem:[#allocation4 + $0x90] sm:$0xff]
        %v773 = vld [vmem:[#allocation4 + $0x98] sm:$0xff]
        %v774 = vld [vmem:[#allocation4 + $0xa0] sm:$0xff]
        %v775 = vld [vmem:[#allocation4 + $0xa8] sm:$0xff]
        %v776 = vld [vmem:[#allocation4 + $0xb0] sm:$0xff]
        %v777 = vld [vmem:[#allocation4 + $0xb8] sm:$0xff]
        %s778 = scalar_lea.vmem [#allocation2], 16
        %v779 = vld [vmem:[%s778] sm:$0xf]
        %v780 = vld [vmem:[%s778 + $0x4] sm:$0xf]
        %v781 = vld [vmem:[%s778 + $0x8] sm:$0xf]
        %v782 = vld [vmem:[%s778 + $0xc] sm:$0xf]
        %v787 = vunpack.c.l.b16 %v779
        %v788 = vunpack.c.l.b16 %v780
        %v789 = vunpack.c.l.b16 %v781
        %v790 = vunpack.c.l.b16 %v782
        %v791 = vpack.c.b16 %v788, %v787
        %v792 = vpack.c.b16 %v790, %v789
        %v794 = vsel %vm690, %v791, 0
        %v797 = vsel %vm690, %v792, 0
        %799 = vmatprep.subr.bf16.mxu0 0
        %800 = vmatpush1.bf16.msra.mxu0 0
        %801 = vmatprep.subr.bf16.mxu0 0
        %802 = vmatpush1.bf16.msra.mxu0 0
        %803 = vmatprep.subr.bf16.mxu0 0
        %804 = vmatpush1.bf16.msra.mxu0 0
        %805 = vmatprep.subr.bf16.mxu0 0
        %806 = vmatpush1.bf16.msra.mxu0 0
        %807 = vmatprep.subr.bf16.mxu0 %v681
        %808 = vmatpush1.bf16.msra.mxu0 %v680
        %809 = vmatprep.subr.bf16.mxu0 %v679
        %810 = vmatpush1.bf16.msra.mxu0 %v678
        %811 = vmatprep.subr.bf16.mxu0 %v677
        %812 = vmatpush1.bf16.msra.mxu0 %v676
        %813 = vmatprep.subr.bf16.mxu0 %v675
        %814 = vmatpush1.bf16.msra.mxu0 %v674
        %815 = vmatprep.subr.bf16.mxu0 0
        %816 = vmatpush2.bf16.msra.mxu0 0
        %817 = vmatprep.subr.bf16.mxu0 0
        %818 = vmatpush2.bf16.msra.mxu0 0
        %819 = vmatprep.subr.bf16.mxu0 0
        %820 = vmatpush2.bf16.msra.mxu0 0
        %821 = vmatprep.subr.bf16.mxu0 0
        %822 = vmatpush2.bf16.msra.mxu0 0
        %823 = vmatprep.subr.bf16.mxu0 0
        %824 = vmatpush2.bf16.msra.mxu0 0
        %825 = vmatprep.subr.bf16.mxu0 0
        %826 = vmatpush2.bf16.msra.mxu0 0
        %827 = vmatprep.subr.bf16.mxu0 0
        %828 = vmatpush2.bf16.msra.mxu0 0
        %829 = vmatprep.subr.bf16.mxu0 0
        %830 = vmatpush2.bf16.msra.mxu0 0
        %831 = vmatprep.mubr.bf16.mxu0 0
        %832 = vmatmul.mubr.bf16.gmra.mxu0 %v794
        %v833 = vpop.f32.mrf.mxu0
        %v834 = vadd.f32 0.0, %v833
        %v835 = vpop.f32.mrf.mxu0
        %v836 = vadd.f32 0.0, %v835
        %v837 = vpop.f32.mrf.mxu0
        %v838 = vadd.f32 0.0, %v837
        %v839 = vpop.f32.mrf.mxu0
        %v840 = vadd.f32 0.0, %v839
        %841 = vmatprep.mubr.bf16.mxu0 0
        %842 = vmatmul.mubr.bf16.gmra.mxu0 %v797
        %v843 = vpop.f32.mrf.mxu0
        %v844 = vadd.f32 0.0, %v843
        %v845 = vpop.f32.mrf.mxu0
        %v846 = vadd.f32 0.0, %v845
        %v847 = vpop.f32.mrf.mxu0
        %v848 = vadd.f32 0.0, %v847
        %v849 = vpop.f32.mrf.mxu0
        %v850 = vadd.f32 0.0, %v849
        %851 = vdwg.mxu0
        %v852 = vpack.c.bf16 %v838, %v834
        %v853 = vpack.c.bf16 %v840, %v836
        %v854 = vpack.c.bf16 %v848, %v844
        %v855 = vpack.c.bf16 %v850, %v846
        %s856 = scalar_lea.vmem [#allocation4], 192
        %v857 = vld [vmem:[%s856] sm:$0xff]
        %v858 = vld [vmem:[%s856 + $0x8] sm:$0xff]
        %v859 = vld [vmem:[%s856 + $0x10] sm:$0xff]
        %v860 = vld [vmem:[%s856 + $0x18] sm:$0xff]
        %v861 = vld [vmem:[%s856 + $0x20] sm:$0xff]
        %v862 = vld [vmem:[%s856 + $0x28] sm:$0xff]
        %v863 = vld [vmem:[%s856 + $0x30] sm:$0xff]
        %v864 = vld [vmem:[%s856 + $0x38] sm:$0xff]
        %v865 = vld [vmem:[%s856 + $0x40] sm:$0xff]
        %v866 = vld [vmem:[%s856 + $0x48] sm:$0xff]
        %v867 = vld [vmem:[%s856 + $0x50] sm:$0xff]
        %v868 = vld [vmem:[%s856 + $0x58] sm:$0xff]
        %v869 = vld [vmem:[%s856 + $0x60] sm:$0xff]
        %v870 = vld [vmem:[%s856 + $0x68] sm:$0xff]
        %v871 = vld [vmem:[%s856 + $0x70] sm:$0xff]
        %v872 = vld [vmem:[%s856 + $0x78] sm:$0xff]
        %v873 = vld [vmem:[%s856 + $0x80] sm:$0xff]
        %v874 = vld [vmem:[%s856 + $0x88] sm:$0xff]
        %v875 = vld [vmem:[%s856 + $0x90] sm:$0xff]
        %v876 = vld [vmem:[%s856 + $0x98] sm:$0xff]
        %v877 = vld [vmem:[%s856 + $0xa0] sm:$0xff]
        %v878 = vld [vmem:[%s856 + $0xa8] sm:$0xff]
        %v879 = vld [vmem:[%s856 + $0xb0] sm:$0xff]
        %v880 = vld [vmem:[%s856 + $0xb8] sm:$0xff]
        %v905 = vunpack.c.l.b16 %v857
        %v906 = vunpack.c.h.b16 %v857
        %v907 = vunpack.c.l.b16 %v858
        %v908 = vunpack.c.h.b16 %v858
        %v909 = vunpack.c.l.b16 %v859
        %v910 = vunpack.c.h.b16 %v859
        %v911 = vunpack.c.l.b16 %v860
        %v912 = vunpack.c.h.b16 %v860
        %v913 = vunpack.c.l.b16 %v861
        %v914 = vunpack.c.h.b16 %v861
        %v915 = vunpack.c.l.b16 %v862
        %v916 = vunpack.c.h.b16 %v862
        %v917 = vunpack.c.l.b16 %v863
        %v918 = vunpack.c.h.b16 %v863
        %v919 = vunpack.c.l.b16 %v864
        %v920 = vunpack.c.h.b16 %v864
        %v921 = vunpack.c.l.b16 %v865
        %v922 = vunpack.c.h.b16 %v865
        %v923 = vunpack.c.l.b16 %v866
        %v924 = vunpack.c.h.b16 %v866
        %v925 = vunpack.c.l.b16 %v867
        %v926 = vunpack.c.h.b16 %v867
        %v927 = vunpack.c.l.b16 %v868
        %v928 = vunpack.c.h.b16 %v868
        %v929 = vunpack.c.l.b16 %v869
        %v930 = vunpack.c.h.b16 %v869
        %v931 = vunpack.c.l.b16 %v870
        %v932 = vunpack.c.h.b16 %v870
        %v933 = vunpack.c.l.b16 %v871
        %v934 = vunpack.c.h.b16 %v871
        %v935 = vunpack.c.l.b16 %v872
        %v936 = vunpack.c.h.b16 %v872
        %v937 = vunpack.c.l.b16 %v873
        %v938 = vunpack.c.h.b16 %v873
        %v939 = vunpack.c.l.b16 %v874
        %v940 = vunpack.c.h.b16 %v874
        %v941 = vunpack.c.l.b16 %v875
        %v942 = vunpack.c.h.b16 %v875
        %v943 = vunpack.c.l.b16 %v876
        %v944 = vunpack.c.h.b16 %v876
        %v945 = vunpack.c.l.b16 %v877
        %v946 = vunpack.c.h.b16 %v877
        %v947 = vunpack.c.l.b16 %v878
        %v948 = vunpack.c.h.b16 %v878
        %v949 = vunpack.c.l.b16 %v879
        %v950 = vunpack.c.h.b16 %v879
        %v951 = vunpack.c.l.b16 %v880
        %v952 = vunpack.c.h.b16 %v880
        %v953 = vpack.c.b16 %v907, %v905
        %v954 = vpack.c.b16 %v908, %v906
        %v955 = vpack.c.b16 %v911, %v909
        %v956 = vpack.c.b16 %v912, %v910
        %v957 = vpack.c.b16 %v915, %v913
        %v958 = vpack.c.b16 %v916, %v914
        %v959 = vpack.c.b16 %v919, %v917
        %v960 = vpack.c.b16 %v920, %v918
        %v961 = vpack.c.b16 %v923, %v921
        %v962 = vpack.c.b16 %v924, %v922
        %v963 = vpack.c.b16 %v927, %v925
        %v964 = vpack.c.b16 %v928, %v926
        %v965 = vpack.c.b16 %v931, %v929
        %v966 = vpack.c.b16 %v932, %v930
        %v967 = vpack.c.b16 %v935, %v933
        %v968 = vpack.c.b16 %v936, %v934
        %v969 = vpack.c.b16 %v939, %v937
        %v970 = vpack.c.b16 %v940, %v938
        %v971 = vpack.c.b16 %v943, %v941
        %v972 = vpack.c.b16 %v944, %v942
        %v973 = vpack.c.b16 %v947, %v945
        %v974 = vpack.c.b16 %v948, %v946
        %v975 = vpack.c.b16 %v951, %v949
        %v976 = vpack.c.b16 %v952, %v950
        %v1002 = vsel %vm690, %v853, 0
        %v1005 = vsel %vm690, %v855, 0
        %1007 = vmatprep.subr.bf16.mxu0 %v968
        %1008 = vmatpush1.bf16.msra.mxu0 %v967
        %1009 = vmatprep.subr.bf16.mxu0 %v966
        %1010 = vmatpush1.bf16.msra.mxu0 %v965
        %1011 = vmatprep.subr.bf16.mxu0 %v964
        %1012 = vmatpush1.bf16.msra.mxu0 %v963
        %1013 = vmatprep.subr.bf16.mxu0 %v962
        %1014 = vmatpush1.bf16.msra.mxu0 %v961
        %1015 = vmatprep.subr.bf16.mxu0 %v960
        %1016 = vmatpush1.bf16.msra.mxu0 %v959
        %1017 = vmatprep.subr.bf16.mxu0 %v958
        %1018 = vmatpush1.bf16.msra.mxu0 %v957
        %1019 = vmatprep.subr.bf16.mxu0 %v956
        %1020 = vmatpush1.bf16.msra.mxu0 %v955
        %1021 = vmatprep.subr.bf16.mxu0 %v954
        %1022 = vmatpush1.bf16.msra.mxu0 %v953
        %1023 = vmatprep.subr.bf16.mxu0 0
        %1024 = vmatpush2.bf16.msra.mxu0 0
        %1025 = vmatprep.subr.bf16.mxu0 0
        %1026 = vmatpush2.bf16.msra.mxu0 0
        %1027 = vmatprep.subr.bf16.mxu0 0
        %1028 = vmatpush2.bf16.msra.mxu0 0
        %1029 = vmatprep.subr.bf16.mxu0 0
        %1030 = vmatpush2.bf16.msra.mxu0 0
        %1031 = vmatprep.subr.bf16.mxu0 %v976
        %1032 = vmatpush2.bf16.msra.mxu0 %v975
        %1033 = vmatprep.subr.bf16.mxu0 %v974
        %1034 = vmatpush2.bf16.msra.mxu0 %v973
        %1035 = vmatprep.subr.bf16.mxu0 %v972
        %1036 = vmatpush2.bf16.msra.mxu0 %v971
        %1037 = vmatprep.subr.bf16.mxu0 %v970
        %1038 = vmatpush2.bf16.msra.mxu0 %v969
        %1039 = vmatprep.mubr.bf16.mxu0 %v1002
        %1040 = vmatmul.mubr.bf16.gmra.mxu0 %v852
        %v1041 = vpop.f32.mrf.mxu0
        %v1042 = vadd.f32 0.0, %v1041
        %v1043 = vpop.f32.mrf.mxu0
        %v1044 = vadd.f32 0.0, %v1043
        %v1045 = vpop.f32.mrf.mxu0
        %v1046 = vadd.f32 0.0, %v1045
        %v1047 = vpop.f32.mrf.mxu0
        %v1048 = vadd.f32 0.0, %v1047
        %1049 = vmatprep.mubr.bf16.mxu0 %v1005
        %1050 = vmatmul.mubr.bf16.gmra.mxu0 %v854
        %v1051 = vpop.f32.mrf.mxu0
        %v1052 = vadd.f32 0.0, %v1051
        %v1053 = vpop.f32.mrf.mxu0
        %v1054 = vadd.f32 0.0, %v1053
        %v1055 = vpop.f32.mrf.mxu0
        %v1056 = vadd.f32 0.0, %v1055
        %v1057 = vpop.f32.mrf.mxu0
        %v1058 = vadd.f32 0.0, %v1057
        %1059 = vdwg.mxu0
        %v1084 = vunpack.c.l.b16 %v754
        %v1085 = vunpack.c.h.b16 %v754
        %v1086 = vunpack.c.l.b16 %v755
        %v1087 = vunpack.c.h.b16 %v755
        %v1088 = vunpack.c.l.b16 %v756
        %v1089 = vunpack.c.h.b16 %v756
        %v1090 = vunpack.c.l.b16 %v757
        %v1091 = vunpack.c.h.b16 %v757
        %v1092 = vunpack.c.l.b16 %v758
        %v1093 = vunpack.c.h.b16 %v758
        %v1094 = vunpack.c.l.b16 %v759
        %v1095 = vunpack.c.h.b16 %v759
        %v1096 = vunpack.c.l.b16 %v760
        %v1097 = vunpack.c.h.b16 %v760
        %v1098 = vunpack.c.l.b16 %v761
        %v1099 = vunpack.c.h.b16 %v761
        %v1100 = vunpack.c.l.b16 %v762
        %v1101 = vunpack.c.h.b16 %v762
        %v1102 = vunpack.c.l.b16 %v763
        %v1103 = vunpack.c.h.b16 %v763
        %v1104 = vunpack.c.l.b16 %v764
        %v1105 = vunpack.c.h.b16 %v764
        %v1106 = vunpack.c.l.b16 %v765
        %v1107 = vunpack.c.h.b16 %v765
        %v1108 = vunpack.c.l.b16 %v766
        %v1109 = vunpack.c.h.b16 %v766
        %v1110 = vunpack.c.l.b16 %v767
        %v1111 = vunpack.c.h.b16 %v767
        %v1112 = vunpack.c.l.b16 %v768
        %v1113 = vunpack.c.h.b16 %v768
        %v1114 = vunpack.c.l.b16 %v769
        %v1115 = vunpack.c.h.b16 %v769
        %v1116 = vunpack.c.l.b16 %v770
        %v1117 = vunpack.c.h.b16 %v770
        %v1118 = vunpack.c.l.b16 %v771
        %v1119 = vunpack.c.h.b16 %v771
        %v1120 = vunpack.c.l.b16 %v772
        %v1121 = vunpack.c.h.b16 %v772
        %v1122 = vunpack.c.l.b16 %v773
        %v1123 = vunpack.c.h.b16 %v773
        %v1124 = vunpack.c.l.b16 %v774
        %v1125 = vunpack.c.h.b16 %v774
        %v1126 = vunpack.c.l.b16 %v775
        %v1127 = vunpack.c.h.b16 %v775
        %v1128 = vunpack.c.l.b16 %v776
        %v1129 = vunpack.c.h.b16 %v776
        %v1130 = vunpack.c.l.b16 %v777
        %v1131 = vunpack.c.h.b16 %v777
        %v1132 = vpack.c.b16 %v1086, %v1084
        %v1133 = vpack.c.b16 %v1087, %v1085
        %v1134 = vpack.c.b16 %v1090, %v1088
        %v1135 = vpack.c.b16 %v1091, %v1089
        %v1136 = vpack.c.b16 %v1094, %v1092
        %v1137 = vpack.c.b16 %v1095, %v1093
        %v1138 = vpack.c.b16 %v1098, %v1096
        %v1139 = vpack.c.b16 %v1099, %v1097
        %v1140 = vpack.c.b16 %v1102, %v1100
        %v1141 = vpack.c.b16 %v1103, %v1101
        %v1142 = vpack.c.b16 %v1106, %v1104
        %v1143 = vpack.c.b16 %v1107, %v1105
        %v1144 = vpack.c.b16 %v1110, %v1108
        %v1145 = vpack.c.b16 %v1111, %v1109
        %v1146 = vpack.c.b16 %v1114, %v1112
        %v1147 = vpack.c.b16 %v1115, %v1113
        %v1148 = vpack.c.b16 %v1118, %v1116
        %v1149 = vpack.c.b16 %v1119, %v1117
        %v1150 = vpack.c.b16 %v1122, %v1120
        %v1151 = vpack.c.b16 %v1123, %v1121
        %v1152 = vpack.c.b16 %v1126, %v1124
        %v1153 = vpack.c.b16 %v1127, %v1125
        %v1154 = vpack.c.b16 %v1130, %v1128
        %v1155 = vpack.c.b16 %v1131, %v1129
        %v1181 = vsel %vm690, %v751, 0
        %v1184 = vsel %vm690, %v753, 0
        %1186 = vmatprep.subr.bf16.mxu0 %v1147
        %1187 = vmatpush1.bf16.msra.mxu0 %v1146
        %1188 = vmatprep.subr.bf16.mxu0 %v1145
        %1189 = vmatpush1.bf16.msra.mxu0 %v1144
        %1190 = vmatprep.subr.bf16.mxu0 %v1143
        %1191 = vmatpush1.bf16.msra.mxu0 %v1142
        %1192 = vmatprep.subr.bf16.mxu0 %v1141
        %1193 = vmatpush1.bf16.msra.mxu0 %v1140
        %1194 = vmatprep.subr.bf16.mxu0 %v1139
        %1195 = vmatpush1.bf16.msra.mxu0 %v1138
        %1196 = vmatprep.subr.bf16.mxu0 %v1137
        %1197 = vmatpush1.bf16.msra.mxu0 %v1136
        %1198 = vmatprep.subr.bf16.mxu0 %v1135
        %1199 = vmatpush1.bf16.msra.mxu0 %v1134
        %1200 = vmatprep.subr.bf16.mxu0 %v1133
        %1201 = vmatpush1.bf16.msra.mxu0 %v1132
        %1202 = vmatprep.subr.bf16.mxu0 0
        %1203 = vmatpush2.bf16.msra.mxu0 0
        %1204 = vmatprep.subr.bf16.mxu0 0
        %1205 = vmatpush2.bf16.msra.mxu0 0
        %1206 = vmatprep.subr.bf16.mxu0 0
        %1207 = vmatpush2.bf16.msra.mxu0 0
        %1208 = vmatprep.subr.bf16.mxu0 0
        %1209 = vmatpush2.bf16.msra.mxu0 0
        %1210 = vmatprep.subr.bf16.mxu0 %v1155
        %1211 = vmatpush2.bf16.msra.mxu0 %v1154
        %1212 = vmatprep.subr.bf16.mxu0 %v1153
        %1213 = vmatpush2.bf16.msra.mxu0 %v1152
        %1214 = vmatprep.subr.bf16.mxu0 %v1151
        %1215 = vmatpush2.bf16.msra.mxu0 %v1150
        %1216 = vmatprep.subr.bf16.mxu0 %v1149
        %1217 = vmatpush2.bf16.msra.mxu0 %v1148
        %1218 = vmatprep.mubr.bf16.mxu0 %v1181
        %1219 = vmatmul.mubr.bf16.gmra.mxu0 %v750
        %v1220 = vpop.f32.mrf.mxu0
        %v1221 = vadd.f32 %v1042, %v1220
        %v1222 = vpop.f32.mrf.mxu0
        %v1223 = vadd.f32 %v1044, %v1222
        %v1224 = vpop.f32.mrf.mxu0
        %v1225 = vadd.f32 %v1046, %v1224
        %v1226 = vpop.f32.mrf.mxu0
        %v1227 = vadd.f32 %v1048, %v1226
        %1228 = vmatprep.mubr.bf16.mxu0 %v1184
        %1229 = vmatmul.mubr.bf16.gmra.mxu0 %v752
        %v1230 = vpop.f32.mrf.mxu0
        %v1231 = vadd.f32 %v1052, %v1230
        %v1232 = vpop.f32.mrf.mxu0
        %v1233 = vadd.f32 %v1054, %v1232
        %v1234 = vpop.f32.mrf.mxu0
        %v1235 = vadd.f32 %v1056, %v1234
        %v1236 = vpop.f32.mrf.mxu0
        %v1237 = vadd.f32 %v1058, %v1236
        %1238 = vdwg.mxu0
        %s1239 = scalar_lea.vmem [#allocation2], 32
        %v1240 = vld [vmem:[%s1239] sm:$0xf]
        %v1241 = vld [vmem:[%s1239 + $0x4] sm:$0xf]
        %v1242 = vld [vmem:[%s1239 + $0x8] sm:$0xf]
        %v1243 = vld [vmem:[%s1239 + $0xc] sm:$0xf]
        %v1248 = vunpack.c.l.b16 %v1240
        %v1249 = vunpack.c.l.b16 %v1241
        %v1250 = vunpack.c.l.b16 %v1242
        %v1251 = vunpack.c.l.b16 %v1243
        %v1252 = vpack.c.b16 %v1249, %v1248
        %v1253 = vpack.c.b16 %v1251, %v1250
        %v1255 = vsel %vm690, %v1252, 0
        %v1258 = vsel %vm690, %v1253, 0
        %1260 = vmatprep.subr.bf16.mxu0 0
        %1261 = vmatpush1.bf16.msra.mxu0 0
        %1262 = vmatprep.subr.bf16.mxu0 0
        %1263 = vmatpush1.bf16.msra.mxu0 0
        %1264 = vmatprep.subr.bf16.mxu0 0
        %1265 = vmatpush1.bf16.msra.mxu0 0
        %1266 = vmatprep.subr.bf16.mxu0 0
        %1267 = vmatpush1.bf16.msra.mxu0 0
        %1268 = vmatprep.subr.bf16.mxu0 %v681
        %1269 = vmatpush1.bf16.msra.mxu0 %v680
        %1270 = vmatprep.subr.bf16.mxu0 %v679
        %1271 = vmatpush1.bf16.msra.mxu0 %v678
        %1272 = vmatprep.subr.bf16.mxu0 %v677
        %1273 = vmatpush1.bf16.msra.mxu0 %v676
        %1274 = vmatprep.subr.bf16.mxu0 %v675
        %1275 = vmatpush1.bf16.msra.mxu0 %v674
        %1276 = vmatprep.subr.bf16.mxu0 0
        %1277 = vmatpush2.bf16.msra.mxu0 0
        %1278 = vmatprep.subr.bf16.mxu0 0
        %1279 = vmatpush2.bf16.msra.mxu0 0
        %1280 = vmatprep.subr.bf16.mxu0 0
        %1281 = vmatpush2.bf16.msra.mxu0 0
        %1282 = vmatprep.subr.bf16.mxu0 0
        %1283 = vmatpush2.bf16.msra.mxu0 0
        %1284 = vmatprep.subr.bf16.mxu0 0
        %1285 = vmatpush2.bf16.msra.mxu0 0
        %1286 = vmatprep.subr.bf16.mxu0 0
        %1287 = vmatpush2.bf16.msra.mxu0 0
        %1288 = vmatprep.subr.bf16.mxu0 0
        %1289 = vmatpush2.bf16.msra.mxu0 0
        %1290 = vmatprep.subr.bf16.mxu0 0
        %1291 = vmatpush2.bf16.msra.mxu0 0
        %1292 = vmatprep.mubr.bf16.mxu0 0
        %1293 = vmatmul.mubr.bf16.gmra.mxu0 %v1255
        %v1294 = vpop.f32.mrf.mxu0
        %v1295 = vadd.f32 0.0, %v1294
        %v1296 = vpop.f32.mrf.mxu0
        %v1297 = vadd.f32 0.0, %v1296
        %v1298 = vpop.f32.mrf.mxu0
        %v1299 = vadd.f32 0.0, %v1298
        %v1300 = vpop.f32.mrf.mxu0
        %v1301 = vadd.f32 0.0, %v1300
        %1302 = vmatprep.mubr.bf16.mxu0 0
        %1303 = vmatmul.mubr.bf16.gmra.mxu0 %v1258
        %v1304 = vpop.f32.mrf.mxu0
        %v1305 = vadd.f32 0.0, %v1304
        %v1306 = vpop.f32.mrf.mxu0
        %v1307 = vadd.f32 0.0, %v1306
        %v1308 = vpop.f32.mrf.mxu0
        %v1309 = vadd.f32 0.0, %v1308
        %v1310 = vpop.f32.mrf.mxu0
        %v1311 = vadd.f32 0.0, %v1310
        %1312 = vdwg.mxu0
        %v1313 = vpack.c.bf16 %v1299, %v1295
        %v1314 = vpack.c.bf16 %v1301, %v1297
        %v1315 = vpack.c.bf16 %v1309, %v1305
        %v1316 = vpack.c.bf16 %v1311, %v1307
        %s1317 = scalar_lea.vmem [#allocation4], 384
        %v1318 = vld [vmem:[%s1317] sm:$0xff]
        %v1319 = vld [vmem:[%s1317 + $0x8] sm:$0xff]
        %v1320 = vld [vmem:[%s1317 + $0x10] sm:$0xff]
        %v1321 = vld [vmem:[%s1317 + $0x18] sm:$0xff]
        %v1322 = vld [vmem:[%s1317 + $0x20] sm:$0xff]
        %v1323 = vld [vmem:[%s1317 + $0x28] sm:$0xff]
        %v1324 = vld [vmem:[%s1317 + $0x30] sm:$0xff]
        %v1325 = vld [vmem:[%s1317 + $0x38] sm:$0xff]
        %v1326 = vld [vmem:[%s1317 + $0x40] sm:$0xff]
        %v1327 = vld [vmem:[%s1317 + $0x48] sm:$0xff]
        %v1328 = vld [vmem:[%s1317 + $0x50] sm:$0xff]
        %v1329 = vld [vmem:[%s1317 + $0x58] sm:$0xff]
        %v1330 = vld [vmem:[%s1317 + $0x60] sm:$0xff]
        %v1331 = vld [vmem:[%s1317 + $0x68] sm:$0xff]
        %v1332 = vld [vmem:[%s1317 + $0x70] sm:$0xff]
        %v1333 = vld [vmem:[%s1317 + $0x78] sm:$0xff]
        %v1334 = vld [vmem:[%s1317 + $0x80] sm:$0xff]
        %v1335 = vld [vmem:[%s1317 + $0x88] sm:$0xff]
        %v1336 = vld [vmem:[%s1317 + $0x90] sm:$0xff]
        %v1337 = vld [vmem:[%s1317 + $0x98] sm:$0xff]
        %v1338 = vld [vmem:[%s1317 + $0xa0] sm:$0xff]
        %v1339 = vld [vmem:[%s1317 + $0xa8] sm:$0xff]
        %v1340 = vld [vmem:[%s1317 + $0xb0] sm:$0xff]
        %v1341 = vld [vmem:[%s1317 + $0xb8] sm:$0xff]
        %v1366 = vunpack.c.l.b16 %v1318
        %v1367 = vunpack.c.h.b16 %v1318
        %v1368 = vunpack.c.l.b16 %v1319
        %v1369 = vunpack.c.h.b16 %v1319
        %v1370 = vunpack.c.l.b16 %v1320
        %v1371 = vunpack.c.h.b16 %v1320
        %v1372 = vunpack.c.l.b16 %v1321
        %v1373 = vunpack.c.h.b16 %v1321
        %v1374 = vunpack.c.l.b16 %v1322
        %v1375 = vunpack.c.h.b16 %v1322
        %v1376 = vunpack.c.l.b16 %v1323
        %v1377 = vunpack.c.h.b16 %v1323
        %v1378 = vunpack.c.l.b16 %v1324
        %v1379 = vunpack.c.h.b16 %v1324
        %v1380 = vunpack.c.l.b16 %v1325
        %v1381 = vunpack.c.h.b16 %v1325
        %v1382 = vunpack.c.l.b16 %v1326
        %v1383 = vunpack.c.h.b16 %v1326
        %v1384 = vunpack.c.l.b16 %v1327
        %v1385 = vunpack.c.h.b16 %v1327
        %v1386 = vunpack.c.l.b16 %v1328
        %v1387 = vunpack.c.h.b16 %v1328
        %v1388 = vunpack.c.l.b16 %v1329
        %v1389 = vunpack.c.h.b16 %v1329
        %v1390 = vunpack.c.l.b16 %v1330
        %v1391 = vunpack.c.h.b16 %v1330
        %v1392 = vunpack.c.l.b16 %v1331
        %v1393 = vunpack.c.h.b16 %v1331
        %v1394 = vunpack.c.l.b16 %v1332
        %v1395 = vunpack.c.h.b16 %v1332
        %v1396 = vunpack.c.l.b16 %v1333
        %v1397 = vunpack.c.h.b16 %v1333
        %v1398 = vunpack.c.l.b16 %v1334
        %v1399 = vunpack.c.h.b16 %v1334
        %v1400 = vunpack.c.l.b16 %v1335
        %v1401 = vunpack.c.h.b16 %v1335
        %v1402 = vunpack.c.l.b16 %v1336
        %v1403 = vunpack.c.h.b16 %v1336
        %v1404 = vunpack.c.l.b16 %v1337
        %v1405 = vunpack.c.h.b16 %v1337
        %v1406 = vunpack.c.l.b16 %v1338
        %v1407 = vunpack.c.h.b16 %v1338
        %v1408 = vunpack.c.l.b16 %v1339
        %v1409 = vunpack.c.h.b16 %v1339
        %v1410 = vunpack.c.l.b16 %v1340
        %v1411 = vunpack.c.h.b16 %v1340
        %v1412 = vunpack.c.l.b16 %v1341
        %v1413 = vunpack.c.h.b16 %v1341
        %v1414 = vpack.c.b16 %v1368, %v1366
        %v1415 = vpack.c.b16 %v1369, %v1367
        %v1416 = vpack.c.b16 %v1372, %v1370
        %v1417 = vpack.c.b16 %v1373, %v1371
        %v1418 = vpack.c.b16 %v1376, %v1374
        %v1419 = vpack.c.b16 %v1377, %v1375
        %v1420 = vpack.c.b16 %v1380, %v1378
        %v1421 = vpack.c.b16 %v1381, %v1379
        %v1422 = vpack.c.b16 %v1384, %v1382
        %v1423 = vpack.c.b16 %v1385, %v1383
        %v1424 = vpack.c.b16 %v1388, %v1386
        %v1425 = vpack.c.b16 %v1389, %v1387
        %v1426 = vpack.c.b16 %v1392, %v1390
        %v1427 = vpack.c.b16 %v1393, %v1391
        %v1428 = vpack.c.b16 %v1396, %v1394
        %v1429 = vpack.c.b16 %v1397, %v1395
        %v1430 = vpack.c.b16 %v1400, %v1398
        %v1431 = vpack.c.b16 %v1401, %v1399
        %v1432 = vpack.c.b16 %v1404, %v1402
        %v1433 = vpack.c.b16 %v1405, %v1403
        %v1434 = vpack.c.b16 %v1408, %v1406
        %v1435 = vpack.c.b16 %v1409, %v1407
        %v1436 = vpack.c.b16 %v1412, %v1410
        %v1437 = vpack.c.b16 %v1413, %v1411
        %v1463 = vsel %vm690, %v1314, 0
        %v1466 = vsel %vm690, %v1316, 0
        %1468 = vmatprep.subr.bf16.mxu0 %v1429
        %1469 = vmatpush1.bf16.msra.mxu0 %v1428
        %1470 = vmatprep.subr.bf16.mxu0 %v1427
        %1471 = vmatpush1.bf16.msra.mxu0 %v1426
        %1472 = vmatprep.subr.bf16.mxu0 %v1425
        %1473 = vmatpush1.bf16.msra.mxu0 %v1424
        %1474 = vmatprep.subr.bf16.mxu0 %v1423
        %1475 = vmatpush1.bf16.msra.mxu0 %v1422
        %1476 = vmatprep.subr.bf16.mxu0 %v1421
        %1477 = vmatpush1.bf16.msra.mxu0 %v1420
        %1478 = vmatprep.subr.bf16.mxu0 %v1419
        %1479 = vmatpush1.bf16.msra.mxu0 %v1418
        %1480 = vmatprep.subr.bf16.mxu0 %v1417
        %1481 = vmatpush1.bf16.msra.mxu0 %v1416
        %1482 = vmatprep.subr.bf16.mxu0 %v1415
        %1483 = vmatpush1.bf16.msra.mxu0 %v1414
        %1484 = vmatprep.subr.bf16.mxu0 0
        %1485 = vmatpush2.bf16.msra.mxu0 0
        %1486 = vmatprep.subr.bf16.mxu0 0
        %1487 = vmatpush2.bf16.msra.mxu0 0
        %1488 = vmatprep.subr.bf16.mxu0 0
        %1489 = vmatpush2.bf16.msra.mxu0 0
        %1490 = vmatprep.subr.bf16.mxu0 0
        %1491 = vmatpush2.bf16.msra.mxu0 0
        %1492 = vmatprep.subr.bf16.mxu0 %v1437
        %1493 = vmatpush2.bf16.msra.mxu0 %v1436
        %1494 = vmatprep.subr.bf16.mxu0 %v1435
        %1495 = vmatpush2.bf16.msra.mxu0 %v1434
        %1496 = vmatprep.subr.bf16.mxu0 %v1433
        %1497 = vmatpush2.bf16.msra.mxu0 %v1432
        %1498 = vmatprep.subr.bf16.mxu0 %v1431
        %1499 = vmatpush2.bf16.msra.mxu0 %v1430
        %1500 = vmatprep.mubr.bf16.mxu0 %v1463
        %1501 = vmatmul.mubr.bf16.gmra.mxu0 %v1313
        %v1502 = vpop.f32.mrf.mxu0
        %v1503 = vadd.f32 0.0, %v1502
        %v1504 = vpop.f32.mrf.mxu0
        %v1505 = vadd.f32 0.0, %v1504
        %v1506 = vpop.f32.mrf.mxu0
        %v1507 = vadd.f32 0.0, %v1506
        %v1508 = vpop.f32.mrf.mxu0
        %v1509 = vadd.f32 0.0, %v1508
        %1510 = vmatprep.mubr.bf16.mxu0 %v1466
        %1511 = vmatmul.mubr.bf16.gmra.mxu0 %v1315
        %v1512 = vpop.f32.mrf.mxu0
        %v1513 = vadd.f32 0.0, %v1512
        %v1514 = vpop.f32.mrf.mxu0
        %v1515 = vadd.f32 0.0, %v1514
        %v1516 = vpop.f32.mrf.mxu0
        %v1517 = vadd.f32 0.0, %v1516
        %v1518 = vpop.f32.mrf.mxu0
        %v1519 = vadd.f32 0.0, %v1518
        %1520 = vdwg.mxu0
        %v1521 = vadd.f32 %v1221, %v1503
        %v1522 = vadd.f32 %v1223, %v1505
        %v1523 = vadd.f32 %v1225, %v1507
        %v1524 = vadd.f32 %v1227, %v1509
        %v1525 = vadd.f32 %v1231, %v1513
        %v1526 = vadd.f32 %v1233, %v1515
        %v1527 = vadd.f32 %v1235, %v1517
        %v1528 = vadd.f32 %v1237, %v1519
        %v1529 = vld [vmem:[#allocation6] sm:$0x3]
        %v1531 = vlaneseq
        %v1532 = vshrl.u32 %v1531, 7
        %v1533 = vsub.s32 0, %v1532
        %v1534 = vrot.slane %v1529, %v1533
        %v1535 = vlaneseq
        %v1536 = vshrl.u32 %v1535, 7
        %v1537 = vsub.s32 1, %v1536
        %v1538 = vrot.slane %v1529, %v1537
        %v1541 = vadd.f32 %v1521, %v1534
        %v1542 = vadd.f32 %v1522, %v1538
        %v1543 = vadd.f32 %v1523, %v1534
        %v1544 = vadd.f32 %v1524, %v1538
        %v1545 = vadd.f32 %v1525, %v1534
        %v1546 = vadd.f32 %v1526, %v1538
        %v1547 = vadd.f32 %v1527, %v1534
        %v1548 = vadd.f32 %v1528, %v1538
        %v1549 = vmul.f32 %v1541, 0.5
        %v1550 = vmul.f32 %v1542, 0.5
        %v1551 = vmul.f32 %v1543, 0.5
        %v1552 = vmul.f32 %v1544, 0.5
        %v1553 = vmul.f32 %v1545, 0.5
        %v1554 = vmul.f32 %v1546, 0.5
        %v1555 = vmul.f32 %v1547, 0.5
        %v1556 = vmul.f32 %v1548, 0.5
        %v1557 = vmul.f32 %v1541, 0.70710677
        %v1558 = vmul.f32 %v1542, 0.70710677
        %v1559 = vmul.f32 %v1543, 0.70710677
        %v1560 = vmul.f32 %v1544, 0.70710677
        %v1561 = vmul.f32 %v1545, 0.70710677
        %v1562 = vmul.f32 %v1546, 0.70710677
        %v1563 = vmul.f32 %v1547, 0.70710677
        %v1564 = vmul.f32 %v1548, 0.70710677
        %v1565 = vand.u32 2147483647, %v1557
        %v1566 = vand.u32 2147483647, %v1558
        %v1567 = vand.u32 2147483647, %v1559
        %v1568 = vand.u32 2147483647, %v1560
        %v1569 = vand.u32 2147483647, %v1561
        %v1570 = vand.u32 2147483647, %v1562
        %v1571 = vand.u32 2147483647, %v1563
        %v1572 = vand.u32 2147483647, %v1564
        %v1573 = vmul.f32 %v1565, 0.3275911
        %v1574 = vmul.f32 %v1566, 0.3275911
        %v1575 = vmul.f32 %v1567, 0.3275911
        %v1576 = vmul.f32 %v1568, 0.3275911
        %v1577 = vmul.f32 %v1569, 0.3275911
        %v1578 = vmul.f32 %v1570, 0.3275911
        %v1579 = vmul.f32 %v1571, 0.3275911
        %v1580 = vmul.f32 %v1572, 0.3275911
        %v1581 = vadd.f32 %v1573, 1.0
        %v1582 = vadd.f32 %v1574, 1.0
        %v1583 = vadd.f32 %v1575, 1.0
        %v1584 = vadd.f32 %v1576, 1.0
        %v1585 = vadd.f32 %v1577, 1.0
        %v1586 = vadd.f32 %v1578, 1.0
        %v1587 = vadd.f32 %v1579, 1.0
        %v1588 = vadd.f32 %v1580, 1.0
        %v1589 = vrcp.pop %v1581
        %v1590 = vrcp.pop %v1582
        %v1591 = vrcp.pop %v1583
        %v1592 = vrcp.pop %v1584
        %v1593 = vrcp.pop %v1585
        %v1594 = vrcp.pop %v1586
        %v1595 = vrcp.pop %v1587
        %v1596 = vrcp.pop %v1588
        %v1597 = vmul.f32 %v1589, 1.0614054
        %v1598 = vmul.f32 %v1590, 1.0614054
        %v1599 = vmul.f32 %v1591, 1.0614054
        %v1600 = vmul.f32 %v1592, 1.0614054
        %v1601 = vmul.f32 %v1593, 1.0614054
        %v1602 = vmul.f32 %v1594, 1.0614054
        %v1603 = vmul.f32 %v1595, 1.0614054
        %v1604 = vmul.f32 %v1596, 1.0614054
        %v1605 = vadd.f32 %v1597, -1.4531521
        %v1606 = vadd.f32 %v1598, -1.4531521
        %v1607 = vadd.f32 %v1599, -1.4531521
        %v1608 = vadd.f32 %v1600, -1.4531521
        %v1609 = vadd.f32 %v1601, -1.4531521
        %v1610 = vadd.f32 %v1602, -1.4531521
        %v1611 = vadd.f32 %v1603, -1.4531521
        %v1612 = vadd.f32 %v1604, -1.4531521
        %v1613 = vmul.f32 %v1605, %v1589
        %v1614 = vmul.f32 %v1606, %v1590
        %v1615 = vmul.f32 %v1607, %v1591
        %v1616 = vmul.f32 %v1608, %v1592
        %v1617 = vmul.f32 %v1609, %v1593
        %v1618 = vmul.f32 %v1610, %v1594
        %v1619 = vmul.f32 %v1611, %v1595
        %v1620 = vmul.f32 %v1612, %v1596
        %v1621 = vadd.f32 %v1613, 1.4214138
        %v1622 = vadd.f32 %v1614, 1.4214138
        %v1623 = vadd.f32 %v1615, 1.4214138
        %v1624 = vadd.f32 %v1616, 1.4214138
        %v1625 = vadd.f32 %v1617, 1.4214138
        %v1626 = vadd.f32 %v1618, 1.4214138
        %v1627 = vadd.f32 %v1619, 1.4214138
        %v1628 = vadd.f32 %v1620, 1.4214138
        %v1629 = vmul.f32 %v1621, %v1589
        %v1630 = vmul.f32 %v1622, %v1590
        %v1631 = vmul.f32 %v1623, %v1591
        %v1632 = vmul.f32 %v1624, %v1592
        %v1633 = vmul.f32 %v1625, %v1593
        %v1634 = vmul.f32 %v1626, %v1594
        %v1635 = vmul.f32 %v1627, %v1595
        %v1636 = vmul.f32 %v1628, %v1596
        %v1637 = vadd.f32 %v1629, -0.28449672
        %v1638 = vadd.f32 %v1630, -0.28449672
        %v1639 = vadd.f32 %v1631, -0.28449672
        %v1640 = vadd.f32 %v1632, -0.28449672
        %v1641 = vadd.f32 %v1633, -0.28449672
        %v1642 = vadd.f32 %v1634, -0.28449672
        %v1643 = vadd.f32 %v1635, -0.28449672
        %v1644 = vadd.f32 %v1636, -0.28449672
        %v1645 = vmul.f32 %v1637, %v1589
        %v1646 = vmul.f32 %v1638, %v1590
        %v1647 = vmul.f32 %v1639, %v1591
        %v1648 = vmul.f32 %v1640, %v1592
        %v1649 = vmul.f32 %v1641, %v1593
        %v1650 = vmul.f32 %v1642, %v1594
        %v1651 = vmul.f32 %v1643, %v1595
        %v1652 = vmul.f32 %v1644, %v1596
        %v1653 = vadd.f32 %v1645, 0.2548296
        %v1654 = vadd.f32 %v1646, 0.2548296
        %v1655 = vadd.f32 %v1647, 0.2548296
        %v1656 = vadd.f32 %v1648, 0.2548296
        %v1657 = vadd.f32 %v1649, 0.2548296
        %v1658 = vadd.f32 %v1650, 0.2548296
        %v1659 = vadd.f32 %v1651, 0.2548296
        %v1660 = vadd.f32 %v1652, 0.2548296
        %v1661 = vmul.f32 %v1653, %v1589
        %v1662 = vmul.f32 %v1654, %v1590
        %v1663 = vmul.f32 %v1655, %v1591
        %v1664 = vmul.f32 %v1656, %v1592
        %v1665 = vmul.f32 %v1657, %v1593
        %v1666 = vmul.f32 %v1658, %v1594
        %v1667 = vmul.f32 %v1659, %v1595
        %v1668 = vmul.f32 %v1660, %v1596
        %v1669 = vsub.f32 0.0, %v1565
        %v1670 = vsub.f32 0.0, %v1566
        %v1671 = vsub.f32 0.0, %v1567
        %v1672 = vsub.f32 0.0, %v1568
        %v1673 = vsub.f32 0.0, %v1569
        %v1674 = vsub.f32 0.0, %v1570
        %v1675 = vsub.f32 0.0, %v1571
        %v1676 = vsub.f32 0.0, %v1572
        %v1677 = vmul.f32 %v1669, %v1565
        %v1678 = vmul.f32 %v1670, %v1566
        %v1679 = vmul.f32 %v1671, %v1567
        %v1680 = vmul.f32 %v1672, %v1568
        %v1681 = vmul.f32 %v1673, %v1569
        %v1682 = vmul.f32 %v1674, %v1570
        %v1683 = vmul.f32 %v1675, %v1571
        %v1684 = vmul.f32 %v1676, %v1572
        %v1685 = vmul.f32 %v1677, 1.442695
        %v1686 = vpow.pop %v1685
        %v1687 = vmul.f32 %v1678, 1.442695
        %v1688 = vpow.pop %v1687
        %v1689 = vmul.f32 %v1679, 1.442695
        %v1690 = vpow.pop %v1689
        %v1691 = vmul.f32 %v1680, 1.442695
        %v1692 = vpow.pop %v1691
        %v1693 = vmul.f32 %v1681, 1.442695
        %v1694 = vpow.pop %v1693
        %v1695 = vmul.f32 %v1682, 1.442695
        %v1696 = vpow.pop %v1695
        %v1697 = vmul.f32 %v1683, 1.442695
        %v1698 = vpow.pop %v1697
        %v1699 = vmul.f32 %v1684, 1.442695
        %v1700 = vpow.pop %v1699
        %v1701 = vmul.f32 %v1661, %v1686
        %v1702 = vmul.f32 %v1662, %v1688
        %v1703 = vmul.f32 %v1663, %v1690
        %v1704 = vmul.f32 %v1664, %v1692
        %v1705 = vmul.f32 %v1665, %v1694
        %v1706 = vmul.f32 %v1666, %v1696
        %v1707 = vmul.f32 %v1667, %v1698
        %v1708 = vmul.f32 %v1668, %v1700
        %v1709 = vsub.f32 1.0, %v1701
        %v1710 = vsub.f32 1.0, %v1702
        %v1711 = vsub.f32 1.0, %v1703
        %v1712 = vsub.f32 1.0, %v1704
        %v1713 = vsub.f32 1.0, %v1705
        %v1714 = vsub.f32 1.0, %v1706
        %v1715 = vsub.f32 1.0, %v1707
        %v1716 = vsub.f32 1.0, %v1708
        %vm1717 = vcmp.ge.f32.partialorder %v1557, 0.0
        %vm1718 = vcmp.ge.f32.partialorder %v1558, 0.0
        %vm1719 = vcmp.ge.f32.partialorder %v1559, 0.0
        %vm1720 = vcmp.ge.f32.partialorder %v1560, 0.0
        %vm1721 = vcmp.ge.f32.partialorder %v1561, 0.0
        %vm1722 = vcmp.ge.f32.partialorder %v1562, 0.0
        %vm1723 = vcmp.ge.f32.partialorder %v1563, 0.0
        %vm1724 = vcmp.ge.f32.partialorder %v1564, 0.0
        %v1725 = vsub.f32 0.0, %v1709
        %v1726 = vsub.f32 0.0, %v1710
        %v1727 = vsub.f32 0.0, %v1711
        %v1728 = vsub.f32 0.0, %v1712
        %v1729 = vsub.f32 0.0, %v1713
        %v1730 = vsub.f32 0.0, %v1714
        %v1731 = vsub.f32 0.0, %v1715
        %v1732 = vsub.f32 0.0, %v1716
        %v1733 = vsel %vm1717, %v1709, %v1725
        %v1734 = vsel %vm1718, %v1710, %v1726
        %v1735 = vsel %vm1719, %v1711, %v1727
        %v1736 = vsel %vm1720, %v1712, %v1728
        %v1737 = vsel %vm1721, %v1713, %v1729
        %v1738 = vsel %vm1722, %v1714, %v1730
        %v1739 = vsel %vm1723, %v1715, %v1731
        %v1740 = vsel %vm1724, %v1716, %v1732
        %v1741 = vadd.f32 %v1733, 1.0
        %v1742 = vadd.f32 %v1734, 1.0
        %v1743 = vadd.f32 %v1735, 1.0
        %v1744 = vadd.f32 %v1736, 1.0
        %v1745 = vadd.f32 %v1737, 1.0
        %v1746 = vadd.f32 %v1738, 1.0
        %v1747 = vadd.f32 %v1739, 1.0
        %v1748 = vadd.f32 %v1740, 1.0
        %v1749 = vmul.f32 %v1549, %v1741
        %v1750 = vmul.f32 %v1550, %v1742
        %v1751 = vmul.f32 %v1551, %v1743
        %v1752 = vmul.f32 %v1552, %v1744
        %v1753 = vmul.f32 %v1553, %v1745
        %v1754 = vmul.f32 %v1554, %v1746
        %v1755 = vmul.f32 %v1555, %v1747
        %v1756 = vmul.f32 %v1556, %v1748
        %v1757 = vpack.c.bf16 %v1751, %v1749
        %v1758 = vpack.c.bf16 %v1752, %v1750
        %v1759 = vpack.c.bf16 %v1755, %v1753
        %v1760 = vpack.c.bf16 %v1756, %v1754
        %vm1761 = vsmask.f32 256
        %v1763 = vshrl.u32 %v1757, 16
        %v1765 = vrot.slane %v1763, 7
        %v1766 = vshll.u32 %v1757, 16
        %v1768 = vor.u32 %v1765, %v1766
        %v1770 = vshrl.u32 %v1758, 16
        %v1772 = vrot.slane %v1770, 7
        %v1773 = vshll.u32 %v1758, 16
        %v1775 = vor.u32 %v1772, %v1773
        %v1777 = vshrl.u32 %v1759, 16
        %v1779 = vrot.slane %v1777, 7
        %v1780 = vshll.u32 %v1759, 16
        %v1782 = vor.u32 %v1779, %v1780
        %v1783 = vsel %vm1761, %v1765, %v1782
        %v1785 = vshrl.u32 %v1760, 16
        %v1787 = vrot.slane %v1785, 7
        %v1788 = vshll.u32 %v1760, 16
        %v1790 = vor.u32 %v1787, %v1788
        %v1791 = vsel %vm1761, %v1772, %v1790
        %vm1798 = vcmask 1040384
        %vm1799 = vmand %vm1798, %vm1761
        %v1800 = vsel %vm1799, 0, %v1768
        %v1801 = vsel %vm1799, 0, %v1775
        %v1802 = vsel %vm1799, %v1779, 0
        %v1803 = vsel %vm1799, %v1787, 0
        %v1804 = vld [vmem:[%s4] sm:$0xff]
        %v1805 = vld [vmem:[%s4 + $0x8] sm:$0xff]
        %v1806 = vld [vmem:[%s4 + $0x10] sm:$0xff]
        %v1807 = vld [vmem:[%s4 + $0x18] sm:$0xff]
        %v1808 = vld [vmem:[%s4 + $0x20] sm:$0xff]
        %v1809 = vld [vmem:[%s4 + $0x28] sm:$0xff]
        %v1810 = vld [vmem:[%s4 + $0x30] sm:$0xff]
        %v1811 = vld [vmem:[%s4 + $0x38] sm:$0xff]
        %v1812 = vld [vmem:[%s4 + $0x40] sm:$0xff]
        %v1813 = vld [vmem:[%s4 + $0x48] sm:$0xff]
        %v1814 = vld [vmem:[%s4 + $0x50] sm:$0xff]
        %v1815 = vld [vmem:[%s4 + $0x58] sm:$0xff]
        %v1816 = vld [vmem:[%s4 + $0x60] sm:$0xff]
        %v1817 = vld [vmem:[%s4 + $0x68] sm:$0xff]
        %v1818 = vld [vmem:[%s4 + $0x70] sm:$0xff]
        %v1819 = vld [vmem:[%s4 + $0x78] sm:$0xff]
        %v1820 = vld [vmem:[%s4 + $0x80] sm:$0xff]
        %v1821 = vld [vmem:[%s4 + $0x88] sm:$0xff]
        %v1822 = vld [vmem:[%s4 + $0x90] sm:$0xff]
        %v1823 = vld [vmem:[%s4 + $0x98] sm:$0xff]
        %v1824 = vld [vmem:[%s4 + $0xa0] sm:$0xff]
        %v1825 = vld [vmem:[%s4 + $0xa8] sm:$0xff]
        %v1826 = vld [vmem:[%s4 + $0xb0] sm:$0xff]
        %v1827 = vld [vmem:[%s4 + $0xb8] sm:$0xff]
        %v1828 = vld [vmem:[%s4 + $0xc0] sm:$0xff]
        %v1829 = vld [vmem:[%s4 + $0xc8] sm:$0xff]
        %v1830 = vld [vmem:[%s4 + $0xd0] sm:$0xff]
        %v1831 = vld [vmem:[%s4 + $0xd8] sm:$0xff]
        %v1832 = vld [vmem:[%s4 + $0xe0] sm:$0xff]
        %v1833 = vld [vmem:[%s4 + $0xe8] sm:$0xff]
        %v1834 = vld [vmem:[%s4 + $0xf0] sm:$0xff]
        %v1835 = vld [vmem:[%s4 + $0xf8] sm:$0xff]
        %s1836 = scalar_lea.vmem %s4, 256
        %v1837 = vld [vmem:[%s1836] sm:$0xff]
        %v1838 = vld [vmem:[%s1836 + $0x8] sm:$0xff]
        %v1839 = vld [vmem:[%s1836 + $0x10] sm:$0xff]
        %v1840 = vld [vmem:[%s1836 + $0x18] sm:$0xff]
        %v1841 = vld [vmem:[%s1836 + $0x20] sm:$0xff]
        %v1842 = vld [vmem:[%s1836 + $0x28] sm:$0xff]
        %v1843 = vld [vmem:[%s1836 + $0x30] sm:$0xff]
        %v1844 = vld [vmem:[%s1836 + $0x38] sm:$0xff]
        %v1845 = vld [vmem:[%s1836 + $0x40] sm:$0xff]
        %v1846 = vld [vmem:[%s1836 + $0x48] sm:$0xff]
        %v1847 = vld [vmem:[%s1836 + $0x50] sm:$0xff]
        %v1848 = vld [vmem:[%s1836 + $0x58] sm:$0xff]
        %v1849 = vld [vmem:[%s1836 + $0x60] sm:$0xff]
        %v1850 = vld [vmem:[%s1836 + $0x68] sm:$0xff]
        %v1851 = vld [vmem:[%s1836 + $0x70] sm:$0xff]
        %v1852 = vld [vmem:[%s1836 + $0x78] sm:$0xff]
        %v1853 = vld [vmem:[%s1836 + $0x80] sm:$0xff]
        %v1854 = vld [vmem:[%s1836 + $0x88] sm:$0xff]
        %v1855 = vld [vmem:[%s1836 + $0x90] sm:$0xff]
        %v1856 = vld [vmem:[%s1836 + $0x98] sm:$0xff]
        %v1857 = vld [vmem:[%s1836 + $0xa0] sm:$0xff]
        %v1858 = vld [vmem:[%s1836 + $0xa8] sm:$0xff]
        %v1859 = vld [vmem:[%s1836 + $0xb0] sm:$0xff]
        %v1860 = vld [vmem:[%s1836 + $0xb8] sm:$0xff]
        %v1861 = vld [vmem:[%s1836 + $0xc0] sm:$0xff]
        %v1862 = vld [vmem:[%s1836 + $0xc8] sm:$0xff]
        %v1863 = vld [vmem:[%s1836 + $0xd0] sm:$0xff]
        %v1864 = vld [vmem:[%s1836 + $0xd8] sm:$0xff]
        %v1865 = vld [vmem:[%s1836 + $0xe0] sm:$0xff]
        %v1866 = vld [vmem:[%s1836 + $0xe8] sm:$0xff]
        %v1867 = vld [vmem:[%s1836 + $0xf0] sm:$0xff]
        %v1868 = vld [vmem:[%s1836 + $0xf8] sm:$0xff]
        %vm1869 = vsmask.f32 7424
        %v1871 = vshrl.u32 %v1800, 16
        %v1873 = vshll.u32 %v1800, 16
        %v1875 = vrot.slane %v1873, 1
        %v1876 = vor.u32 %v1871, %v1875
        %v1878 = vshll.u32 %v1783, 16
        %v1880 = vrot.slane %v1878, 1
        %v1881 = vsel %vm1869, %v1876, %v1880
        %v1883 = vshrl.u32 %v1801, 16
        %v1885 = vshll.u32 %v1801, 16
        %v1887 = vrot.slane %v1885, 1
        %v1888 = vor.u32 %v1883, %v1887
        %v1890 = vshll.u32 %v1791, 16
        %v1892 = vrot.slane %v1890, 1
        %v1893 = vsel %vm1869, %v1888, %v1892
        %v1894 = vshrl.u32 %v1783, 16
        %v1896 = vor.u32 %v1894, %v1880
        %v1898 = vshll.u32 %v1802, 16
        %v1900 = vrot.slane %v1898, 1
        %v1901 = vsel %vm1869, %v1896, %v1900
        %v1902 = vshrl.u32 %v1791, 16
        %v1904 = vor.u32 %v1902, %v1892
        %v1906 = vshll.u32 %v1803, 16
        %v1908 = vrot.slane %v1906, 1
        %v1909 = vsel %vm1869, %v1904, %v1908
        %v1946 = vunpack.c.l.b16 %v1837
        %v1947 = vunpack.c.h.b16 %v1837
        %v1948 = vunpack.c.l.b16 %v1838
        %v1949 = vunpack.c.h.b16 %v1838
        %v1950 = vunpack.c.l.b16 %v1839
        %v1951 = vunpack.c.h.b16 %v1839
        %v1952 = vunpack.c.l.b16 %v1840
        %v1953 = vunpack.c.h.b16 %v1840
        %v1954 = vunpack.c.l.b16 %v1841
        %v1955 = vunpack.c.h.b16 %v1841
        %v1956 = vunpack.c.l.b16 %v1842
        %v1957 = vunpack.c.h.b16 %v1842
        %v1958 = vunpack.c.l.b16 %v1843
        %v1959 = vunpack.c.h.b16 %v1843
        %v1960 = vunpack.c.l.b16 %v1844
        %v1961 = vunpack.c.h.b16 %v1844
        %v1962 = vunpack.c.l.b16 %v1845
        %v1963 = vunpack.c.h.b16 %v1845
        %v1964 = vunpack.c.l.b16 %v1846
        %v1965 = vunpack.c.h.b16 %v1846
        %v1966 = vunpack.c.l.b16 %v1847
        %v1967 = vunpack.c.h.b16 %v1847
        %v1968 = vunpack.c.l.b16 %v1848
        %v1969 = vunpack.c.h.b16 %v1848
        %v1970 = vunpack.c.l.b16 %v1849
        %v1971 = vunpack.c.h.b16 %v1849
        %v1972 = vunpack.c.l.b16 %v1850
        %v1973 = vunpack.c.h.b16 %v1850
        %v1974 = vunpack.c.l.b16 %v1851
        %v1975 = vunpack.c.h.b16 %v1851
        %v1976 = vunpack.c.l.b16 %v1852
        %v1977 = vunpack.c.h.b16 %v1852
        %v1978 = vunpack.c.l.b16 %v1853
        %v1979 = vunpack.c.h.b16 %v1853
        %v1980 = vunpack.c.l.b16 %v1854
        %v1981 = vunpack.c.h.b16 %v1854
        %v1982 = vunpack.c.l.b16 %v1855
        %v1983 = vunpack.c.h.b16 %v1855
        %v1984 = vunpack.c.l.b16 %v1856
        %v1985 = vunpack.c.h.b16 %v1856
        %v1986 = vunpack.c.l.b16 %v1857
        %v1987 = vunpack.c.h.b16 %v1857
        %v1988 = vunpack.c.l.b16 %v1858
        %v1989 = vunpack.c.h.b16 %v1858
        %v1990 = vunpack.c.l.b16 %v1859
        %v1991 = vunpack.c.h.b16 %v1859
        %v1992 = vunpack.c.l.b16 %v1860
        %v1993 = vunpack.c.h.b16 %v1860
        %v1994 = vunpack.c.l.b16 %v1861
        %v1995 = vunpack.c.h.b16 %v1861
        %v1996 = vunpack.c.l.b16 %v1862
        %v1997 = vunpack.c.h.b16 %v1862
        %v1998 = vunpack.c.l.b16 %v1863
        %v1999 = vunpack.c.h.b16 %v1863
        %v2000 = vunpack.c.l.b16 %v1864
        %v2001 = vunpack.c.h.b16 %v1864
        %v2002 = vunpack.c.l.b16 %v1865
        %v2003 = vunpack.c.h.b16 %v1865
        %v2004 = vunpack.c.l.b16 %v1866
        %v2005 = vunpack.c.h.b16 %v1866
        %v2006 = vunpack.c.l.b16 %v1867
        %v2007 = vunpack.c.h.b16 %v1867
        %v2008 = vunpack.c.l.b16 %v1868
        %v2009 = vunpack.c.h.b16 %v1868
        %v2010 = vpack.c.b16 %v1948, %v1946
        %v2011 = vpack.c.b16 %v1949, %v1947
        %v2012 = vpack.c.b16 %v1952, %v1950
        %v2013 = vpack.c.b16 %v1953, %v1951
        %v2014 = vpack.c.b16 %v1956, %v1954
        %v2015 = vpack.c.b16 %v1957, %v1955
        %v2016 = vpack.c.b16 %v1960, %v1958
        %v2017 = vpack.c.b16 %v1961, %v1959
        %v2018 = vpack.c.b16 %v1964, %v1962
        %v2019 = vpack.c.b16 %v1965, %v1963
        %v2020 = vpack.c.b16 %v1968, %v1966
        %v2021 = vpack.c.b16 %v1969, %v1967
        %v2022 = vpack.c.b16 %v1972, %v1970
        %v2023 = vpack.c.b16 %v1973, %v1971
        %v2024 = vpack.c.b16 %v1976, %v1974
        %v2025 = vpack.c.b16 %v1977, %v1975
        %v2026 = vpack.c.b16 %v1980, %v1978
        %v2027 = vpack.c.b16 %v1981, %v1979
        %v2028 = vpack.c.b16 %v1984, %v1982
        %v2029 = vpack.c.b16 %v1985, %v1983
        %v2030 = vpack.c.b16 %v1988, %v1986
        %v2031 = vpack.c.b16 %v1989, %v1987
        %v2032 = vpack.c.b16 %v1992, %v1990
        %v2033 = vpack.c.b16 %v1993, %v1991
        %v2034 = vpack.c.b16 %v1996, %v1994
        %v2035 = vpack.c.b16 %v1997, %v1995
        %v2036 = vpack.c.b16 %v2000, %v1998
        %v2037 = vpack.c.b16 %v2001, %v1999
        %v2038 = vpack.c.b16 %v2004, %v2002
        %v2039 = vpack.c.b16 %v2005, %v2003
        %v2040 = vpack.c.b16 %v2008, %v2006
        %v2041 = vpack.c.b16 %v2009, %v2007
        %2074 = vmatprep.subr.bf16.mxu0 %v2025
        %2075 = vmatpush1.bf16.msra.mxu0 %v2024
        %2076 = vmatprep.subr.bf16.mxu0 %v2023
        %2077 = vmatpush1.bf16.msra.mxu0 %v2022
        %2078 = vmatprep.subr.bf16.mxu0 %v2021
        %2079 = vmatpush1.bf16.msra.mxu0 %v2020
        %2080 = vmatprep.subr.bf16.mxu0 %v2019
        %2081 = vmatpush1.bf16.msra.mxu0 %v2018
        %2082 = vmatprep.subr.bf16.mxu0 %v2017
        %2083 = vmatpush1.bf16.msra.mxu0 %v2016
        %2084 = vmatprep.subr.bf16.mxu0 %v2015
        %2085 = vmatpush1.bf16.msra.mxu0 %v2014
        %2086 = vmatprep.subr.bf16.mxu0 %v2013
        %2087 = vmatpush1.bf16.msra.mxu0 %v2012
        %2088 = vmatprep.subr.bf16.mxu0 %v2011
        %2089 = vmatpush1.bf16.msra.mxu0 %v2010
        %2090 = vmatprep.subr.bf16.mxu0 %v2041
        %2091 = vmatpush2.bf16.msra.mxu0 %v2040
        %2092 = vmatprep.subr.bf16.mxu0 %v2039
        %2093 = vmatpush2.bf16.msra.mxu0 %v2038
        %2094 = vmatprep.subr.bf16.mxu0 %v2037
        %2095 = vmatpush2.bf16.msra.mxu0 %v2036
        %2096 = vmatprep.subr.bf16.mxu0 %v2035
        %2097 = vmatpush2.bf16.msra.mxu0 %v2034
        %2098 = vmatprep.subr.bf16.mxu0 %v2033
        %2099 = vmatpush2.bf16.msra.mxu0 %v2032
        %2100 = vmatprep.subr.bf16.mxu0 %v2031
        %2101 = vmatpush2.bf16.msra.mxu0 %v2030
        %2102 = vmatprep.subr.bf16.mxu0 %v2029
        %2103 = vmatpush2.bf16.msra.mxu0 %v2028
        %2104 = vmatprep.subr.bf16.mxu0 %v2027
        %2105 = vmatpush2.bf16.msra.mxu0 %v2026
        %2106 = vmatprep.mubr.bf16.mxu0 %v1893
        %2107 = vmatmul.mubr.bf16.gmra.mxu0 %v1881
        %v2108 = vpop.f32.mrf.mxu0
        %v2109 = vadd.f32 0.0, %v2108
        %v2110 = vpop.f32.mrf.mxu0
        %v2111 = vadd.f32 0.0, %v2110
        %v2112 = vpop.f32.mrf.mxu0
        %v2113 = vadd.f32 0.0, %v2112
        %v2114 = vpop.f32.mrf.mxu0
        %v2115 = vadd.f32 0.0, %v2114
        %2116 = vmatprep.mubr.bf16.mxu0 %v1909
        %2117 = vmatmul.mubr.bf16.gmra.mxu0 %v1901
        %v2118 = vpop.f32.mrf.mxu0
        %v2119 = vadd.f32 0.0, %v2118
        %v2120 = vpop.f32.mrf.mxu0
        %v2121 = vadd.f32 0.0, %v2120
        %v2122 = vpop.f32.mrf.mxu0
        %v2123 = vadd.f32 0.0, %v2122
        %v2124 = vpop.f32.mrf.mxu0
        %v2125 = vadd.f32 0.0, %v2124
        %2126 = vdwg.mxu0
        %v2159 = vunpack.c.l.b16 %v1804
        %v2160 = vunpack.c.h.b16 %v1804
        %v2161 = vunpack.c.l.b16 %v1805
        %v2162 = vunpack.c.h.b16 %v1805
        %v2163 = vunpack.c.l.b16 %v1806
        %v2164 = vunpack.c.h.b16 %v1806
        %v2165 = vunpack.c.l.b16 %v1807
        %v2166 = vunpack.c.h.b16 %v1807
        %v2167 = vunpack.c.l.b16 %v1808
        %v2168 = vunpack.c.h.b16 %v1808
        %v2169 = vunpack.c.l.b16 %v1809
        %v2170 = vunpack.c.h.b16 %v1809
        %v2171 = vunpack.c.l.b16 %v1810
        %v2172 = vunpack.c.h.b16 %v1810
        %v2173 = vunpack.c.l.b16 %v1811
        %v2174 = vunpack.c.h.b16 %v1811
        %v2175 = vunpack.c.l.b16 %v1812
        %v2176 = vunpack.c.h.b16 %v1812
        %v2177 = vunpack.c.l.b16 %v1813
        %v2178 = vunpack.c.h.b16 %v1813
        %v2179 = vunpack.c.l.b16 %v1814
        %v2180 = vunpack.c.h.b16 %v1814
        %v2181 = vunpack.c.l.b16 %v1815
        %v2182 = vunpack.c.h.b16 %v1815
        %v2183 = vunpack.c.l.b16 %v1816
        %v2184 = vunpack.c.h.b16 %v1816
        %v2185 = vunpack.c.l.b16 %v1817
        %v2186 = vunpack.c.h.b16 %v1817
        %v2187 = vunpack.c.l.b16 %v1818
        %v2188 = vunpack.c.h.b16 %v1818
        %v2189 = vunpack.c.l.b16 %v1819
        %v2190 = vunpack.c.h.b16 %v1819
        %v2191 = vunpack.c.l.b16 %v1820
        %v2192 = vunpack.c.h.b16 %v1820
        %v2193 = vunpack.c.l.b16 %v1821
        %v2194 = vunpack.c.h.b16 %v1821
        %v2195 = vunpack.c.l.b16 %v1822
        %v2196 = vunpack.c.h.b16 %v1822
        %v2197 = vunpack.c.l.b16 %v1823
        %v2198 = vunpack.c.h.b16 %v1823
        %v2199 = vunpack.c.l.b16 %v1824
        %v2200 = vunpack.c.h.b16 %v1824
        %v2201 = vunpack.c.l.b16 %v1825
        %v2202 = vunpack.c.h.b16 %v1825
        %v2203 = vunpack.c.l.b16 %v1826
        %v2204 = vunpack.c.h.b16 %v1826
        %v2205 = vunpack.c.l.b16 %v1827
        %v2206 = vunpack.c.h.b16 %v1827
        %v2207 = vunpack.c.l.b16 %v1828
        %v2208 = vunpack.c.h.b16 %v1828
        %v2209 = vunpack.c.l.b16 %v1829
        %v2210 = vunpack.c.h.b16 %v1829
        %v2211 = vunpack.c.l.b16 %v1830
        %v2212 = vunpack.c.h.b16 %v1830
        %v2213 = vunpack.c.l.b16 %v1831
        %v2214 = vunpack.c.h.b16 %v1831
        %v2215 = vunpack.c.l.b16 %v1832
        %v2216 = vunpack.c.h.b16 %v1832
        %v2217 = vunpack.c.l.b16 %v1833
        %v2218 = vunpack.c.h.b16 %v1833
        %v2219 = vunpack.c.l.b16 %v1834
        %v2220 = vunpack.c.h.b16 %v1834
        %v2221 = vunpack.c.l.b16 %v1835
        %v2222 = vunpack.c.h.b16 %v1835
        %v2223 = vpack.c.b16 %v2161, %v2159
        %v2224 = vpack.c.b16 %v2162, %v2160
        %v2225 = vpack.c.b16 %v2165, %v2163
        %v2226 = vpack.c.b16 %v2166, %v2164
        %v2227 = vpack.c.b16 %v2169, %v2167
        %v2228 = vpack.c.b16 %v2170, %v2168
        %v2229 = vpack.c.b16 %v2173, %v2171
        %v2230 = vpack.c.b16 %v2174, %v2172
        %v2231 = vpack.c.b16 %v2177, %v2175
        %v2232 = vpack.c.b16 %v2178, %v2176
        %v2233 = vpack.c.b16 %v2181, %v2179
        %v2234 = vpack.c.b16 %v2182, %v2180
        %v2235 = vpack.c.b16 %v2185, %v2183
        %v2236 = vpack.c.b16 %v2186, %v2184
        %v2237 = vpack.c.b16 %v2189, %v2187
        %v2238 = vpack.c.b16 %v2190, %v2188
        %v2239 = vpack.c.b16 %v2193, %v2191
        %v2240 = vpack.c.b16 %v2194, %v2192
        %v2241 = vpack.c.b16 %v2197, %v2195
        %v2242 = vpack.c.b16 %v2198, %v2196
        %v2243 = vpack.c.b16 %v2201, %v2199
        %v2244 = vpack.c.b16 %v2202, %v2200
        %v2245 = vpack.c.b16 %v2205, %v2203
        %v2246 = vpack.c.b16 %v2206, %v2204
        %v2247 = vpack.c.b16 %v2209, %v2207
        %v2248 = vpack.c.b16 %v2210, %v2208
        %v2249 = vpack.c.b16 %v2213, %v2211
        %v2250 = vpack.c.b16 %v2214, %v2212
        %v2251 = vpack.c.b16 %v2217, %v2215
        %v2252 = vpack.c.b16 %v2218, %v2216
        %v2253 = vpack.c.b16 %v2221, %v2219
        %v2254 = vpack.c.b16 %v2222, %v2220
        %2287 = vmatprep.subr.bf16.mxu0 %v2238
        %2288 = vmatpush1.bf16.msra.mxu0 %v2237
        %2289 = vmatprep.subr.bf16.mxu0 %v2236
        %2290 = vmatpush1.bf16.msra.mxu0 %v2235
        %2291 = vmatprep.subr.bf16.mxu0 %v2234
        %2292 = vmatpush1.bf16.msra.mxu0 %v2233
        %2293 = vmatprep.subr.bf16.mxu0 %v2232
        %2294 = vmatpush1.bf16.msra.mxu0 %v2231
        %2295 = vmatprep.subr.bf16.mxu0 %v2230
        %2296 = vmatpush1.bf16.msra.mxu0 %v2229
        %2297 = vmatprep.subr.bf16.mxu0 %v2228
        %2298 = vmatpush1.bf16.msra.mxu0 %v2227
        %2299 = vmatprep.subr.bf16.mxu0 %v2226
        %2300 = vmatpush1.bf16.msra.mxu0 %v2225
        %2301 = vmatprep.subr.bf16.mxu0 %v2224
        %2302 = vmatpush1.bf16.msra.mxu0 %v2223
        %2303 = vmatprep.subr.bf16.mxu0 %v2254
        %2304 = vmatpush2.bf16.msra.mxu0 %v2253
        %2305 = vmatprep.subr.bf16.mxu0 %v2252
        %2306 = vmatpush2.bf16.msra.mxu0 %v2251
        %2307 = vmatprep.subr.bf16.mxu0 %v2250
        %2308 = vmatpush2.bf16.msra.mxu0 %v2249
        %2309 = vmatprep.subr.bf16.mxu0 %v2248
        %2310 = vmatpush2.bf16.msra.mxu0 %v2247
        %2311 = vmatprep.subr.bf16.mxu0 %v2246
        %2312 = vmatpush2.bf16.msra.mxu0 %v2245
        %2313 = vmatprep.subr.bf16.mxu0 %v2244
        %2314 = vmatpush2.bf16.msra.mxu0 %v2243
        %2315 = vmatprep.subr.bf16.mxu0 %v2242
        %2316 = vmatpush2.bf16.msra.mxu0 %v2241
        %2317 = vmatprep.subr.bf16.mxu0 %v2240
        %2318 = vmatpush2.bf16.msra.mxu0 %v2239
        %2319 = vmatprep.mubr.bf16.mxu0 %v1801
        %2320 = vmatmul.mubr.bf16.gmra.mxu0 %v1800
        %v2321 = vpop.f32.mrf.mxu0
        %v2322 = vadd.f32 %v2109, %v2321
        %v2323 = vpop.f32.mrf.mxu0
        %v2324 = vadd.f32 %v2111, %v2323
        %v2325 = vpop.f32.mrf.mxu0
        %v2326 = vadd.f32 %v2113, %v2325
        %v2327 = vpop.f32.mrf.mxu0
        %v2328 = vadd.f32 %v2115, %v2327
        %2329 = vmatprep.mubr.bf16.mxu0 %v1791
        %2330 = vmatmul.mubr.bf16.gmra.mxu0 %v1783
        %v2331 = vpop.f32.mrf.mxu0
        %v2332 = vadd.f32 %v2119, %v2331
        %v2333 = vpop.f32.mrf.mxu0
        %v2334 = vadd.f32 %v2121, %v2333
        %v2335 = vpop.f32.mrf.mxu0
        %v2336 = vadd.f32 %v2123, %v2335
        %v2337 = vpop.f32.mrf.mxu0
        %v2338 = vadd.f32 %v2125, %v2337
        %2339 = vdwg.mxu0
        %s2340 = scalar_lea.vmem %s4, 512
        %v2341 = vld [vmem:[%s2340] sm:$0xff]
        %v2342 = vld [vmem:[%s2340 + $0x8] sm:$0xff]
        %v2343 = vld [vmem:[%s2340 + $0x10] sm:$0xff]
        %v2344 = vld [vmem:[%s2340 + $0x18] sm:$0xff]
        %v2345 = vld [vmem:[%s2340 + $0x20] sm:$0xff]
        %v2346 = vld [vmem:[%s2340 + $0x28] sm:$0xff]
        %v2347 = vld [vmem:[%s2340 + $0x30] sm:$0xff]
        %v2348 = vld [vmem:[%s2340 + $0x38] sm:$0xff]
        %v2349 = vld [vmem:[%s2340 + $0x40] sm:$0xff]
        %v2350 = vld [vmem:[%s2340 + $0x48] sm:$0xff]
        %v2351 = vld [vmem:[%s2340 + $0x50] sm:$0xff]
        %v2352 = vld [vmem:[%s2340 + $0x58] sm:$0xff]
        %v2353 = vld [vmem:[%s2340 + $0x60] sm:$0xff]
        %v2354 = vld [vmem:[%s2340 + $0x68] sm:$0xff]
        %v2355 = vld [vmem:[%s2340 + $0x70] sm:$0xff]
        %v2356 = vld [vmem:[%s2340 + $0x78] sm:$0xff]
        %v2357 = vld [vmem:[%s2340 + $0x80] sm:$0xff]
        %v2358 = vld [vmem:[%s2340 + $0x88] sm:$0xff]
        %v2359 = vld [vmem:[%s2340 + $0x90] sm:$0xff]
        %v2360 = vld [vmem:[%s2340 + $0x98] sm:$0xff]
        %v2361 = vld [vmem:[%s2340 + $0xa0] sm:$0xff]
        %v2362 = vld [vmem:[%s2340 + $0xa8] sm:$0xff]
        %v2363 = vld [vmem:[%s2340 + $0xb0] sm:$0xff]
        %v2364 = vld [vmem:[%s2340 + $0xb8] sm:$0xff]
        %v2365 = vld [vmem:[%s2340 + $0xc0] sm:$0xff]
        %v2366 = vld [vmem:[%s2340 + $0xc8] sm:$0xff]
        %v2367 = vld [vmem:[%s2340 + $0xd0] sm:$0xff]
        %v2368 = vld [vmem:[%s2340 + $0xd8] sm:$0xff]
        %v2369 = vld [vmem:[%s2340 + $0xe0] sm:$0xff]
        %v2370 = vld [vmem:[%s2340 + $0xe8] sm:$0xff]
        %v2371 = vld [vmem:[%s2340 + $0xf0] sm:$0xff]
        %v2372 = vld [vmem:[%s2340 + $0xf8] sm:$0xff]
        %vm2377 = vcmask 1046528
        %v2378 = vrot.slane %v1800, 1
        %v2379 = vrot.slane %v1783, 1
        %v2380 = vsel %vm2377, %v2378, %v2379
        %v2381 = vrot.slane %v1801, 1
        %v2382 = vrot.slane %v1791, 1
        %v2383 = vsel %vm2377, %v2381, %v2382
        %v2384 = vrot.slane %v1802, 1
        %v2385 = vsel %vm2377, %v2379, %v2384
        %v2386 = vrot.slane %v1803, 1
        %v2387 = vsel %vm2377, %v2382, %v2386
        %v2424 = vunpack.c.l.b16 %v2341
        %v2425 = vunpack.c.h.b16 %v2341
        %v2426 = vunpack.c.l.b16 %v2342
        %v2427 = vunpack.c.h.b16 %v2342
        %v2428 = vunpack.c.l.b16 %v2343
        %v2429 = vunpack.c.h.b16 %v2343
        %v2430 = vunpack.c.l.b16 %v2344
        %v2431 = vunpack.c.h.b16 %v2344
        %v2432 = vunpack.c.l.b16 %v2345
        %v2433 = vunpack.c.h.b16 %v2345
        %v2434 = vunpack.c.l.b16 %v2346
        %v2435 = vunpack.c.h.b16 %v2346
        %v2436 = vunpack.c.l.b16 %v2347
        %v2437 = vunpack.c.h.b16 %v2347
        %v2438 = vunpack.c.l.b16 %v2348
        %v2439 = vunpack.c.h.b16 %v2348
        %v2440 = vunpack.c.l.b16 %v2349
        %v2441 = vunpack.c.h.b16 %v2349
        %v2442 = vunpack.c.l.b16 %v2350
        %v2443 = vunpack.c.h.b16 %v2350
        %v2444 = vunpack.c.l.b16 %v2351
        %v2445 = vunpack.c.h.b16 %v2351
        %v2446 = vunpack.c.l.b16 %v2352
        %v2447 = vunpack.c.h.b16 %v2352
        %v2448 = vunpack.c.l.b16 %v2353
        %v2449 = vunpack.c.h.b16 %v2353
        %v2450 = vunpack.c.l.b16 %v2354
        %v2451 = vunpack.c.h.b16 %v2354
        %v2452 = vunpack.c.l.b16 %v2355
        %v2453 = vunpack.c.h.b16 %v2355
        %v2454 = vunpack.c.l.b16 %v2356
        %v2455 = vunpack.c.h.b16 %v2356
        %v2456 = vunpack.c.l.b16 %v2357
        %v2457 = vunpack.c.h.b16 %v2357
        %v2458 = vunpack.c.l.b16 %v2358
        %v2459 = vunpack.c.h.b16 %v2358
        %v2460 = vunpack.c.l.b16 %v2359
        %v2461 = vunpack.c.h.b16 %v2359
        %v2462 = vunpack.c.l.b16 %v2360
        %v2463 = vunpack.c.h.b16 %v2360
        %v2464 = vunpack.c.l.b16 %v2361
        %v2465 = vunpack.c.h.b16 %v2361
        %v2466 = vunpack.c.l.b16 %v2362
        %v2467 = vunpack.c.h.b16 %v2362
        %v2468 = vunpack.c.l.b16 %v2363
        %v2469 = vunpack.c.h.b16 %v2363
        %v2470 = vunpack.c.l.b16 %v2364
        %v2471 = vunpack.c.h.b16 %v2364
        %v2472 = vunpack.c.l.b16 %v2365
        %v2473 = vunpack.c.h.b16 %v2365
        %v2474 = vunpack.c.l.b16 %v2366
        %v2475 = vunpack.c.h.b16 %v2366
        %v2476 = vunpack.c.l.b16 %v2367
        %v2477 = vunpack.c.h.b16 %v2367
        %v2478 = vunpack.c.l.b16 %v2368
        %v2479 = vunpack.c.h.b16 %v2368
        %v2480 = vunpack.c.l.b16 %v2369
        %v2481 = vunpack.c.h.b16 %v2369
        %v2482 = vunpack.c.l.b16 %v2370
        %v2483 = vunpack.c.h.b16 %v2370
        %v2484 = vunpack.c.l.b16 %v2371
        %v2485 = vunpack.c.h.b16 %v2371
        %v2486 = vunpack.c.l.b16 %v2372
        %v2487 = vunpack.c.h.b16 %v2372
        %v2488 = vpack.c.b16 %v2426, %v2424
        %v2489 = vpack.c.b16 %v2427, %v2425
        %v2490 = vpack.c.b16 %v2430, %v2428
        %v2491 = vpack.c.b16 %v2431, %v2429
        %v2492 = vpack.c.b16 %v2434, %v2432
        %v2493 = vpack.c.b16 %v2435, %v2433
        %v2494 = vpack.c.b16 %v2438, %v2436
        %v2495 = vpack.c.b16 %v2439, %v2437
        %v2496 = vpack.c.b16 %v2442, %v2440
        %v2497 = vpack.c.b16 %v2443, %v2441
        %v2498 = vpack.c.b16 %v2446, %v2444
        %v2499 = vpack.c.b16 %v2447, %v2445
        %v2500 = vpack.c.b16 %v2450, %v2448
        %v2501 = vpack.c.b16 %v2451, %v2449
        %v2502 = vpack.c.b16 %v2454, %v2452
        %v2503 = vpack.c.b16 %v2455, %v2453
        %v2504 = vpack.c.b16 %v2458, %v2456
        %v2505 = vpack.c.b16 %v2459, %v2457
        %v2506 = vpack.c.b16 %v2462, %v2460
        %v2507 = vpack.c.b16 %v2463, %v2461
        %v2508 = vpack.c.b16 %v2466, %v2464
        %v2509 = vpack.c.b16 %v2467, %v2465
        %v2510 = vpack.c.b16 %v2470, %v2468
        %v2511 = vpack.c.b16 %v2471, %v2469
        %v2512 = vpack.c.b16 %v2474, %v2472
        %v2513 = vpack.c.b16 %v2475, %v2473
        %v2514 = vpack.c.b16 %v2478, %v2476
        %v2515 = vpack.c.b16 %v2479, %v2477
        %v2516 = vpack.c.b16 %v2482, %v2480
        %v2517 = vpack.c.b16 %v2483, %v2481
        %v2518 = vpack.c.b16 %v2486, %v2484
        %v2519 = vpack.c.b16 %v2487, %v2485
        %2552 = vmatprep.subr.bf16.mxu0 %v2503
        %2553 = vmatpush1.bf16.msra.mxu0 %v2502
        %2554 = vmatprep.subr.bf16.mxu0 %v2501
        %2555 = vmatpush1.bf16.msra.mxu0 %v2500
        %2556 = vmatprep.subr.bf16.mxu0 %v2499
        %2557 = vmatpush1.bf16.msra.mxu0 %v2498
        %2558 = vmatprep.subr.bf16.mxu0 %v2497
        %2559 = vmatpush1.bf16.msra.mxu0 %v2496
        %2560 = vmatprep.subr.bf16.mxu0 %v2495
        %2561 = vmatpush1.bf16.msra.mxu0 %v2494
        %2562 = vmatprep.subr.bf16.mxu0 %v2493
        %2563 = vmatpush1.bf16.msra.mxu0 %v2492
        %2564 = vmatprep.subr.bf16.mxu0 %v2491
        %2565 = vmatpush1.bf16.msra.mxu0 %v2490
        %2566 = vmatprep.subr.bf16.mxu0 %v2489
        %2567 = vmatpush1.bf16.msra.mxu0 %v2488
        %2568 = vmatprep.subr.bf16.mxu0 %v2519
        %2569 = vmatpush2.bf16.msra.mxu0 %v2518
        %2570 = vmatprep.subr.bf16.mxu0 %v2517
        %2571 = vmatpush2.bf16.msra.mxu0 %v2516
        %2572 = vmatprep.subr.bf16.mxu0 %v2515
        %2573 = vmatpush2.bf16.msra.mxu0 %v2514
        %2574 = vmatprep.subr.bf16.mxu0 %v2513
        %2575 = vmatpush2.bf16.msra.mxu0 %v2512
        %2576 = vmatprep.subr.bf16.mxu0 %v2511
        %2577 = vmatpush2.bf16.msra.mxu0 %v2510
        %2578 = vmatprep.subr.bf16.mxu0 %v2509
        %2579 = vmatpush2.bf16.msra.mxu0 %v2508
        %2580 = vmatprep.subr.bf16.mxu0 %v2507
        %2581 = vmatpush2.bf16.msra.mxu0 %v2506
        %2582 = vmatprep.subr.bf16.mxu0 %v2505
        %2583 = vmatpush2.bf16.msra.mxu0 %v2504
        %2584 = vmatprep.mubr.bf16.mxu0 %v2383
        %2585 = vmatmul.mubr.bf16.gmra.mxu0 %v2380
        %v2586 = vpop.f32.mrf.mxu0
        %v2587 = vadd.f32 0.0, %v2586
        %v2588 = vpop.f32.mrf.mxu0
        %v2589 = vadd.f32 0.0, %v2588
        %v2590 = vpop.f32.mrf.mxu0
        %v2591 = vadd.f32 0.0, %v2590
        %v2592 = vpop.f32.mrf.mxu0
        %v2593 = vadd.f32 0.0, %v2592
        %2594 = vmatprep.mubr.bf16.mxu0 %v2387
        %2595 = vmatmul.mubr.bf16.gmra.mxu0 %v2385
        %v2596 = vpop.f32.mrf.mxu0
        %v2597 = vadd.f32 0.0, %v2596
        %v2598 = vpop.f32.mrf.mxu0
        %v2599 = vadd.f32 0.0, %v2598
        %v2600 = vpop.f32.mrf.mxu0
        %v2601 = vadd.f32 0.0, %v2600
        %v2602 = vpop.f32.mrf.mxu0
        %v2603 = vadd.f32 0.0, %v2602
        %2604 = vdwg.mxu0
        %v2605 = vadd.f32 %v2322, %v2587
        %v2606 = vadd.f32 %v2324, %v2589
        %v2607 = vadd.f32 %v2326, %v2591
        %v2608 = vadd.f32 %v2328, %v2593
        %v2609 = vadd.f32 %v2332, %v2597
        %v2610 = vadd.f32 %v2334, %v2599
        %v2611 = vadd.f32 %v2336, %v2601
        %v2612 = vadd.f32 %v2338, %v2603
        %v2613 = vld [vmem:[#allocation7] sm:$0x3]
        %v2615 = vlaneseq
        %v2616 = vshrl.u32 %v2615, 7
        %v2617 = vsub.s32 0, %v2616
        %v2618 = vrot.slane %v2613, %v2617
        %v2619 = vlaneseq
        %v2620 = vshrl.u32 %v2619, 7
        %v2621 = vsub.s32 1, %v2620
        %v2622 = vrot.slane %v2613, %v2621
        %v2625 = vadd.f32 %v2605, %v2618
        %v2626 = vadd.f32 %v2606, %v2622
        %v2627 = vadd.f32 %v2607, %v2618
        %v2628 = vadd.f32 %v2608, %v2622
        %v2629 = vadd.f32 %v2609, %v2618
        %v2630 = vadd.f32 %v2610, %v2622
        %v2631 = vadd.f32 %v2611, %v2618
        %v2632 = vadd.f32 %v2612, %v2622
        %v2633 = vmul.f32 %v2625, 0.5
        %v2634 = vmul.f32 %v2626, 0.5
        %v2635 = vmul.f32 %v2627, 0.5
        %v2636 = vmul.f32 %v2628, 0.5
        %v2637 = vmul.f32 %v2629, 0.5
        %v2638 = vmul.f32 %v2630, 0.5
        %v2639 = vmul.f32 %v2631, 0.5
        %v2640 = vmul.f32 %v2632, 0.5
        %v2641 = vmul.f32 %v2625, 0.70710677
        %v2642 = vmul.f32 %v2626, 0.70710677
        %v2643 = vmul.f32 %v2627, 0.70710677
        %v2644 = vmul.f32 %v2628, 0.70710677
        %v2645 = vmul.f32 %v2629, 0.70710677
        %v2646 = vmul.f32 %v2630, 0.70710677
        %v2647 = vmul.f32 %v2631, 0.70710677
        %v2648 = vmul.f32 %v2632, 0.70710677
        %v2649 = vand.u32 2147483647, %v2641
        %v2650 = vand.u32 2147483647, %v2642
        %v2651 = vand.u32 2147483647, %v2643
        %v2652 = vand.u32 2147483647, %v2644
        %v2653 = vand.u32 2147483647, %v2645
        %v2654 = vand.u32 2147483647, %v2646
        %v2655 = vand.u32 2147483647, %v2647
        %v2656 = vand.u32 2147483647, %v2648
        %v2657 = vmul.f32 %v2649, 0.3275911
        %v2658 = vmul.f32 %v2650, 0.3275911
        %v2659 = vmul.f32 %v2651, 0.3275911
        %v2660 = vmul.f32 %v2652, 0.3275911
        %v2661 = vmul.f32 %v2653, 0.3275911
        %v2662 = vmul.f32 %v2654, 0.3275911
        %v2663 = vmul.f32 %v2655, 0.3275911
        %v2664 = vmul.f32 %v2656, 0.3275911
        %v2665 = vadd.f32 %v2657, 1.0
        %v2666 = vadd.f32 %v2658, 1.0
        %v2667 = vadd.f32 %v2659, 1.0
        %v2668 = vadd.f32 %v2660, 1.0
        %v2669 = vadd.f32 %v2661, 1.0
        %v2670 = vadd.f32 %v2662, 1.0
        %v2671 = vadd.f32 %v2663, 1.0
        %v2672 = vadd.f32 %v2664, 1.0
        %v2673 = vrcp.pop %v2665
        %v2674 = vrcp.pop %v2666
        %v2675 = vrcp.pop %v2667
        %v2676 = vrcp.pop %v2668
        %v2677 = vrcp.pop %v2669
        %v2678 = vrcp.pop %v2670
        %v2679 = vrcp.pop %v2671
        %v2680 = vrcp.pop %v2672
        %v2681 = vmul.f32 %v2673, 1.0614054
        %v2682 = vmul.f32 %v2674, 1.0614054
        %v2683 = vmul.f32 %v2675, 1.0614054
        %v2684 = vmul.f32 %v2676, 1.0614054
        %v2685 = vmul.f32 %v2677, 1.0614054
        %v2686 = vmul.f32 %v2678, 1.0614054
        %v2687 = vmul.f32 %v2679, 1.0614054
        %v2688 = vmul.f32 %v2680, 1.0614054
        %v2689 = vadd.f32 %v2681, -1.4531521
        %v2690 = vadd.f32 %v2682, -1.4531521
        %v2691 = vadd.f32 %v2683, -1.4531521
        %v2692 = vadd.f32 %v2684, -1.4531521
        %v2693 = vadd.f32 %v2685, -1.4531521
        %v2694 = vadd.f32 %v2686, -1.4531521
        %v2695 = vadd.f32 %v2687, -1.4531521
        %v2696 = vadd.f32 %v2688, -1.4531521
        %v2697 = vmul.f32 %v2689, %v2673
        %v2698 = vmul.f32 %v2690, %v2674
        %v2699 = vmul.f32 %v2691, %v2675
        %v2700 = vmul.f32 %v2692, %v2676
        %v2701 = vmul.f32 %v2693, %v2677
        %v2702 = vmul.f32 %v2694, %v2678
        %v2703 = vmul.f32 %v2695, %v2679
        %v2704 = vmul.f32 %v2696, %v2680
        %v2705 = vadd.f32 %v2697, 1.4214138
        %v2706 = vadd.f32 %v2698, 1.4214138
        %v2707 = vadd.f32 %v2699, 1.4214138
        %v2708 = vadd.f32 %v2700, 1.4214138
        %v2709 = vadd.f32 %v2701, 1.4214138
        %v2710 = vadd.f32 %v2702, 1.4214138
        %v2711 = vadd.f32 %v2703, 1.4214138
        %v2712 = vadd.f32 %v2704, 1.4214138
        %v2713 = vmul.f32 %v2705, %v2673
        %v2714 = vmul.f32 %v2706, %v2674
        %v2715 = vmul.f32 %v2707, %v2675
        %v2716 = vmul.f32 %v2708, %v2676
        %v2717 = vmul.f32 %v2709, %v2677
        %v2718 = vmul.f32 %v2710, %v2678
        %v2719 = vmul.f32 %v2711, %v2679
        %v2720 = vmul.f32 %v2712, %v2680
        %v2721 = vadd.f32 %v2713, -0.28449672
        %v2722 = vadd.f32 %v2714, -0.28449672
        %v2723 = vadd.f32 %v2715, -0.28449672
        %v2724 = vadd.f32 %v2716, -0.28449672
        %v2725 = vadd.f32 %v2717, -0.28449672
        %v2726 = vadd.f32 %v2718, -0.28449672
        %v2727 = vadd.f32 %v2719, -0.28449672
        %v2728 = vadd.f32 %v2720, -0.28449672
        %v2729 = vmul.f32 %v2721, %v2673
        %v2730 = vmul.f32 %v2722, %v2674
        %v2731 = vmul.f32 %v2723, %v2675
        %v2732 = vmul.f32 %v2724, %v2676
        %v2733 = vmul.f32 %v2725, %v2677
        %v2734 = vmul.f32 %v2726, %v2678
        %v2735 = vmul.f32 %v2727, %v2679
        %v2736 = vmul.f32 %v2728, %v2680
        %v2737 = vadd.f32 %v2729, 0.2548296
        %v2738 = vadd.f32 %v2730, 0.2548296
        %v2739 = vadd.f32 %v2731, 0.2548296
        %v2740 = vadd.f32 %v2732, 0.2548296
        %v2741 = vadd.f32 %v2733, 0.2548296
        %v2742 = vadd.f32 %v2734, 0.2548296
        %v2743 = vadd.f32 %v2735, 0.2548296
        %v2744 = vadd.f32 %v2736, 0.2548296
        %v2745 = vmul.f32 %v2737, %v2673
        %v2746 = vmul.f32 %v2738, %v2674
        %v2747 = vmul.f32 %v2739, %v2675
        %v2748 = vmul.f32 %v2740, %v2676
        %v2749 = vmul.f32 %v2741, %v2677
        %v2750 = vmul.f32 %v2742, %v2678
        %v2751 = vmul.f32 %v2743, %v2679
        %v2752 = vmul.f32 %v2744, %v2680
        %v2753 = vsub.f32 0.0, %v2649
        %v2754 = vsub.f32 0.0, %v2650
        %v2755 = vsub.f32 0.0, %v2651
        %v2756 = vsub.f32 0.0, %v2652
        %v2757 = vsub.f32 0.0, %v2653
        %v2758 = vsub.f32 0.0, %v2654
        %v2759 = vsub.f32 0.0, %v2655
        %v2760 = vsub.f32 0.0, %v2656
        %v2761 = vmul.f32 %v2753, %v2649
        %v2762 = vmul.f32 %v2754, %v2650
        %v2763 = vmul.f32 %v2755, %v2651
        %v2764 = vmul.f32 %v2756, %v2652
        %v2765 = vmul.f32 %v2757, %v2653
        %v2766 = vmul.f32 %v2758, %v2654
        %v2767 = vmul.f32 %v2759, %v2655
        %v2768 = vmul.f32 %v2760, %v2656
        %v2769 = vmul.f32 %v2761, 1.442695
        %v2770 = vpow.pop %v2769
        %v2771 = vmul.f32 %v2762, 1.442695
        %v2772 = vpow.pop %v2771
        %v2773 = vmul.f32 %v2763, 1.442695
        %v2774 = vpow.pop %v2773
        %v2775 = vmul.f32 %v2764, 1.442695
        %v2776 = vpow.pop %v2775
        %v2777 = vmul.f32 %v2765, 1.442695
        %v2778 = vpow.pop %v2777
        %v2779 = vmul.f32 %v2766, 1.442695
        %v2780 = vpow.pop %v2779
        %v2781 = vmul.f32 %v2767, 1.442695
        %v2782 = vpow.pop %v2781
        %v2783 = vmul.f32 %v2768, 1.442695
        %v2784 = vpow.pop %v2783
        %v2785 = vmul.f32 %v2745, %v2770
        %v2786 = vmul.f32 %v2746, %v2772
        %v2787 = vmul.f32 %v2747, %v2774
        %v2788 = vmul.f32 %v2748, %v2776
        %v2789 = vmul.f32 %v2749, %v2778
        %v2790 = vmul.f32 %v2750, %v2780
        %v2791 = vmul.f32 %v2751, %v2782
        %v2792 = vmul.f32 %v2752, %v2784
        %v2793 = vsub.f32 1.0, %v2785
        %v2794 = vsub.f32 1.0, %v2786
        %v2795 = vsub.f32 1.0, %v2787
        %v2796 = vsub.f32 1.0, %v2788
        %v2797 = vsub.f32 1.0, %v2789
        %v2798 = vsub.f32 1.0, %v2790
        %v2799 = vsub.f32 1.0, %v2791
        %v2800 = vsub.f32 1.0, %v2792
        %vm2801 = vcmp.ge.f32.partialorder %v2641, 0.0
        %vm2802 = vcmp.ge.f32.partialorder %v2642, 0.0
        %vm2803 = vcmp.ge.f32.partialorder %v2643, 0.0
        %vm2804 = vcmp.ge.f32.partialorder %v2644, 0.0
        %vm2805 = vcmp.ge.f32.partialorder %v2645, 0.0
        %vm2806 = vcmp.ge.f32.partialorder %v2646, 0.0
        %vm2807 = vcmp.ge.f32.partialorder %v2647, 0.0
        %vm2808 = vcmp.ge.f32.partialorder %v2648, 0.0
        %v2809 = vsub.f32 0.0, %v2793
        %v2810 = vsub.f32 0.0, %v2794
        %v2811 = vsub.f32 0.0, %v2795
        %v2812 = vsub.f32 0.0, %v2796
        %v2813 = vsub.f32 0.0, %v2797
        %v2814 = vsub.f32 0.0, %v2798
        %v2815 = vsub.f32 0.0, %v2799
        %v2816 = vsub.f32 0.0, %v2800
        %v2817 = vsel %vm2801, %v2793, %v2809
        %v2818 = vsel %vm2802, %v2794, %v2810
        %v2819 = vsel %vm2803, %v2795, %v2811
        %v2820 = vsel %vm2804, %v2796, %v2812
        %v2821 = vsel %vm2805, %v2797, %v2813
        %v2822 = vsel %vm2806, %v2798, %v2814
        %v2823 = vsel %vm2807, %v2799, %v2815
        %v2824 = vsel %vm2808, %v2800, %v2816
        %v2825 = vadd.f32 %v2817, 1.0
        %v2826 = vadd.f32 %v2818, 1.0
        %v2827 = vadd.f32 %v2819, 1.0
        %v2828 = vadd.f32 %v2820, 1.0
        %v2829 = vadd.f32 %v2821, 1.0
        %v2830 = vadd.f32 %v2822, 1.0
        %v2831 = vadd.f32 %v2823, 1.0
        %v2832 = vadd.f32 %v2824, 1.0
        %v2833 = vmul.f32 %v2633, %v2825
        %v2834 = vmul.f32 %v2634, %v2826
        %v2835 = vmul.f32 %v2635, %v2827
        %v2836 = vmul.f32 %v2636, %v2828
        %v2837 = vmul.f32 %v2637, %v2829
        %v2838 = vmul.f32 %v2638, %v2830
        %v2839 = vmul.f32 %v2639, %v2831
        %v2840 = vmul.f32 %v2640, %v2832
        %v2841 = vpack.c.bf16 %v2835, %v2833
        %v2842 = vpack.c.bf16 %v2836, %v2834
        %v2843 = vpack.c.bf16 %v2839, %v2837
        %v2844 = vpack.c.bf16 %v2840, %v2838
        %v2845 = vld [vmem:[#allocation9] sm:$0xf]
        %v2846 = vld [vmem:[#allocation9 + $0x4] sm:$0xf]
        %v2849 = vunpack.c.l.b16 %v2845
        %v2850 = vunpack.c.l.b16 %v2846
        %v2851 = vpack.c.b16 %v2850, %v2849
        %vm2852 = vcmask 261120
        %v2854 = vsel %vm2852, %v2851, 0
        %2856 = vmatprep.subr.bf16.mxu0 0
        %2857 = vmatpush1.bf16.msra.mxu0 0
        %2858 = vmatprep.subr.bf16.mxu0 0
        %2859 = vmatpush1.bf16.msra.mxu0 0
        %2860 = vmatprep.subr.bf16.mxu0 0
        %2861 = vmatpush1.bf16.msra.mxu0 0
        %2862 = vmatprep.subr.bf16.mxu0 0
        %2863 = vmatpush1.bf16.msra.mxu0 0
        %2864 = vmatprep.subr.bf16.mxu0 0
        %2865 = vmatpush1.bf16.msra.mxu0 0
        %2866 = vmatprep.subr.bf16.mxu0 0
        %2867 = vmatpush1.bf16.msra.mxu0 0
        %2868 = vmatprep.subr.bf16.mxu0 %v2844
        %2869 = vmatpush1.bf16.msra.mxu0 %v2843
        %2870 = vmatprep.subr.bf16.mxu0 %v2842
        %2871 = vmatpush1.bf16.msra.mxu0 %v2841
        %2872 = vmatprep.subr.bf16.mxu0 0
        %2873 = vmatpush2.bf16.msra.mxu0 0
        %2874 = vmatprep.subr.bf16.mxu0 0
        %2875 = vmatpush2.bf16.msra.mxu0 0
        %2876 = vmatprep.subr.bf16.mxu0 0
        %2877 = vmatpush2.bf16.msra.mxu0 0
        %2878 = vmatprep.subr.bf16.mxu0 0
        %2879 = vmatpush2.bf16.msra.mxu0 0
        %2880 = vmatprep.subr.bf16.mxu0 0
        %2881 = vmatpush2.bf16.msra.mxu0 0
        %2882 = vmatprep.subr.bf16.mxu0 0
        %2883 = vmatpush2.bf16.msra.mxu0 0
        %2884 = vmatprep.subr.bf16.mxu0 0
        %2885 = vmatpush2.bf16.msra.mxu0 0
        %2886 = vmatprep.subr.bf16.mxu0 0
        %2887 = vmatpush2.bf16.msra.mxu0 0
        %2888 = vmatprep.mubr.bf16.mxu0 0
        %2889 = vmatmul.mubr.bf16.gmra.mxu0 %v2854
        %v2890 = vpop.f32.mrf.mxu0
        %v2891 = vadd.f32 0.0, %v2890
        %v2892 = vpop.f32.mrf.mxu0
        %v2893 = vadd.f32 0.0, %v2892
        %v2894 = vpop.f32.mrf.mxu0
        %v2895 = vadd.f32 0.0, %v2894
        %v2896 = vpop.f32.mrf.mxu0
        %v2897 = vadd.f32 0.0, %v2896
        %2898 = vdwg.mxu0
        %v2899 = vpack.c.bf16 %v2895, %v2891
        %v2900 = vpack.c.bf16 %v2897, %v2893
        %v2901 = vld [vmem:[%s7] sm:$0xff]
        %v2902 = vld [vmem:[%s7 + $0x8] sm:$0xff]
        %v2903 = vld [vmem:[%s7 + $0x10] sm:$0xff]
        %v2904 = vld [vmem:[%s7 + $0x18] sm:$0xff]
        %v2905 = vld [vmem:[%s7 + $0x20] sm:$0xff]
        %v2906 = vld [vmem:[%s7 + $0x28] sm:$0xff]
        %v2907 = vld [vmem:[%s7 + $0x30] sm:$0xff]
        %v2908 = vld [vmem:[%s7 + $0x38] sm:$0xff]
        %v2909 = vld [vmem:[%s7 + $0x40] sm:$0xff]
        %v2910 = vld [vmem:[%s7 + $0x48] sm:$0xff]
        %v2911 = vld [vmem:[%s7 + $0x50] sm:$0xff]
        %v2912 = vld [vmem:[%s7 + $0x58] sm:$0xff]
        %v2913 = vld [vmem:[%s7 + $0x60] sm:$0xff]
        %v2914 = vld [vmem:[%s7 + $0x68] sm:$0xff]
        %v2915 = vld [vmem:[%s7 + $0x70] sm:$0xff]
        %v2916 = vld [vmem:[%s7 + $0x78] sm:$0xff]
        %v2917 = vld [vmem:[%s7 + $0x80] sm:$0xff]
        %v2918 = vld [vmem:[%s7 + $0x88] sm:$0xff]
        %v2919 = vld [vmem:[%s7 + $0x90] sm:$0xff]
        %v2920 = vld [vmem:[%s7 + $0x98] sm:$0xff]
        %v2921 = vld [vmem:[%s7 + $0xa0] sm:$0xff]
        %v2922 = vld [vmem:[%s7 + $0xa8] sm:$0xff]
        %v2923 = vld [vmem:[%s7 + $0xb0] sm:$0xff]
        %v2924 = vld [vmem:[%s7 + $0xb8] sm:$0xff]
        %v2925 = vld [vmem:[%s7 + $0xc0] sm:$0xff]
        %v2926 = vld [vmem:[%s7 + $0xc8] sm:$0xff]
        %v2927 = vld [vmem:[%s7 + $0xd0] sm:$0xff]
        %v2928 = vld [vmem:[%s7 + $0xd8] sm:$0xff]
        %v2929 = vld [vmem:[%s7 + $0xe0] sm:$0xff]
        %v2930 = vld [vmem:[%s7 + $0xe8] sm:$0xff]
        %v2931 = vld [vmem:[%s7 + $0xf0] sm:$0xff]
        %v2932 = vld [vmem:[%s7 + $0xf8] sm:$0xff]
        %s2933 = scalar_lea.vmem [#allocation9], 8
        %v2934 = vld [vmem:[%s2933] sm:$0xf]
        %v2935 = vld [vmem:[%s2933 + $0x4] sm:$0xf]
        %v2938 = vunpack.c.l.b16 %v2934
        %v2939 = vunpack.c.l.b16 %v2935
        %v2940 = vpack.c.b16 %v2939, %v2938
        %v2942 = vsel %vm2852, %v2940, 0
        %2944 = vmatprep.subr.bf16.mxu0 0
        %2945 = vmatpush1.bf16.msra.mxu0 0
        %2946 = vmatprep.subr.bf16.mxu0 0
        %2947 = vmatpush1.bf16.msra.mxu0 0
        %2948 = vmatprep.subr.bf16.mxu0 0
        %2949 = vmatpush1.bf16.msra.mxu0 0
        %2950 = vmatprep.subr.bf16.mxu0 0
        %2951 = vmatpush1.bf16.msra.mxu0 0
        %2952 = vmatprep.subr.bf16.mxu0 0
        %2953 = vmatpush1.bf16.msra.mxu0 0
        %2954 = vmatprep.subr.bf16.mxu0 0
        %2955 = vmatpush1.bf16.msra.mxu0 0
        %2956 = vmatprep.subr.bf16.mxu0 %v2844
        %2957 = vmatpush1.bf16.msra.mxu0 %v2843
        %2958 = vmatprep.subr.bf16.mxu0 %v2842
        %2959 = vmatpush1.bf16.msra.mxu0 %v2841
        %2960 = vmatprep.subr.bf16.mxu0 0
        %2961 = vmatpush2.bf16.msra.mxu0 0
        %2962 = vmatprep.subr.bf16.mxu0 0
        %2963 = vmatpush2.bf16.msra.mxu0 0
        %2964 = vmatprep.subr.bf16.mxu0 0
        %2965 = vmatpush2.bf16.msra.mxu0 0
        %2966 = vmatprep.subr.bf16.mxu0 0
        %2967 = vmatpush2.bf16.msra.mxu0 0
        %2968 = vmatprep.subr.bf16.mxu0 0
        %2969 = vmatpush2.bf16.msra.mxu0 0
        %2970 = vmatprep.subr.bf16.mxu0 0
        %2971 = vmatpush2.bf16.msra.mxu0 0
        %2972 = vmatprep.subr.bf16.mxu0 0
        %2973 = vmatpush2.bf16.msra.mxu0 0
        %2974 = vmatprep.subr.bf16.mxu0 0
        %2975 = vmatpush2.bf16.msra.mxu0 0
        %2976 = vmatprep.mubr.bf16.mxu0 0
        %2977 = vmatmul.mubr.bf16.gmra.mxu0 %v2942
        %v2978 = vpop.f32.mrf.mxu0
        %v2979 = vadd.f32 0.0, %v2978
        %v2980 = vpop.f32.mrf.mxu0
        %v2981 = vadd.f32 0.0, %v2980
        %v2982 = vpop.f32.mrf.mxu0
        %v2983 = vadd.f32 0.0, %v2982
        %v2984 = vpop.f32.mrf.mxu0
        %v2985 = vadd.f32 0.0, %v2984
        %2986 = vdwg.mxu0
        %v2987 = vpack.c.bf16 %v2983, %v2979
        %v2988 = vpack.c.bf16 %v2985, %v2981
        %s2989 = scalar_lea.vmem %s7, 256
        %v2990 = vld [vmem:[%s2989] sm:$0xff]
        %v2991 = vld [vmem:[%s2989 + $0x8] sm:$0xff]
        %v2992 = vld [vmem:[%s2989 + $0x10] sm:$0xff]
        %v2993 = vld [vmem:[%s2989 + $0x18] sm:$0xff]
        %v2994 = vld [vmem:[%s2989 + $0x20] sm:$0xff]
        %v2995 = vld [vmem:[%s2989 + $0x28] sm:$0xff]
        %v2996 = vld [vmem:[%s2989 + $0x30] sm:$0xff]
        %v2997 = vld [vmem:[%s2989 + $0x38] sm:$0xff]
        %v2998 = vld [vmem:[%s2989 + $0x40] sm:$0xff]
        %v2999 = vld [vmem:[%s2989 + $0x48] sm:$0xff]
        %v3000 = vld [vmem:[%s2989 + $0x50] sm:$0xff]
        %v3001 = vld [vmem:[%s2989 + $0x58] sm:$0xff]
        %v3002 = vld [vmem:[%s2989 + $0x60] sm:$0xff]
        %v3003 = vld [vmem:[%s2989 + $0x68] sm:$0xff]
        %v3004 = vld [vmem:[%s2989 + $0x70] sm:$0xff]
        %v3005 = vld [vmem:[%s2989 + $0x78] sm:$0xff]
        %v3006 = vld [vmem:[%s2989 + $0x80] sm:$0xff]
        %v3007 = vld [vmem:[%s2989 + $0x88] sm:$0xff]
        %v3008 = vld [vmem:[%s2989 + $0x90] sm:$0xff]
        %v3009 = vld [vmem:[%s2989 + $0x98] sm:$0xff]
        %v3010 = vld [vmem:[%s2989 + $0xa0] sm:$0xff]
        %v3011 = vld [vmem:[%s2989 + $0xa8] sm:$0xff]
        %v3012 = vld [vmem:[%s2989 + $0xb0] sm:$0xff]
        %v3013 = vld [vmem:[%s2989 + $0xb8] sm:$0xff]
        %v3014 = vld [vmem:[%s2989 + $0xc0] sm:$0xff]
        %v3015 = vld [vmem:[%s2989 + $0xc8] sm:$0xff]
        %v3016 = vld [vmem:[%s2989 + $0xd0] sm:$0xff]
        %v3017 = vld [vmem:[%s2989 + $0xd8] sm:$0xff]
        %v3018 = vld [vmem:[%s2989 + $0xe0] sm:$0xff]
        %v3019 = vld [vmem:[%s2989 + $0xe8] sm:$0xff]
        %v3020 = vld [vmem:[%s2989 + $0xf0] sm:$0xff]
        %v3021 = vld [vmem:[%s2989 + $0xf8] sm:$0xff]
        %v3054 = vunpack.c.l.b16 %v2990
        %v3055 = vunpack.c.h.b16 %v2990
        %v3056 = vunpack.c.l.b16 %v2991
        %v3057 = vunpack.c.h.b16 %v2991
        %v3058 = vunpack.c.l.b16 %v2992
        %v3059 = vunpack.c.h.b16 %v2992
        %v3060 = vunpack.c.l.b16 %v2993
        %v3061 = vunpack.c.h.b16 %v2993
        %v3062 = vunpack.c.l.b16 %v2994
        %v3063 = vunpack.c.h.b16 %v2994
        %v3064 = vunpack.c.l.b16 %v2995
        %v3065 = vunpack.c.h.b16 %v2995
        %v3066 = vunpack.c.l.b16 %v2996
        %v3067 = vunpack.c.h.b16 %v2996
        %v3068 = vunpack.c.l.b16 %v2997
        %v3069 = vunpack.c.h.b16 %v2997
        %v3070 = vunpack.c.l.b16 %v2998
        %v3071 = vunpack.c.h.b16 %v2998
        %v3072 = vunpack.c.l.b16 %v2999
        %v3073 = vunpack.c.h.b16 %v2999
        %v3074 = vunpack.c.l.b16 %v3000
        %v3075 = vunpack.c.h.b16 %v3000
        %v3076 = vunpack.c.l.b16 %v3001
        %v3077 = vunpack.c.h.b16 %v3001
        %v3078 = vunpack.c.l.b16 %v3002
        %v3079 = vunpack.c.h.b16 %v3002
        %v3080 = vunpack.c.l.b16 %v3003
        %v3081 = vunpack.c.h.b16 %v3003
        %v3082 = vunpack.c.l.b16 %v3004
        %v3083 = vunpack.c.h.b16 %v3004
        %v3084 = vunpack.c.l.b16 %v3005
        %v3085 = vunpack.c.h.b16 %v3005
        %v3086 = vunpack.c.l.b16 %v3006
        %v3087 = vunpack.c.h.b16 %v3006
        %v3088 = vunpack.c.l.b16 %v3007
        %v3089 = vunpack.c.h.b16 %v3007
        %v3090 = vunpack.c.l.b16 %v3008
        %v3091 = vunpack.c.h.b16 %v3008
        %v3092 = vunpack.c.l.b16 %v3009
        %v3093 = vunpack.c.h.b16 %v3009
        %v3094 = vunpack.c.l.b16 %v3010
        %v3095 = vunpack.c.h.b16 %v3010
        %v3096 = vunpack.c.l.b16 %v3011
        %v3097 = vunpack.c.h.b16 %v3011
        %v3098 = vunpack.c.l.b16 %v3012
        %v3099 = vunpack.c.h.b16 %v3012
        %v3100 = vunpack.c.l.b16 %v3013
        %v3101 = vunpack.c.h.b16 %v3013
        %v3102 = vunpack.c.l.b16 %v3014
        %v3103 = vunpack.c.h.b16 %v3014
        %v3104 = vunpack.c.l.b16 %v3015
        %v3105 = vunpack.c.h.b16 %v3015
        %v3106 = vunpack.c.l.b16 %v3016
        %v3107 = vunpack.c.h.b16 %v3016
        %v3108 = vunpack.c.l.b16 %v3017
        %v3109 = vunpack.c.h.b16 %v3017
        %v3110 = vunpack.c.l.b16 %v3018
        %v3111 = vunpack.c.h.b16 %v3018
        %v3112 = vunpack.c.l.b16 %v3019
        %v3113 = vunpack.c.h.b16 %v3019
        %v3114 = vunpack.c.l.b16 %v3020
        %v3115 = vunpack.c.h.b16 %v3020
        %v3116 = vunpack.c.l.b16 %v3021
        %v3117 = vunpack.c.h.b16 %v3021
        %v3118 = vpack.c.b16 %v3056, %v3054
        %v3119 = vpack.c.b16 %v3057, %v3055
        %v3120 = vpack.c.b16 %v3060, %v3058
        %v3121 = vpack.c.b16 %v3061, %v3059
        %v3122 = vpack.c.b16 %v3064, %v3062
        %v3123 = vpack.c.b16 %v3065, %v3063
        %v3124 = vpack.c.b16 %v3068, %v3066
        %v3125 = vpack.c.b16 %v3069, %v3067
        %v3126 = vpack.c.b16 %v3072, %v3070
        %v3127 = vpack.c.b16 %v3073, %v3071
        %v3128 = vpack.c.b16 %v3076, %v3074
        %v3129 = vpack.c.b16 %v3077, %v3075
        %v3130 = vpack.c.b16 %v3080, %v3078
        %v3131 = vpack.c.b16 %v3081, %v3079
        %v3132 = vpack.c.b16 %v3084, %v3082
        %v3133 = vpack.c.b16 %v3085, %v3083
        %v3134 = vpack.c.b16 %v3088, %v3086
        %v3135 = vpack.c.b16 %v3089, %v3087
        %v3136 = vpack.c.b16 %v3092, %v3090
        %v3137 = vpack.c.b16 %v3093, %v3091
        %v3138 = vpack.c.b16 %v3096, %v3094
        %v3139 = vpack.c.b16 %v3097, %v3095
        %v3140 = vpack.c.b16 %v3100, %v3098
        %v3141 = vpack.c.b16 %v3101, %v3099
        %v3142 = vpack.c.b16 %v3104, %v3102
        %v3143 = vpack.c.b16 %v3105, %v3103
        %v3144 = vpack.c.b16 %v3108, %v3106
        %v3145 = vpack.c.b16 %v3109, %v3107
        %v3146 = vpack.c.b16 %v3112, %v3110
        %v3147 = vpack.c.b16 %v3113, %v3111
        %v3148 = vpack.c.b16 %v3116, %v3114
        %v3149 = vpack.c.b16 %v3117, %v3115
        %3182 = vmatprep.subr.bf16.mxu0 %v3133
        %3183 = vmatpush1.bf16.msra.mxu0 %v3132
        %3184 = vmatprep.subr.bf16.mxu0 %v3131
        %3185 = vmatpush1.bf16.msra.mxu0 %v3130
        %3186 = vmatprep.subr.bf16.mxu0 %v3129
        %3187 = vmatpush1.bf16.msra.mxu0 %v3128
        %3188 = vmatprep.subr.bf16.mxu0 %v3127
        %3189 = vmatpush1.bf16.msra.mxu0 %v3126
        %3190 = vmatprep.subr.bf16.mxu0 %v3125
        %3191 = vmatpush1.bf16.msra.mxu0 %v3124
        %3192 = vmatprep.subr.bf16.mxu0 %v3123
        %3193 = vmatpush1.bf16.msra.mxu0 %v3122
        %3194 = vmatprep.subr.bf16.mxu0 %v3121
        %3195 = vmatpush1.bf16.msra.mxu0 %v3120
        %3196 = vmatprep.subr.bf16.mxu0 %v3119
        %3197 = vmatpush1.bf16.msra.mxu0 %v3118
        %3198 = vmatprep.subr.bf16.mxu0 %v3149
        %3199 = vmatpush2.bf16.msra.mxu0 %v3148
        %3200 = vmatprep.subr.bf16.mxu0 %v3147
        %3201 = vmatpush2.bf16.msra.mxu0 %v3146
        %3202 = vmatprep.subr.bf16.mxu0 %v3145
        %3203 = vmatpush2.bf16.msra.mxu0 %v3144
        %3204 = vmatprep.subr.bf16.mxu0 %v3143
        %3205 = vmatpush2.bf16.msra.mxu0 %v3142
        %3206 = vmatprep.subr.bf16.mxu0 %v3141
        %3207 = vmatpush2.bf16.msra.mxu0 %v3140
        %3208 = vmatprep.subr.bf16.mxu0 %v3139
        %3209 = vmatpush2.bf16.msra.mxu0 %v3138
        %3210 = vmatprep.subr.bf16.mxu0 %v3137
        %3211 = vmatpush2.bf16.msra.mxu0 %v3136
        %3212 = vmatprep.subr.bf16.mxu0 %v3135
        %3213 = vmatpush2.bf16.msra.mxu0 %v3134
        %3214 = vmatprep.mubr.bf16.mxu0 %v2988
        %3215 = vmatmul.mubr.bf16.gmra.mxu0 %v2987
        %v3216 = vpop.f32.mrf.mxu0
        %v3217 = vadd.f32 0.0, %v3216
        %v3218 = vpop.f32.mrf.mxu0
        %v3219 = vadd.f32 0.0, %v3218
        %v3220 = vpop.f32.mrf.mxu0
        %v3221 = vadd.f32 0.0, %v3220
        %v3222 = vpop.f32.mrf.mxu0
        %v3223 = vadd.f32 0.0, %v3222
        %3224 = vdwg.mxu0
        %v3257 = vunpack.c.l.b16 %v2901
        %v3258 = vunpack.c.h.b16 %v2901
        %v3259 = vunpack.c.l.b16 %v2902
        %v3260 = vunpack.c.h.b16 %v2902
        %v3261 = vunpack.c.l.b16 %v2903
        %v3262 = vunpack.c.h.b16 %v2903
        %v3263 = vunpack.c.l.b16 %v2904
        %v3264 = vunpack.c.h.b16 %v2904
        %v3265 = vunpack.c.l.b16 %v2905
        %v3266 = vunpack.c.h.b16 %v2905
        %v3267 = vunpack.c.l.b16 %v2906
        %v3268 = vunpack.c.h.b16 %v2906
        %v3269 = vunpack.c.l.b16 %v2907
        %v3270 = vunpack.c.h.b16 %v2907
        %v3271 = vunpack.c.l.b16 %v2908
        %v3272 = vunpack.c.h.b16 %v2908
        %v3273 = vunpack.c.l.b16 %v2909
        %v3274 = vunpack.c.h.b16 %v2909
        %v3275 = vunpack.c.l.b16 %v2910
        %v3276 = vunpack.c.h.b16 %v2910
        %v3277 = vunpack.c.l.b16 %v2911
        %v3278 = vunpack.c.h.b16 %v2911
        %v3279 = vunpack.c.l.b16 %v2912
        %v3280 = vunpack.c.h.b16 %v2912
        %v3281 = vunpack.c.l.b16 %v2913
        %v3282 = vunpack.c.h.b16 %v2913
        %v3283 = vunpack.c.l.b16 %v2914
        %v3284 = vunpack.c.h.b16 %v2914
        %v3285 = vunpack.c.l.b16 %v2915
        %v3286 = vunpack.c.h.b16 %v2915
        %v3287 = vunpack.c.l.b16 %v2916
        %v3288 = vunpack.c.h.b16 %v2916
        %v3289 = vunpack.c.l.b16 %v2917
        %v3290 = vunpack.c.h.b16 %v2917
        %v3291 = vunpack.c.l.b16 %v2918
        %v3292 = vunpack.c.h.b16 %v2918
        %v3293 = vunpack.c.l.b16 %v2919
        %v3294 = vunpack.c.h.b16 %v2919
        %v3295 = vunpack.c.l.b16 %v2920
        %v3296 = vunpack.c.h.b16 %v2920
        %v3297 = vunpack.c.l.b16 %v2921
        %v3298 = vunpack.c.h.b16 %v2921
        %v3299 = vunpack.c.l.b16 %v2922
        %v3300 = vunpack.c.h.b16 %v2922
        %v3301 = vunpack.c.l.b16 %v2923
        %v3302 = vunpack.c.h.b16 %v2923
        %v3303 = vunpack.c.l.b16 %v2924
        %v3304 = vunpack.c.h.b16 %v2924
        %v3305 = vunpack.c.l.b16 %v2925
        %v3306 = vunpack.c.h.b16 %v2925
        %v3307 = vunpack.c.l.b16 %v2926
        %v3308 = vunpack.c.h.b16 %v2926
        %v3309 = vunpack.c.l.b16 %v2927
        %v3310 = vunpack.c.h.b16 %v2927
        %v3311 = vunpack.c.l.b16 %v2928
        %v3312 = vunpack.c.h.b16 %v2928
        %v3313 = vunpack.c.l.b16 %v2929
        %v3314 = vunpack.c.h.b16 %v2929
        %v3315 = vunpack.c.l.b16 %v2930
        %v3316 = vunpack.c.h.b16 %v2930
        %v3317 = vunpack.c.l.b16 %v2931
        %v3318 = vunpack.c.h.b16 %v2931
        %v3319 = vunpack.c.l.b16 %v2932
        %v3320 = vunpack.c.h.b16 %v2932
        %v3321 = vpack.c.b16 %v3259, %v3257
        %v3322 = vpack.c.b16 %v3260, %v3258
        %v3323 = vpack.c.b16 %v3263, %v3261
        %v3324 = vpack.c.b16 %v3264, %v3262
        %v3325 = vpack.c.b16 %v3267, %v3265
        %v3326 = vpack.c.b16 %v3268, %v3266
        %v3327 = vpack.c.b16 %v3271, %v3269
        %v3328 = vpack.c.b16 %v3272, %v3270
        %v3329 = vpack.c.b16 %v3275, %v3273
        %v3330 = vpack.c.b16 %v3276, %v3274
        %v3331 = vpack.c.b16 %v3279, %v3277
        %v3332 = vpack.c.b16 %v3280, %v3278
        %v3333 = vpack.c.b16 %v3283, %v3281
        %v3334 = vpack.c.b16 %v3284, %v3282
        %v3335 = vpack.c.b16 %v3287, %v3285
        %v3336 = vpack.c.b16 %v3288, %v3286
        %v3337 = vpack.c.b16 %v3291, %v3289
        %v3338 = vpack.c.b16 %v3292, %v3290
        %v3339 = vpack.c.b16 %v3295, %v3293
        %v3340 = vpack.c.b16 %v3296, %v3294
        %v3341 = vpack.c.b16 %v3299, %v3297
        %v3342 = vpack.c.b16 %v3300, %v3298
        %v3343 = vpack.c.b16 %v3303, %v3301
        %v3344 = vpack.c.b16 %v3304, %v3302
        %v3345 = vpack.c.b16 %v3307, %v3305
        %v3346 = vpack.c.b16 %v3308, %v3306
        %v3347 = vpack.c.b16 %v3311, %v3309
        %v3348 = vpack.c.b16 %v3312, %v3310
        %v3349 = vpack.c.b16 %v3315, %v3313
        %v3350 = vpack.c.b16 %v3316, %v3314
        %v3351 = vpack.c.b16 %v3319, %v3317
        %v3352 = vpack.c.b16 %v3320, %v3318
        %3385 = vmatprep.subr.bf16.mxu0 %v3336
        %3386 = vmatpush1.bf16.msra.mxu0 %v3335
        %3387 = vmatprep.subr.bf16.mxu0 %v3334
        %3388 = vmatpush1.bf16.msra.mxu0 %v3333
        %3389 = vmatprep.subr.bf16.mxu0 %v3332
        %3390 = vmatpush1.bf16.msra.mxu0 %v3331
        %3391 = vmatprep.subr.bf16.mxu0 %v3330
        %3392 = vmatpush1.bf16.msra.mxu0 %v3329
        %3393 = vmatprep.subr.bf16.mxu0 %v3328
        %3394 = vmatpush1.bf16.msra.mxu0 %v3327
        %3395 = vmatprep.subr.bf16.mxu0 %v3326
        %3396 = vmatpush1.bf16.msra.mxu0 %v3325
        %3397 = vmatprep.subr.bf16.mxu0 %v3324
        %3398 = vmatpush1.bf16.msra.mxu0 %v3323
        %3399 = vmatprep.subr.bf16.mxu0 %v3322
        %3400 = vmatpush1.bf16.msra.mxu0 %v3321
        %3401 = vmatprep.subr.bf16.mxu0 %v3352
        %3402 = vmatpush2.bf16.msra.mxu0 %v3351
        %3403 = vmatprep.subr.bf16.mxu0 %v3350
        %3404 = vmatpush2.bf16.msra.mxu0 %v3349
        %3405 = vmatprep.subr.bf16.mxu0 %v3348
        %3406 = vmatpush2.bf16.msra.mxu0 %v3347
        %3407 = vmatprep.subr.bf16.mxu0 %v3346
        %3408 = vmatpush2.bf16.msra.mxu0 %v3345
        %3409 = vmatprep.subr.bf16.mxu0 %v3344
        %3410 = vmatpush2.bf16.msra.mxu0 %v3343
        %3411 = vmatprep.subr.bf16.mxu0 %v3342
        %3412 = vmatpush2.bf16.msra.mxu0 %v3341
        %3413 = vmatprep.subr.bf16.mxu0 %v3340
        %3414 = vmatpush2.bf16.msra.mxu0 %v3339
        %3415 = vmatprep.subr.bf16.mxu0 %v3338
        %3416 = vmatpush2.bf16.msra.mxu0 %v3337
        %3417 = vmatprep.mubr.bf16.mxu0 %v2900
        %3418 = vmatmul.mubr.bf16.gmra.mxu0 %v2899
        %v3419 = vpop.f32.mrf.mxu0
        %v3420 = vadd.f32 %v3217, %v3419
        %v3421 = vpop.f32.mrf.mxu0
        %v3422 = vadd.f32 %v3219, %v3421
        %v3423 = vpop.f32.mrf.mxu0
        %v3424 = vadd.f32 %v3221, %v3423
        %v3425 = vpop.f32.mrf.mxu0
        %v3426 = vadd.f32 %v3223, %v3425
        %3427 = vdwg.mxu0
        %s3428 = scalar_lea.vmem [#allocation9], 16
        %v3429 = vld [vmem:[%s3428] sm:$0xf]
        %v3430 = vld [vmem:[%s3428 + $0x4] sm:$0xf]
        %v3433 = vunpack.c.l.b16 %v3429
        %v3434 = vunpack.c.l.b16 %v3430
        %v3435 = vpack.c.b16 %v3434, %v3433
        %v3437 = vsel %vm2852, %v3435, 0
        %3439 = vmatprep.subr.bf16.mxu0 0
        %3440 = vmatpush1.bf16.msra.mxu0 0
        %3441 = vmatprep.subr.bf16.mxu0 0
        %3442 = vmatpush1.bf16.msra.mxu0 0
        %3443 = vmatprep.subr.bf16.mxu0 0
        %3444 = vmatpush1.bf16.msra.mxu0 0
        %3445 = vmatprep.subr.bf16.mxu0 0
        %3446 = vmatpush1.bf16.msra.mxu0 0
        %3447 = vmatprep.subr.bf16.mxu0 0
        %3448 = vmatpush1.bf16.msra.mxu0 0
        %3449 = vmatprep.subr.bf16.mxu0 0
        %3450 = vmatpush1.bf16.msra.mxu0 0
        %3451 = vmatprep.subr.bf16.mxu0 %v2844
        %3452 = vmatpush1.bf16.msra.mxu0 %v2843
        %3453 = vmatprep.subr.bf16.mxu0 %v2842
        %3454 = vmatpush1.bf16.msra.mxu0 %v2841
        %3455 = vmatprep.subr.bf16.mxu0 0
        %3456 = vmatpush2.bf16.msra.mxu0 0
        %3457 = vmatprep.subr.bf16.mxu0 0
        %3458 = vmatpush2.bf16.msra.mxu0 0
        %3459 = vmatprep.subr.bf16.mxu0 0
        %3460 = vmatpush2.bf16.msra.mxu0 0
        %3461 = vmatprep.subr.bf16.mxu0 0
        %3462 = vmatpush2.bf16.msra.mxu0 0
        %3463 = vmatprep.subr.bf16.mxu0 0
        %3464 = vmatpush2.bf16.msra.mxu0 0
        %3465 = vmatprep.subr.bf16.mxu0 0
        %3466 = vmatpush2.bf16.msra.mxu0 0
        %3467 = vmatprep.subr.bf16.mxu0 0
        %3468 = vmatpush2.bf16.msra.mxu0 0
        %3469 = vmatprep.subr.bf16.mxu0 0
        %3470 = vmatpush2.bf16.msra.mxu0 0
        %3471 = vmatprep.mubr.bf16.mxu0 0
        %3472 = vmatmul.mubr.bf16.gmra.mxu0 %v3437
        %v3473 = vpop.f32.mrf.mxu0
        %v3474 = vadd.f32 0.0, %v3473
        %v3475 = vpop.f32.mrf.mxu0
        %v3476 = vadd.f32 0.0, %v3475
        %v3477 = vpop.f32.mrf.mxu0
        %v3478 = vadd.f32 0.0, %v3477
        %v3479 = vpop.f32.mrf.mxu0
        %v3480 = vadd.f32 0.0, %v3479
        %3481 = vdwg.mxu0
        %v3482 = vpack.c.bf16 %v3478, %v3474
        %v3483 = vpack.c.bf16 %v3480, %v3476
        %s3484 = scalar_lea.vmem %s7, 512
        %v3485 = vld [vmem:[%s3484] sm:$0xff]
        %v3486 = vld [vmem:[%s3484 + $0x8] sm:$0xff]
        %v3487 = vld [vmem:[%s3484 + $0x10] sm:$0xff]
        %v3488 = vld [vmem:[%s3484 + $0x18] sm:$0xff]
        %v3489 = vld [vmem:[%s3484 + $0x20] sm:$0xff]
        %v3490 = vld [vmem:[%s3484 + $0x28] sm:$0xff]
        %v3491 = vld [vmem:[%s3484 + $0x30] sm:$0xff]
        %v3492 = vld [vmem:[%s3484 + $0x38] sm:$0xff]
        %v3493 = vld [vmem:[%s3484 + $0x40] sm:$0xff]
        %v3494 = vld [vmem:[%s3484 + $0x48] sm:$0xff]
        %v3495 = vld [vmem:[%s3484 + $0x50] sm:$0xff]
        %v3496 = vld [vmem:[%s3484 + $0x58] sm:$0xff]
        %v3497 = vld [vmem:[%s3484 + $0x60] sm:$0xff]
        %v3498 = vld [vmem:[%s3484 + $0x68] sm:$0xff]
        %v3499 = vld [vmem:[%s3484 + $0x70] sm:$0xff]
        %v3500 = vld [vmem:[%s3484 + $0x78] sm:$0xff]
        %v3501 = vld [vmem:[%s3484 + $0x80] sm:$0xff]
        %v3502 = vld [vmem:[%s3484 + $0x88] sm:$0xff]
        %v3503 = vld [vmem:[%s3484 + $0x90] sm:$0xff]
        %v3504 = vld [vmem:[%s3484 + $0x98] sm:$0xff]
        %v3505 = vld [vmem:[%s3484 + $0xa0] sm:$0xff]
        %v3506 = vld [vmem:[%s3484 + $0xa8] sm:$0xff]
        %v3507 = vld [vmem:[%s3484 + $0xb0] sm:$0xff]
        %v3508 = vld [vmem:[%s3484 + $0xb8] sm:$0xff]
        %v3509 = vld [vmem:[%s3484 + $0xc0] sm:$0xff]
        %v3510 = vld [vmem:[%s3484 + $0xc8] sm:$0xff]
        %v3511 = vld [vmem:[%s3484 + $0xd0] sm:$0xff]
        %v3512 = vld [vmem:[%s3484 + $0xd8] sm:$0xff]
        %v3513 = vld [vmem:[%s3484 + $0xe0] sm:$0xff]
        %v3514 = vld [vmem:[%s3484 + $0xe8] sm:$0xff]
        %v3515 = vld [vmem:[%s3484 + $0xf0] sm:$0xff]
        %v3516 = vld [vmem:[%s3484 + $0xf8] sm:$0xff]
        %v3549 = vunpack.c.l.b16 %v3485
        %v3550 = vunpack.c.h.b16 %v3485
        %v3551 = vunpack.c.l.b16 %v3486
        %v3552 = vunpack.c.h.b16 %v3486
        %v3553 = vunpack.c.l.b16 %v3487
        %v3554 = vunpack.c.h.b16 %v3487
        %v3555 = vunpack.c.l.b16 %v3488
        %v3556 = vunpack.c.h.b16 %v3488
        %v3557 = vunpack.c.l.b16 %v3489
        %v3558 = vunpack.c.h.b16 %v3489
        %v3559 = vunpack.c.l.b16 %v3490
        %v3560 = vunpack.c.h.b16 %v3490
        %v3561 = vunpack.c.l.b16 %v3491
        %v3562 = vunpack.c.h.b16 %v3491
        %v3563 = vunpack.c.l.b16 %v3492
        %v3564 = vunpack.c.h.b16 %v3492
        %v3565 = vunpack.c.l.b16 %v3493
        %v3566 = vunpack.c.h.b16 %v3493
        %v3567 = vunpack.c.l.b16 %v3494
        %v3568 = vunpack.c.h.b16 %v3494
        %v3569 = vunpack.c.l.b16 %v3495
        %v3570 = vunpack.c.h.b16 %v3495
        %v3571 = vunpack.c.l.b16 %v3496
        %v3572 = vunpack.c.h.b16 %v3496
        %v3573 = vunpack.c.l.b16 %v3497
        %v3574 = vunpack.c.h.b16 %v3497
        %v3575 = vunpack.c.l.b16 %v3498
        %v3576 = vunpack.c.h.b16 %v3498
        %v3577 = vunpack.c.l.b16 %v3499
        %v3578 = vunpack.c.h.b16 %v3499
        %v3579 = vunpack.c.l.b16 %v3500
        %v3580 = vunpack.c.h.b16 %v3500
        %v3581 = vunpack.c.l.b16 %v3501
        %v3582 = vunpack.c.h.b16 %v3501
        %v3583 = vunpack.c.l.b16 %v3502
        %v3584 = vunpack.c.h.b16 %v3502
        %v3585 = vunpack.c.l.b16 %v3503
        %v3586 = vunpack.c.h.b16 %v3503
        %v3587 = vunpack.c.l.b16 %v3504
        %v3588 = vunpack.c.h.b16 %v3504
        %v3589 = vunpack.c.l.b16 %v3505
        %v3590 = vunpack.c.h.b16 %v3505
        %v3591 = vunpack.c.l.b16 %v3506
        %v3592 = vunpack.c.h.b16 %v3506
        %v3593 = vunpack.c.l.b16 %v3507
        %v3594 = vunpack.c.h.b16 %v3507
        %v3595 = vunpack.c.l.b16 %v3508
        %v3596 = vunpack.c.h.b16 %v3508
        %v3597 = vunpack.c.l.b16 %v3509
        %v3598 = vunpack.c.h.b16 %v3509
        %v3599 = vunpack.c.l.b16 %v3510
        %v3600 = vunpack.c.h.b16 %v3510
        %v3601 = vunpack.c.l.b16 %v3511
        %v3602 = vunpack.c.h.b16 %v3511
        %v3603 = vunpack.c.l.b16 %v3512
        %v3604 = vunpack.c.h.b16 %v3512
        %v3605 = vunpack.c.l.b16 %v3513
        %v3606 = vunpack.c.h.b16 %v3513
        %v3607 = vunpack.c.l.b16 %v3514
        %v3608 = vunpack.c.h.b16 %v3514
        %v3609 = vunpack.c.l.b16 %v3515
        %v3610 = vunpack.c.h.b16 %v3515
        %v3611 = vunpack.c.l.b16 %v3516
        %v3612 = vunpack.c.h.b16 %v3516
        %v3613 = vpack.c.b16 %v3551, %v3549
        %v3614 = vpack.c.b16 %v3552, %v3550
        %v3615 = vpack.c.b16 %v3555, %v3553
        %v3616 = vpack.c.b16 %v3556, %v3554
        %v3617 = vpack.c.b16 %v3559, %v3557
        %v3618 = vpack.c.b16 %v3560, %v3558
        %v3619 = vpack.c.b16 %v3563, %v3561
        %v3620 = vpack.c.b16 %v3564, %v3562
        %v3621 = vpack.c.b16 %v3567, %v3565
        %v3622 = vpack.c.b16 %v3568, %v3566
        %v3623 = vpack.c.b16 %v3571, %v3569
        %v3624 = vpack.c.b16 %v3572, %v3570
        %v3625 = vpack.c.b16 %v3575, %v3573
        %v3626 = vpack.c.b16 %v3576, %v3574
        %v3627 = vpack.c.b16 %v3579, %v3577
        %v3628 = vpack.c.b16 %v3580, %v3578
        %v3629 = vpack.c.b16 %v3583, %v3581
        %v3630 = vpack.c.b16 %v3584, %v3582
        %v3631 = vpack.c.b16 %v3587, %v3585
        %v3632 = vpack.c.b16 %v3588, %v3586
        %v3633 = vpack.c.b16 %v3591, %v3589
        %v3634 = vpack.c.b16 %v3592, %v3590
        %v3635 = vpack.c.b16 %v3595, %v3593
        %v3636 = vpack.c.b16 %v3596, %v3594
        %v3637 = vpack.c.b16 %v3599, %v3597
        %v3638 = vpack.c.b16 %v3600, %v3598
        %v3639 = vpack.c.b16 %v3603, %v3601
        %v3640 = vpack.c.b16 %v3604, %v3602
        %v3641 = vpack.c.b16 %v3607, %v3605
        %v3642 = vpack.c.b16 %v3608, %v3606
        %v3643 = vpack.c.b16 %v3611, %v3609
        %v3644 = vpack.c.b16 %v3612, %v3610
        %3677 = vmatprep.subr.bf16.mxu0 %v3628
        %3678 = vmatpush1.bf16.msra.mxu0 %v3627
        %3679 = vmatprep.subr.bf16.mxu0 %v3626
        %3680 = vmatpush1.bf16.msra.mxu0 %v3625
        %3681 = vmatprep.subr.bf16.mxu0 %v3624
        %3682 = vmatpush1.bf16.msra.mxu0 %v3623
        %3683 = vmatprep.subr.bf16.mxu0 %v3622
        %3684 = vmatpush1.bf16.msra.mxu0 %v3621
        %3685 = vmatprep.subr.bf16.mxu0 %v3620
        %3686 = vmatpush1.bf16.msra.mxu0 %v3619
        %3687 = vmatprep.subr.bf16.mxu0 %v3618
        %3688 = vmatpush1.bf16.msra.mxu0 %v3617
        %3689 = vmatprep.subr.bf16.mxu0 %v3616
        %3690 = vmatpush1.bf16.msra.mxu0 %v3615
        %3691 = vmatprep.subr.bf16.mxu0 %v3614
        %3692 = vmatpush1.bf16.msra.mxu0 %v3613
        %3693 = vmatprep.subr.bf16.mxu0 %v3644
        %3694 = vmatpush2.bf16.msra.mxu0 %v3643
        %3695 = vmatprep.subr.bf16.mxu0 %v3642
        %3696 = vmatpush2.bf16.msra.mxu0 %v3641
        %3697 = vmatprep.subr.bf16.mxu0 %v3640
        %3698 = vmatpush2.bf16.msra.mxu0 %v3639
        %3699 = vmatprep.subr.bf16.mxu0 %v3638
        %3700 = vmatpush2.bf16.msra.mxu0 %v3637
        %3701 = vmatprep.subr.bf16.mxu0 %v3636
        %3702 = vmatpush2.bf16.msra.mxu0 %v3635
        %3703 = vmatprep.subr.bf16.mxu0 %v3634
        %3704 = vmatpush2.bf16.msra.mxu0 %v3633
        %3705 = vmatprep.subr.bf16.mxu0 %v3632
        %3706 = vmatpush2.bf16.msra.mxu0 %v3631
        %3707 = vmatprep.subr.bf16.mxu0 %v3630
        %3708 = vmatpush2.bf16.msra.mxu0 %v3629
        %3709 = vmatprep.mubr.bf16.mxu0 %v3483
        %3710 = vmatmul.mubr.bf16.gmra.mxu0 %v3482
        %v3711 = vpop.f32.mrf.mxu0
        %v3712 = vadd.f32 0.0, %v3711
        %v3713 = vpop.f32.mrf.mxu0
        %v3714 = vadd.f32 0.0, %v3713
        %v3715 = vpop.f32.mrf.mxu0
        %v3716 = vadd.f32 0.0, %v3715
        %v3717 = vpop.f32.mrf.mxu0
        %v3718 = vadd.f32 0.0, %v3717
        %3719 = vdwg.mxu0
        %v3720 = vadd.f32 %v3420, %v3712
        %v3721 = vadd.f32 %v3422, %v3714
        %v3722 = vadd.f32 %v3424, %v3716
        %v3723 = vadd.f32 %v3426, %v3718
        %v3724 = vld [vmem:[#allocation10] sm:$0x3]
        %v3726 = vlaneseq
        %v3727 = vshrl.u32 %v3726, 7
        %v3728 = vsub.s32 0, %v3727
        %v3729 = vrot.slane %v3724, %v3728
        %v3730 = vlaneseq
        %v3731 = vshrl.u32 %v3730, 7
        %v3732 = vsub.s32 1, %v3731
        %v3733 = vrot.slane %v3724, %v3732
        %v3736 = vadd.f32 %v3720, %v3729
        %v3737 = vadd.f32 %v3721, %v3733
        %v3738 = vadd.f32 %v3722, %v3729
        %v3739 = vadd.f32 %v3723, %v3733
        %v3740 = vmul.f32 %v3736, 0.5
        %v3741 = vmul.f32 %v3737, 0.5
        %v3742 = vmul.f32 %v3738, 0.5
        %v3743 = vmul.f32 %v3739, 0.5
        %v3744 = vmul.f32 %v3736, 0.70710677
        %v3745 = vmul.f32 %v3737, 0.70710677
        %v3746 = vmul.f32 %v3738, 0.70710677
        %v3747 = vmul.f32 %v3739, 0.70710677
        %v3748 = vand.u32 2147483647, %v3744
        %v3749 = vand.u32 2147483647, %v3745
        %v3750 = vand.u32 2147483647, %v3746
        %v3751 = vand.u32 2147483647, %v3747
        %v3752 = vmul.f32 %v3748, 0.3275911
        %v3753 = vmul.f32 %v3749, 0.3275911
        %v3754 = vmul.f32 %v3750, 0.3275911
        %v3755 = vmul.f32 %v3751, 0.3275911
        %v3756 = vadd.f32 %v3752, 1.0
        %v3757 = vadd.f32 %v3753, 1.0
        %v3758 = vadd.f32 %v3754, 1.0
        %v3759 = vadd.f32 %v3755, 1.0
        %v3760 = vrcp.pop %v3756
        %v3761 = vrcp.pop %v3757
        %v3762 = vrcp.pop %v3758
        %v3763 = vrcp.pop %v3759
        %v3764 = vmul.f32 %v3760, 1.0614054
        %v3765 = vmul.f32 %v3761, 1.0614054
        %v3766 = vmul.f32 %v3762, 1.0614054
        %v3767 = vmul.f32 %v3763, 1.0614054
        %v3768 = vadd.f32 %v3764, -1.4531521
        %v3769 = vadd.f32 %v3765, -1.4531521
        %v3770 = vadd.f32 %v3766, -1.4531521
        %v3771 = vadd.f32 %v3767, -1.4531521
        %v3772 = vmul.f32 %v3768, %v3760
        %v3773 = vmul.f32 %v3769, %v3761
        %v3774 = vmul.f32 %v3770, %v3762
        %v3775 = vmul.f32 %v3771, %v3763
        %v3776 = vadd.f32 %v3772, 1.4214138
        %v3777 = vadd.f32 %v3773, 1.4214138
        %v3778 = vadd.f32 %v3774, 1.4214138
        %v3779 = vadd.f32 %v3775, 1.4214138
        %v3780 = vmul.f32 %v3776, %v3760
        %v3781 = vmul.f32 %v3777, %v3761
        %v3782 = vmul.f32 %v3778, %v3762
        %v3783 = vmul.f32 %v3779, %v3763
        %v3784 = vadd.f32 %v3780, -0.28449672
        %v3785 = vadd.f32 %v3781, -0.28449672
        %v3786 = vadd.f32 %v3782, -0.28449672
        %v3787 = vadd.f32 %v3783, -0.28449672
        %v3788 = vmul.f32 %v3784, %v3760
        %v3789 = vmul.f32 %v3785, %v3761
        %v3790 = vmul.f32 %v3786, %v3762
        %v3791 = vmul.f32 %v3787, %v3763
        %v3792 = vadd.f32 %v3788, 0.2548296
        %v3793 = vadd.f32 %v3789, 0.2548296
        %v3794 = vadd.f32 %v3790, 0.2548296
        %v3795 = vadd.f32 %v3791, 0.2548296
        %v3796 = vmul.f32 %v3792, %v3760
        %v3797 = vmul.f32 %v3793, %v3761
        %v3798 = vmul.f32 %v3794, %v3762
        %v3799 = vmul.f32 %v3795, %v3763
        %v3800 = vsub.f32 0.0, %v3748
        %v3801 = vsub.f32 0.0, %v3749
        %v3802 = vsub.f32 0.0, %v3750
        %v3803 = vsub.f32 0.0, %v3751
        %v3804 = vmul.f32 %v3800, %v3748
        %v3805 = vmul.f32 %v3801, %v3749
        %v3806 = vmul.f32 %v3802, %v3750
        %v3807 = vmul.f32 %v3803, %v3751
        %v3808 = vmul.f32 %v3804, 1.442695
        %v3809 = vpow.pop %v3808
        %v3810 = vmul.f32 %v3805, 1.442695
        %v3811 = vpow.pop %v3810
        %v3812 = vmul.f32 %v3806, 1.442695
        %v3813 = vpow.pop %v3812
        %v3814 = vmul.f32 %v3807, 1.442695
        %v3815 = vpow.pop %v3814
        %v3816 = vmul.f32 %v3796, %v3809
        %v3817 = vmul.f32 %v3797, %v3811
        %v3818 = vmul.f32 %v3798, %v3813
        %v3819 = vmul.f32 %v3799, %v3815
        %v3820 = vsub.f32 1.0, %v3816
        %v3821 = vsub.f32 1.0, %v3817
        %v3822 = vsub.f32 1.0, %v3818
        %v3823 = vsub.f32 1.0, %v3819
        %vm3824 = vcmp.ge.f32.partialorder %v3744, 0.0
        %vm3825 = vcmp.ge.f32.partialorder %v3745, 0.0
        %vm3826 = vcmp.ge.f32.partialorder %v3746, 0.0
        %vm3827 = vcmp.ge.f32.partialorder %v3747, 0.0
        %v3828 = vsub.f32 0.0, %v3820
        %v3829 = vsub.f32 0.0, %v3821
        %v3830 = vsub.f32 0.0, %v3822
        %v3831 = vsub.f32 0.0, %v3823
        %v3832 = vsel %vm3824, %v3820, %v3828
        %v3833 = vsel %vm3825, %v3821, %v3829
        %v3834 = vsel %vm3826, %v3822, %v3830
        %v3835 = vsel %vm3827, %v3823, %v3831
        %v3836 = vadd.f32 %v3832, 1.0
        %v3837 = vadd.f32 %v3833, 1.0
        %v3838 = vadd.f32 %v3834, 1.0
        %v3839 = vadd.f32 %v3835, 1.0
        %v3840 = vmul.f32 %v3740, %v3836
        %v3841 = vmul.f32 %v3741, %v3837
        %v3842 = vmul.f32 %v3742, %v3838
        %v3843 = vmul.f32 %v3743, %v3839
        %v3844 = vpack.c.bf16 %v3842, %v3840
        %v3845 = vpack.c.bf16 %v3843, %v3841
        %v3847 = vshrl.u32 %v3844, 16
        %v3849 = vrot.slane %v3847, 7
        %v3850 = vshll.u32 %v3844, 16
        %v3852 = vor.u32 %v3849, %v3850
        %v3854 = vshrl.u32 %v3845, 16
        %v3856 = vrot.slane %v3854, 7
        %v3857 = vshll.u32 %v3845, 16
        %v3859 = vor.u32 %v3856, %v3857
        %v3864 = vsel %vm1799, 0, %v3852
        %v3865 = vsel %vm1799, 0, %v3859
        %v3866 = vsel %vm1799, %v3849, 0
        %v3867 = vsel %vm1799, %v3856, 0
        %v3868 = vld [vmem:[#allocation12] sm:$0xff]
        %v3869 = vld [vmem:[#allocation12 + $0x8] sm:$0xff]
        %v3870 = vld [vmem:[#allocation12 + $0x10] sm:$0xff]
        %v3871 = vld [vmem:[#allocation12 + $0x18] sm:$0xff]
        %v3872 = vld [vmem:[#allocation12 + $0x20] sm:$0xff]
        %v3873 = vld [vmem:[#allocation12 + $0x28] sm:$0xff]
        %v3874 = vld [vmem:[#allocation12 + $0x30] sm:$0xff]
        %v3875 = vld [vmem:[#allocation12 + $0x38] sm:$0xff]
        %v3876 = vld [vmem:[#allocation12 + $0x40] sm:$0xff]
        %v3877 = vld [vmem:[#allocation12 + $0x48] sm:$0xff]
        %v3878 = vld [vmem:[#allocation12 + $0x50] sm:$0xff]
        %v3879 = vld [vmem:[#allocation12 + $0x58] sm:$0xff]
        %v3880 = vld [vmem:[#allocation12 + $0x60] sm:$0xff]
        %v3881 = vld [vmem:[#allocation12 + $0x68] sm:$0xff]
        %v3882 = vld [vmem:[#allocation12 + $0x70] sm:$0xff]
        %v3883 = vld [vmem:[#allocation12 + $0x78] sm:$0xff]
        %v3884 = vld [vmem:[#allocation12 + $0x80] sm:$0xff]
        %v3885 = vld [vmem:[#allocation12 + $0x88] sm:$0xff]
        %v3886 = vld [vmem:[#allocation12 + $0x90] sm:$0xff]
        %v3887 = vld [vmem:[#allocation12 + $0x98] sm:$0xff]
        %v3888 = vld [vmem:[#allocation12 + $0xa0] sm:$0xff]
        %v3889 = vld [vmem:[#allocation12 + $0xa8] sm:$0xff]
        %v3890 = vld [vmem:[#allocation12 + $0xb0] sm:$0xff]
        %v3891 = vld [vmem:[#allocation12 + $0xb8] sm:$0xff]
        %v3892 = vld [vmem:[#allocation12 + $0xc0] sm:$0xff]
        %v3893 = vld [vmem:[#allocation12 + $0xc8] sm:$0xff]
        %v3894 = vld [vmem:[#allocation12 + $0xd0] sm:$0xff]
        %v3895 = vld [vmem:[#allocation12 + $0xd8] sm:$0xff]
        %v3896 = vld [vmem:[#allocation12 + $0xe0] sm:$0xff]
        %v3897 = vld [vmem:[#allocation12 + $0xe8] sm:$0xff]
        %v3898 = vld [vmem:[#allocation12 + $0xf0] sm:$0xff]
        %v3899 = vld [vmem:[#allocation12 + $0xf8] sm:$0xff]
        %s3900 = scalar_lea.vmem [#allocation12], 256
        %v3901 = vld [vmem:[%s3900] sm:$0xff]
        %v3902 = vld [vmem:[%s3900 + $0x8] sm:$0xff]
        %v3903 = vld [vmem:[%s3900 + $0x10] sm:$0xff]
        %v3904 = vld [vmem:[%s3900 + $0x18] sm:$0xff]
        %v3905 = vld [vmem:[%s3900 + $0x20] sm:$0xff]
        %v3906 = vld [vmem:[%s3900 + $0x28] sm:$0xff]
        %v3907 = vld [vmem:[%s3900 + $0x30] sm:$0xff]
        %v3908 = vld [vmem:[%s3900 + $0x38] sm:$0xff]
        %v3909 = vld [vmem:[%s3900 + $0x40] sm:$0xff]
        %v3910 = vld [vmem:[%s3900 + $0x48] sm:$0xff]
        %v3911 = vld [vmem:[%s3900 + $0x50] sm:$0xff]
        %v3912 = vld [vmem:[%s3900 + $0x58] sm:$0xff]
        %v3913 = vld [vmem:[%s3900 + $0x60] sm:$0xff]
        %v3914 = vld [vmem:[%s3900 + $0x68] sm:$0xff]
        %v3915 = vld [vmem:[%s3900 + $0x70] sm:$0xff]
        %v3916 = vld [vmem:[%s3900 + $0x78] sm:$0xff]
        %v3917 = vld [vmem:[%s3900 + $0x80] sm:$0xff]
        %v3918 = vld [vmem:[%s3900 + $0x88] sm:$0xff]
        %v3919 = vld [vmem:[%s3900 + $0x90] sm:$0xff]
        %v3920 = vld [vmem:[%s3900 + $0x98] sm:$0xff]
        %v3921 = vld [vmem:[%s3900 + $0xa0] sm:$0xff]
        %v3922 = vld [vmem:[%s3900 + $0xa8] sm:$0xff]
        %v3923 = vld [vmem:[%s3900 + $0xb0] sm:$0xff]
        %v3924 = vld [vmem:[%s3900 + $0xb8] sm:$0xff]
        %v3925 = vld [vmem:[%s3900 + $0xc0] sm:$0xff]
        %v3926 = vld [vmem:[%s3900 + $0xc8] sm:$0xff]
        %v3927 = vld [vmem:[%s3900 + $0xd0] sm:$0xff]
        %v3928 = vld [vmem:[%s3900 + $0xd8] sm:$0xff]
        %v3929 = vld [vmem:[%s3900 + $0xe0] sm:$0xff]
        %v3930 = vld [vmem:[%s3900 + $0xe8] sm:$0xff]
        %v3931 = vld [vmem:[%s3900 + $0xf0] sm:$0xff]
        %v3932 = vld [vmem:[%s3900 + $0xf8] sm:$0xff]
        %v3934 = vshrl.u32 %v3864, 16
        %v3936 = vshll.u32 %v3864, 16
        %v3938 = vrot.slane %v3936, 1
        %v3939 = vor.u32 %v3934, %v3938
        %v3941 = vshll.u32 %v3866, 16
        %v3943 = vrot.slane %v3941, 1
        %v3944 = vsel %vm1869, %v3939, %v3943
        %v3946 = vshrl.u32 %v3865, 16
        %v3948 = vshll.u32 %v3865, 16
        %v3950 = vrot.slane %v3948, 1
        %v3951 = vor.u32 %v3946, %v3950
        %v3953 = vshll.u32 %v3867, 16
        %v3955 = vrot.slane %v3953, 1
        %v3956 = vsel %vm1869, %v3951, %v3955
        %v3991 = vunpack.c.l.b16 %v3901
        %v3992 = vunpack.c.h.b16 %v3901
        %v3993 = vunpack.c.l.b16 %v3902
        %v3994 = vunpack.c.h.b16 %v3902
        %v3995 = vunpack.c.l.b16 %v3903
        %v3996 = vunpack.c.h.b16 %v3903
        %v3997 = vunpack.c.l.b16 %v3904
        %v3998 = vunpack.c.h.b16 %v3904
        %v3999 = vunpack.c.l.b16 %v3905
        %v4000 = vunpack.c.h.b16 %v3905
        %v4001 = vunpack.c.l.b16 %v3906
        %v4002 = vunpack.c.h.b16 %v3906
        %v4003 = vunpack.c.l.b16 %v3907
        %v4004 = vunpack.c.h.b16 %v3907
        %v4005 = vunpack.c.l.b16 %v3908
        %v4006 = vunpack.c.h.b16 %v3908
        %v4007 = vunpack.c.l.b16 %v3909
        %v4008 = vunpack.c.h.b16 %v3909
        %v4009 = vunpack.c.l.b16 %v3910
        %v4010 = vunpack.c.h.b16 %v3910
        %v4011 = vunpack.c.l.b16 %v3911
        %v4012 = vunpack.c.h.b16 %v3911
        %v4013 = vunpack.c.l.b16 %v3912
        %v4014 = vunpack.c.h.b16 %v3912
        %v4015 = vunpack.c.l.b16 %v3913
        %v4016 = vunpack.c.h.b16 %v3913
        %v4017 = vunpack.c.l.b16 %v3914
        %v4018 = vunpack.c.h.b16 %v3914
        %v4019 = vunpack.c.l.b16 %v3915
        %v4020 = vunpack.c.h.b16 %v3915
        %v4021 = vunpack.c.l.b16 %v3916
        %v4022 = vunpack.c.h.b16 %v3916
        %v4023 = vunpack.c.l.b16 %v3917
        %v4024 = vunpack.c.h.b16 %v3917
        %v4025 = vunpack.c.l.b16 %v3918
        %v4026 = vunpack.c.h.b16 %v3918
        %v4027 = vunpack.c.l.b16 %v3919
        %v4028 = vunpack.c.h.b16 %v3919
        %v4029 = vunpack.c.l.b16 %v3920
        %v4030 = vunpack.c.h.b16 %v3920
        %v4031 = vunpack.c.l.b16 %v3921
        %v4032 = vunpack.c.h.b16 %v3921
        %v4033 = vunpack.c.l.b16 %v3922
        %v4034 = vunpack.c.h.b16 %v3922
        %v4035 = vunpack.c.l.b16 %v3923
        %v4036 = vunpack.c.h.b16 %v3923
        %v4037 = vunpack.c.l.b16 %v3924
        %v4038 = vunpack.c.h.b16 %v3924
        %v4039 = vunpack.c.l.b16 %v3925
        %v4040 = vunpack.c.h.b16 %v3925
        %v4041 = vunpack.c.l.b16 %v3926
        %v4042 = vunpack.c.h.b16 %v3926
        %v4043 = vunpack.c.l.b16 %v3927
        %v4044 = vunpack.c.h.b16 %v3927
        %v4045 = vunpack.c.l.b16 %v3928
        %v4046 = vunpack.c.h.b16 %v3928
        %v4047 = vunpack.c.l.b16 %v3929
        %v4048 = vunpack.c.h.b16 %v3929
        %v4049 = vunpack.c.l.b16 %v3930
        %v4050 = vunpack.c.h.b16 %v3930
        %v4051 = vunpack.c.l.b16 %v3931
        %v4052 = vunpack.c.h.b16 %v3931
        %v4053 = vunpack.c.l.b16 %v3932
        %v4054 = vunpack.c.h.b16 %v3932
        %v4055 = vpack.c.b16 %v3993, %v3991
        %v4056 = vpack.c.b16 %v3994, %v3992
        %v4057 = vpack.c.b16 %v3997, %v3995
        %v4058 = vpack.c.b16 %v3998, %v3996
        %v4059 = vpack.c.b16 %v4001, %v3999
        %v4060 = vpack.c.b16 %v4002, %v4000
        %v4061 = vpack.c.b16 %v4005, %v4003
        %v4062 = vpack.c.b16 %v4006, %v4004
        %v4063 = vpack.c.b16 %v4009, %v4007
        %v4064 = vpack.c.b16 %v4010, %v4008
        %v4065 = vpack.c.b16 %v4013, %v4011
        %v4066 = vpack.c.b16 %v4014, %v4012
        %v4067 = vpack.c.b16 %v4017, %v4015
        %v4068 = vpack.c.b16 %v4018, %v4016
        %v4069 = vpack.c.b16 %v4021, %v4019
        %v4070 = vpack.c.b16 %v4022, %v4020
        %v4071 = vpack.c.b16 %v4025, %v4023
        %v4072 = vpack.c.b16 %v4026, %v4024
        %v4073 = vpack.c.b16 %v4029, %v4027
        %v4074 = vpack.c.b16 %v4030, %v4028
        %v4075 = vpack.c.b16 %v4033, %v4031
        %v4076 = vpack.c.b16 %v4034, %v4032
        %v4077 = vpack.c.b16 %v4037, %v4035
        %v4078 = vpack.c.b16 %v4038, %v4036
        %v4079 = vpack.c.b16 %v4041, %v4039
        %v4080 = vpack.c.b16 %v4042, %v4040
        %v4081 = vpack.c.b16 %v4045, %v4043
        %v4082 = vpack.c.b16 %v4046, %v4044
        %v4083 = vpack.c.b16 %v4049, %v4047
        %v4084 = vpack.c.b16 %v4050, %v4048
        %v4085 = vpack.c.b16 %v4053, %v4051
        %v4086 = vpack.c.b16 %v4054, %v4052
        %4119 = vmatprep.subr.bf16.mxu0 %v4070
        %4120 = vmatpush1.bf16.msra.mxu0 %v4069
        %4121 = vmatprep.subr.bf16.mxu0 %v4068
        %4122 = vmatpush1.bf16.msra.mxu0 %v4067
        %4123 = vmatprep.subr.bf16.mxu0 %v4066
        %4124 = vmatpush1.bf16.msra.mxu0 %v4065
        %4125 = vmatprep.subr.bf16.mxu0 %v4064
        %4126 = vmatpush1.bf16.msra.mxu0 %v4063
        %4127 = vmatprep.subr.bf16.mxu0 %v4062
        %4128 = vmatpush1.bf16.msra.mxu0 %v4061
        %4129 = vmatprep.subr.bf16.mxu0 %v4060
        %4130 = vmatpush1.bf16.msra.mxu0 %v4059
        %4131 = vmatprep.subr.bf16.mxu0 %v4058
        %4132 = vmatpush1.bf16.msra.mxu0 %v4057
        %4133 = vmatprep.subr.bf16.mxu0 %v4056
        %4134 = vmatpush1.bf16.msra.mxu0 %v4055
        %4135 = vmatprep.subr.bf16.mxu0 %v4086
        %4136 = vmatpush2.bf16.msra.mxu0 %v4085
        %4137 = vmatprep.subr.bf16.mxu0 %v4084
        %4138 = vmatpush2.bf16.msra.mxu0 %v4083
        %4139 = vmatprep.subr.bf16.mxu0 %v4082
        %4140 = vmatpush2.bf16.msra.mxu0 %v4081
        %4141 = vmatprep.subr.bf16.mxu0 %v4080
        %4142 = vmatpush2.bf16.msra.mxu0 %v4079
        %4143 = vmatprep.subr.bf16.mxu0 %v4078
        %4144 = vmatpush2.bf16.msra.mxu0 %v4077
        %4145 = vmatprep.subr.bf16.mxu0 %v4076
        %4146 = vmatpush2.bf16.msra.mxu0 %v4075
        %4147 = vmatprep.subr.bf16.mxu0 %v4074
        %4148 = vmatpush2.bf16.msra.mxu0 %v4073
        %4149 = vmatprep.subr.bf16.mxu0 %v4072
        %4150 = vmatpush2.bf16.msra.mxu0 %v4071
        %4151 = vmatprep.mubr.bf16.mxu0 %v3956
        %4152 = vmatmul.mubr.bf16.gmra.mxu0 %v3944
        %v4153 = vpop.f32.mrf.mxu0
        %v4154 = vadd.f32 0.0, %v4153
        %v4155 = vpop.f32.mrf.mxu0
        %v4156 = vadd.f32 0.0, %v4155
        %v4157 = vpop.f32.mrf.mxu0
        %v4158 = vadd.f32 0.0, %v4157
        %v4159 = vpop.f32.mrf.mxu0
        %v4160 = vadd.f32 0.0, %v4159
        %4161 = vdwg.mxu0
        %v4194 = vunpack.c.l.b16 %v3868
        %v4195 = vunpack.c.h.b16 %v3868
        %v4196 = vunpack.c.l.b16 %v3869
        %v4197 = vunpack.c.h.b16 %v3869
        %v4198 = vunpack.c.l.b16 %v3870
        %v4199 = vunpack.c.h.b16 %v3870
        %v4200 = vunpack.c.l.b16 %v3871
        %v4201 = vunpack.c.h.b16 %v3871
        %v4202 = vunpack.c.l.b16 %v3872
        %v4203 = vunpack.c.h.b16 %v3872
        %v4204 = vunpack.c.l.b16 %v3873
        %v4205 = vunpack.c.h.b16 %v3873
        %v4206 = vunpack.c.l.b16 %v3874
        %v4207 = vunpack.c.h.b16 %v3874
        %v4208 = vunpack.c.l.b16 %v3875
        %v4209 = vunpack.c.h.b16 %v3875
        %v4210 = vunpack.c.l.b16 %v3876
        %v4211 = vunpack.c.h.b16 %v3876
        %v4212 = vunpack.c.l.b16 %v3877
        %v4213 = vunpack.c.h.b16 %v3877
        %v4214 = vunpack.c.l.b16 %v3878
        %v4215 = vunpack.c.h.b16 %v3878
        %v4216 = vunpack.c.l.b16 %v3879
        %v4217 = vunpack.c.h.b16 %v3879
        %v4218 = vunpack.c.l.b16 %v3880
        %v4219 = vunpack.c.h.b16 %v3880
        %v4220 = vunpack.c.l.b16 %v3881
        %v4221 = vunpack.c.h.b16 %v3881
        %v4222 = vunpack.c.l.b16 %v3882
        %v4223 = vunpack.c.h.b16 %v3882
        %v4224 = vunpack.c.l.b16 %v3883
        %v4225 = vunpack.c.h.b16 %v3883
        %v4226 = vunpack.c.l.b16 %v3884
        %v4227 = vunpack.c.h.b16 %v3884
        %v4228 = vunpack.c.l.b16 %v3885
        %v4229 = vunpack.c.h.b16 %v3885
        %v4230 = vunpack.c.l.b16 %v3886
        %v4231 = vunpack.c.h.b16 %v3886
        %v4232 = vunpack.c.l.b16 %v3887
        %v4233 = vunpack.c.h.b16 %v3887
        %v4234 = vunpack.c.l.b16 %v3888
        %v4235 = vunpack.c.h.b16 %v3888
        %v4236 = vunpack.c.l.b16 %v3889
        %v4237 = vunpack.c.h.b16 %v3889
        %v4238 = vunpack.c.l.b16 %v3890
        %v4239 = vunpack.c.h.b16 %v3890
        %v4240 = vunpack.c.l.b16 %v3891
        %v4241 = vunpack.c.h.b16 %v3891
        %v4242 = vunpack.c.l.b16 %v3892
        %v4243 = vunpack.c.h.b16 %v3892
        %v4244 = vunpack.c.l.b16 %v3893
        %v4245 = vunpack.c.h.b16 %v3893
        %v4246 = vunpack.c.l.b16 %v3894
        %v4247 = vunpack.c.h.b16 %v3894
        %v4248 = vunpack.c.l.b16 %v3895
        %v4249 = vunpack.c.h.b16 %v3895
        %v4250 = vunpack.c.l.b16 %v3896
        %v4251 = vunpack.c.h.b16 %v3896
        %v4252 = vunpack.c.l.b16 %v3897
        %v4253 = vunpack.c.h.b16 %v3897
        %v4254 = vunpack.c.l.b16 %v3898
        %v4255 = vunpack.c.h.b16 %v3898
        %v4256 = vunpack.c.l.b16 %v3899
        %v4257 = vunpack.c.h.b16 %v3899
        %v4258 = vpack.c.b16 %v4196, %v4194
        %v4259 = vpack.c.b16 %v4197, %v4195
        %v4260 = vpack.c.b16 %v4200, %v4198
        %v4261 = vpack.c.b16 %v4201, %v4199
        %v4262 = vpack.c.b16 %v4204, %v4202
        %v4263 = vpack.c.b16 %v4205, %v4203
        %v4264 = vpack.c.b16 %v4208, %v4206
        %v4265 = vpack.c.b16 %v4209, %v4207
        %v4266 = vpack.c.b16 %v4212, %v4210
        %v4267 = vpack.c.b16 %v4213, %v4211
        %v4268 = vpack.c.b16 %v4216, %v4214
        %v4269 = vpack.c.b16 %v4217, %v4215
        %v4270 = vpack.c.b16 %v4220, %v4218
        %v4271 = vpack.c.b16 %v4221, %v4219
        %v4272 = vpack.c.b16 %v4224, %v4222
        %v4273 = vpack.c.b16 %v4225, %v4223
        %v4274 = vpack.c.b16 %v4228, %v4226
        %v4275 = vpack.c.b16 %v4229, %v4227
        %v4276 = vpack.c.b16 %v4232, %v4230
        %v4277 = vpack.c.b16 %v4233, %v4231
        %v4278 = vpack.c.b16 %v4236, %v4234
        %v4279 = vpack.c.b16 %v4237, %v4235
        %v4280 = vpack.c.b16 %v4240, %v4238
        %v4281 = vpack.c.b16 %v4241, %v4239
        %v4282 = vpack.c.b16 %v4244, %v4242
        %v4283 = vpack.c.b16 %v4245, %v4243
        %v4284 = vpack.c.b16 %v4248, %v4246
        %v4285 = vpack.c.b16 %v4249, %v4247
        %v4286 = vpack.c.b16 %v4252, %v4250
        %v4287 = vpack.c.b16 %v4253, %v4251
        %v4288 = vpack.c.b16 %v4256, %v4254
        %v4289 = vpack.c.b16 %v4257, %v4255
        %4322 = vmatprep.subr.bf16.mxu0 %v4273
        %4323 = vmatpush1.bf16.msra.mxu0 %v4272
        %4324 = vmatprep.subr.bf16.mxu0 %v4271
        %4325 = vmatpush1.bf16.msra.mxu0 %v4270
        %4326 = vmatprep.subr.bf16.mxu0 %v4269
        %4327 = vmatpush1.bf16.msra.mxu0 %v4268
        %4328 = vmatprep.subr.bf16.mxu0 %v4267
        %4329 = vmatpush1.bf16.msra.mxu0 %v4266
        %4330 = vmatprep.subr.bf16.mxu0 %v4265
        %4331 = vmatpush1.bf16.msra.mxu0 %v4264
        %4332 = vmatprep.subr.bf16.mxu0 %v4263
        %4333 = vmatpush1.bf16.msra.mxu0 %v4262
        %4334 = vmatprep.subr.bf16.mxu0 %v4261
        %4335 = vmatpush1.bf16.msra.mxu0 %v4260
        %4336 = vmatprep.subr.bf16.mxu0 %v4259
        %4337 = vmatpush1.bf16.msra.mxu0 %v4258
        %4338 = vmatprep.subr.bf16.mxu0 %v4289
        %4339 = vmatpush2.bf16.msra.mxu0 %v4288
        %4340 = vmatprep.subr.bf16.mxu0 %v4287
        %4341 = vmatpush2.bf16.msra.mxu0 %v4286
        %4342 = vmatprep.subr.bf16.mxu0 %v4285
        %4343 = vmatpush2.bf16.msra.mxu0 %v4284
        %4344 = vmatprep.subr.bf16.mxu0 %v4283
        %4345 = vmatpush2.bf16.msra.mxu0 %v4282
        %4346 = vmatprep.subr.bf16.mxu0 %v4281
        %4347 = vmatpush2.bf16.msra.mxu0 %v4280
        %4348 = vmatprep.subr.bf16.mxu0 %v4279
        %4349 = vmatpush2.bf16.msra.mxu0 %v4278
        %4350 = vmatprep.subr.bf16.mxu0 %v4277
        %4351 = vmatpush2.bf16.msra.mxu0 %v4276
        %4352 = vmatprep.subr.bf16.mxu0 %v4275
        %4353 = vmatpush2.bf16.msra.mxu0 %v4274
        %4354 = vmatprep.mubr.bf16.mxu0 %v3865
        %4355 = vmatmul.mubr.bf16.gmra.mxu0 %v3864
        %v4356 = vpop.f32.mrf.mxu0
        %v4357 = vadd.f32 %v4154, %v4356
        %v4358 = vpop.f32.mrf.mxu0
        %v4359 = vadd.f32 %v4156, %v4358
        %v4360 = vpop.f32.mrf.mxu0
        %v4361 = vadd.f32 %v4158, %v4360
        %v4362 = vpop.f32.mrf.mxu0
        %v4363 = vadd.f32 %v4160, %v4362
        %4364 = vdwg.mxu0
        %s4365 = scalar_lea.vmem [#allocation12], 512
        %v4366 = vld [vmem:[%s4365] sm:$0xff]
        %v4367 = vld [vmem:[%s4365 + $0x8] sm:$0xff]
        %v4368 = vld [vmem:[%s4365 + $0x10] sm:$0xff]
        %v4369 = vld [vmem:[%s4365 + $0x18] sm:$0xff]
        %v4370 = vld [vmem:[%s4365 + $0x20] sm:$0xff]
        %v4371 = vld [vmem:[%s4365 + $0x28] sm:$0xff]
        %v4372 = vld [vmem:[%s4365 + $0x30] sm:$0xff]
        %v4373 = vld [vmem:[%s4365 + $0x38] sm:$0xff]
        %v4374 = vld [vmem:[%s4365 + $0x40] sm:$0xff]
        %v4375 = vld [vmem:[%s4365 + $0x48] sm:$0xff]
        %v4376 = vld [vmem:[%s4365 + $0x50] sm:$0xff]
        %v4377 = vld [vmem:[%s4365 + $0x58] sm:$0xff]
        %v4378 = vld [vmem:[%s4365 + $0x60] sm:$0xff]
        %v4379 = vld [vmem:[%s4365 + $0x68] sm:$0xff]
        %v4380 = vld [vmem:[%s4365 + $0x70] sm:$0xff]
        %v4381 = vld [vmem:[%s4365 + $0x78] sm:$0xff]
        %v4382 = vld [vmem:[%s4365 + $0x80] sm:$0xff]
        %v4383 = vld [vmem:[%s4365 + $0x88] sm:$0xff]
        %v4384 = vld [vmem:[%s4365 + $0x90] sm:$0xff]
        %v4385 = vld [vmem:[%s4365 + $0x98] sm:$0xff]
        %v4386 = vld [vmem:[%s4365 + $0xa0] sm:$0xff]
        %v4387 = vld [vmem:[%s4365 + $0xa8] sm:$0xff]
        %v4388 = vld [vmem:[%s4365 + $0xb0] sm:$0xff]
        %v4389 = vld [vmem:[%s4365 + $0xb8] sm:$0xff]
        %v4390 = vld [vmem:[%s4365 + $0xc0] sm:$0xff]
        %v4391 = vld [vmem:[%s4365 + $0xc8] sm:$0xff]
        %v4392 = vld [vmem:[%s4365 + $0xd0] sm:$0xff]
        %v4393 = vld [vmem:[%s4365 + $0xd8] sm:$0xff]
        %v4394 = vld [vmem:[%s4365 + $0xe0] sm:$0xff]
        %v4395 = vld [vmem:[%s4365 + $0xe8] sm:$0xff]
        %v4396 = vld [vmem:[%s4365 + $0xf0] sm:$0xff]
        %v4397 = vld [vmem:[%s4365 + $0xf8] sm:$0xff]
        %v4402 = vrot.slane %v3864, 1
        %v4403 = vrot.slane %v3866, 1
        %v4404 = vsel %vm2377, %v4402, %v4403
        %v4405 = vrot.slane %v3865, 1
        %v4406 = vrot.slane %v3867, 1
        %v4407 = vsel %vm2377, %v4405, %v4406
        %v4442 = vunpack.c.l.b16 %v4366
        %v4443 = vunpack.c.h.b16 %v4366
        %v4444 = vunpack.c.l.b16 %v4367
        %v4445 = vunpack.c.h.b16 %v4367
        %v4446 = vunpack.c.l.b16 %v4368
        %v4447 = vunpack.c.h.b16 %v4368
        %v4448 = vunpack.c.l.b16 %v4369
        %v4449 = vunpack.c.h.b16 %v4369
        %v4450 = vunpack.c.l.b16 %v4370
        %v4451 = vunpack.c.h.b16 %v4370
        %v4452 = vunpack.c.l.b16 %v4371
        %v4453 = vunpack.c.h.b16 %v4371
        %v4454 = vunpack.c.l.b16 %v4372
        %v4455 = vunpack.c.h.b16 %v4372
        %v4456 = vunpack.c.l.b16 %v4373
        %v4457 = vunpack.c.h.b16 %v4373
        %v4458 = vunpack.c.l.b16 %v4374
        %v4459 = vunpack.c.h.b16 %v4374
        %v4460 = vunpack.c.l.b16 %v4375
        %v4461 = vunpack.c.h.b16 %v4375
        %v4462 = vunpack.c.l.b16 %v4376
        %v4463 = vunpack.c.h.b16 %v4376
        %v4464 = vunpack.c.l.b16 %v4377
        %v4465 = vunpack.c.h.b16 %v4377
        %v4466 = vunpack.c.l.b16 %v4378
        %v4467 = vunpack.c.h.b16 %v4378
        %v4468 = vunpack.c.l.b16 %v4379
        %v4469 = vunpack.c.h.b16 %v4379
        %v4470 = vunpack.c.l.b16 %v4380
        %v4471 = vunpack.c.h.b16 %v4380
        %v4472 = vunpack.c.l.b16 %v4381
        %v4473 = vunpack.c.h.b16 %v4381
        %v4474 = vunpack.c.l.b16 %v4382
        %v4475 = vunpack.c.h.b16 %v4382
        %v4476 = vunpack.c.l.b16 %v4383
        %v4477 = vunpack.c.h.b16 %v4383
        %v4478 = vunpack.c.l.b16 %v4384
        %v4479 = vunpack.c.h.b16 %v4384
        %v4480 = vunpack.c.l.b16 %v4385
        %v4481 = vunpack.c.h.b16 %v4385
        %v4482 = vunpack.c.l.b16 %v4386
        %v4483 = vunpack.c.h.b16 %v4386
        %v4484 = vunpack.c.l.b16 %v4387
        %v4485 = vunpack.c.h.b16 %v4387
        %v4486 = vunpack.c.l.b16 %v4388
        %v4487 = vunpack.c.h.b16 %v4388
        %v4488 = vunpack.c.l.b16 %v4389
        %v4489 = vunpack.c.h.b16 %v4389
        %v4490 = vunpack.c.l.b16 %v4390
        %v4491 = vunpack.c.h.b16 %v4390
        %v4492 = vunpack.c.l.b16 %v4391
        %v4493 = vunpack.c.h.b16 %v4391
        %v4494 = vunpack.c.l.b16 %v4392
        %v4495 = vunpack.c.h.b16 %v4392
        %v4496 = vunpack.c.l.b16 %v4393
        %v4497 = vunpack.c.h.b16 %v4393
        %v4498 = vunpack.c.l.b16 %v4394
        %v4499 = vunpack.c.h.b16 %v4394
        %v4500 = vunpack.c.l.b16 %v4395
        %v4501 = vunpack.c.h.b16 %v4395
        %v4502 = vunpack.c.l.b16 %v4396
        %v4503 = vunpack.c.h.b16 %v4396
        %v4504 = vunpack.c.l.b16 %v4397
        %v4505 = vunpack.c.h.b16 %v4397
        %v4506 = vpack.c.b16 %v4444, %v4442
        %v4507 = vpack.c.b16 %v4445, %v4443
        %v4508 = vpack.c.b16 %v4448, %v4446
        %v4509 = vpack.c.b16 %v4449, %v4447
        %v4510 = vpack.c.b16 %v4452, %v4450
        %v4511 = vpack.c.b16 %v4453, %v4451
        %v4512 = vpack.c.b16 %v4456, %v4454
        %v4513 = vpack.c.b16 %v4457, %v4455
        %v4514 = vpack.c.b16 %v4460, %v4458
        %v4515 = vpack.c.b16 %v4461, %v4459
        %v4516 = vpack.c.b16 %v4464, %v4462
        %v4517 = vpack.c.b16 %v4465, %v4463
        %v4518 = vpack.c.b16 %v4468, %v4466
        %v4519 = vpack.c.b16 %v4469, %v4467
        %v4520 = vpack.c.b16 %v4472, %v4470
        %v4521 = vpack.c.b16 %v4473, %v4471
        %v4522 = vpack.c.b16 %v4476, %v4474
        %v4523 = vpack.c.b16 %v4477, %v4475
        %v4524 = vpack.c.b16 %v4480, %v4478
        %v4525 = vpack.c.b16 %v4481, %v4479
        %v4526 = vpack.c.b16 %v4484, %v4482
        %v4527 = vpack.c.b16 %v4485, %v4483
        %v4528 = vpack.c.b16 %v4488, %v4486
        %v4529 = vpack.c.b16 %v4489, %v4487
        %v4530 = vpack.c.b16 %v4492, %v4490
        %v4531 = vpack.c.b16 %v4493, %v4491
        %v4532 = vpack.c.b16 %v4496, %v4494
        %v4533 = vpack.c.b16 %v4497, %v4495
        %v4534 = vpack.c.b16 %v4500, %v4498
        %v4535 = vpack.c.b16 %v4501, %v4499
        %v4536 = vpack.c.b16 %v4504, %v4502
        %v4537 = vpack.c.b16 %v4505, %v4503
        %4570 = vmatprep.subr.bf16.mxu0 %v4521
        %4571 = vmatpush1.bf16.msra.mxu0 %v4520
        %4572 = vmatprep.subr.bf16.mxu0 %v4519
        %4573 = vmatpush1.bf16.msra.mxu0 %v4518
        %4574 = vmatprep.subr.bf16.mxu0 %v4517
        %4575 = vmatpush1.bf16.msra.mxu0 %v4516
        %4576 = vmatprep.subr.bf16.mxu0 %v4515
        %4577 = vmatpush1.bf16.msra.mxu0 %v4514
        %4578 = vmatprep.subr.bf16.mxu0 %v4513
        %4579 = vmatpush1.bf16.msra.mxu0 %v4512
        %4580 = vmatprep.subr.bf16.mxu0 %v4511
        %4581 = vmatpush1.bf16.msra.mxu0 %v4510
        %4582 = vmatprep.subr.bf16.mxu0 %v4509
        %4583 = vmatpush1.bf16.msra.mxu0 %v4508
        %4584 = vmatprep.subr.bf16.mxu0 %v4507
        %4585 = vmatpush1.bf16.msra.mxu0 %v4506
        %4586 = vmatprep.subr.bf16.mxu0 %v4537
        %4587 = vmatpush2.bf16.msra.mxu0 %v4536
        %4588 = vmatprep.subr.bf16.mxu0 %v4535
        %4589 = vmatpush2.bf16.msra.mxu0 %v4534
        %4590 = vmatprep.subr.bf16.mxu0 %v4533
        %4591 = vmatpush2.bf16.msra.mxu0 %v4532
        %4592 = vmatprep.subr.bf16.mxu0 %v4531
        %4593 = vmatpush2.bf16.msra.mxu0 %v4530
        %4594 = vmatprep.subr.bf16.mxu0 %v4529
        %4595 = vmatpush2.bf16.msra.mxu0 %v4528
        %4596 = vmatprep.subr.bf16.mxu0 %v4527
        %4597 = vmatpush2.bf16.msra.mxu0 %v4526
        %4598 = vmatprep.subr.bf16.mxu0 %v4525
        %4599 = vmatpush2.bf16.msra.mxu0 %v4524
        %4600 = vmatprep.subr.bf16.mxu0 %v4523
        %4601 = vmatpush2.bf16.msra.mxu0 %v4522
        %4602 = vmatprep.mubr.bf16.mxu0 %v4407
        %4603 = vmatmul.mubr.bf16.gmra.mxu0 %v4404
        %v4604 = vpop.f32.mrf.mxu0
        %v4605 = vadd.f32 0.0, %v4604
        %v4606 = vpop.f32.mrf.mxu0
        %v4607 = vadd.f32 0.0, %v4606
        %v4608 = vpop.f32.mrf.mxu0
        %v4609 = vadd.f32 0.0, %v4608
        %v4610 = vpop.f32.mrf.mxu0
        %v4611 = vadd.f32 0.0, %v4610
        %4612 = vdwg.mxu0
        %v4613 = vadd.f32 %v4357, %v4605
        %v4614 = vadd.f32 %v4359, %v4607
        %v4615 = vadd.f32 %v4361, %v4609
        %v4616 = vadd.f32 %v4363, %v4611
        %v4617 = vld [vmem:[#allocation13] sm:$0x3]
        %v4619 = vlaneseq
        %v4620 = vshrl.u32 %v4619, 7
        %v4621 = vsub.s32 0, %v4620
        %v4622 = vrot.slane %v4617, %v4621
        %v4623 = vlaneseq
        %v4624 = vshrl.u32 %v4623, 7
        %v4625 = vsub.s32 1, %v4624
        %v4626 = vrot.slane %v4617, %v4625
        %v4629 = vadd.f32 %v4613, %v4622
        %v4630 = vadd.f32 %v4614, %v4626
        %v4631 = vadd.f32 %v4615, %v4622
        %v4632 = vadd.f32 %v4616, %v4626
        %v4633 = vmul.f32 %v4629, 0.5
        %v4634 = vmul.f32 %v4630, 0.5
        %v4635 = vmul.f32 %v4631, 0.5
        %v4636 = vmul.f32 %v4632, 0.5
        %v4637 = vmul.f32 %v4629, 0.70710677
        %v4638 = vmul.f32 %v4630, 0.70710677
        %v4639 = vmul.f32 %v4631, 0.70710677
        %v4640 = vmul.f32 %v4632, 0.70710677
        %v4641 = vand.u32 2147483647, %v4637
        %v4642 = vand.u32 2147483647, %v4638
        %v4643 = vand.u32 2147483647, %v4639
        %v4644 = vand.u32 2147483647, %v4640
        %v4645 = vmul.f32 %v4641, 0.3275911
        %v4646 = vmul.f32 %v4642, 0.3275911
        %v4647 = vmul.f32 %v4643, 0.3275911
        %v4648 = vmul.f32 %v4644, 0.3275911
        %v4649 = vadd.f32 %v4645, 1.0
        %v4650 = vadd.f32 %v4646, 1.0
        %v4651 = vadd.f32 %v4647, 1.0
        %v4652 = vadd.f32 %v4648, 1.0
        %v4653 = vrcp.pop %v4649
        %v4654 = vrcp.pop %v4650
        %v4655 = vrcp.pop %v4651
        %v4656 = vrcp.pop %v4652
        %v4657 = vmul.f32 %v4653, 1.0614054
        %v4658 = vmul.f32 %v4654, 1.0614054
        %v4659 = vmul.f32 %v4655, 1.0614054
        %v4660 = vmul.f32 %v4656, 1.0614054
        %v4661 = vadd.f32 %v4657, -1.4531521
        %v4662 = vadd.f32 %v4658, -1.4531521
        %v4663 = vadd.f32 %v4659, -1.4531521
        %v4664 = vadd.f32 %v4660, -1.4531521
        %v4665 = vmul.f32 %v4661, %v4653
        %v4666 = vmul.f32 %v4662, %v4654
        %v4667 = vmul.f32 %v4663, %v4655
        %v4668 = vmul.f32 %v4664, %v4656
        %v4669 = vadd.f32 %v4665, 1.4214138
        %v4670 = vadd.f32 %v4666, 1.4214138
        %v4671 = vadd.f32 %v4667, 1.4214138
        %v4672 = vadd.f32 %v4668, 1.4214138
        %v4673 = vmul.f32 %v4669, %v4653
        %v4674 = vmul.f32 %v4670, %v4654
        %v4675 = vmul.f32 %v4671, %v4655
        %v4676 = vmul.f32 %v4672, %v4656
        %v4677 = vadd.f32 %v4673, -0.28449672
        %v4678 = vadd.f32 %v4674, -0.28449672
        %v4679 = vadd.f32 %v4675, -0.28449672
        %v4680 = vadd.f32 %v4676, -0.28449672
        %v4681 = vmul.f32 %v4677, %v4653
        %v4682 = vmul.f32 %v4678, %v4654
        %v4683 = vmul.f32 %v4679, %v4655
        %v4684 = vmul.f32 %v4680, %v4656
        %v4685 = vadd.f32 %v4681, 0.2548296
        %v4686 = vadd.f32 %v4682, 0.2548296
        %v4687 = vadd.f32 %v4683, 0.2548296
        %v4688 = vadd.f32 %v4684, 0.2548296
        %v4689 = vmul.f32 %v4685, %v4653
        %v4690 = vmul.f32 %v4686, %v4654
        %v4691 = vmul.f32 %v4687, %v4655
        %v4692 = vmul.f32 %v4688, %v4656
        %v4693 = vsub.f32 0.0, %v4641
        %v4694 = vsub.f32 0.0, %v4642
        %v4695 = vsub.f32 0.0, %v4643
        %v4696 = vsub.f32 0.0, %v4644
        %v4697 = vmul.f32 %v4693, %v4641
        %v4698 = vmul.f32 %v4694, %v4642
        %v4699 = vmul.f32 %v4695, %v4643
        %v4700 = vmul.f32 %v4696, %v4644
        %v4701 = vmul.f32 %v4697, 1.442695
        %v4702 = vpow.pop %v4701
        %v4703 = vmul.f32 %v4698, 1.442695
        %v4704 = vpow.pop %v4703
        %v4705 = vmul.f32 %v4699, 1.442695
        %v4706 = vpow.pop %v4705
        %v4707 = vmul.f32 %v4700, 1.442695
        %v4708 = vpow.pop %v4707
        %v4709 = vmul.f32 %v4689, %v4702
        %v4710 = vmul.f32 %v4690, %v4704
        %v4711 = vmul.f32 %v4691, %v4706
        %v4712 = vmul.f32 %v4692, %v4708
        %v4713 = vsub.f32 1.0, %v4709
        %v4714 = vsub.f32 1.0, %v4710
        %v4715 = vsub.f32 1.0, %v4711
        %v4716 = vsub.f32 1.0, %v4712
        %vm4717 = vcmp.ge.f32.partialorder %v4637, 0.0
        %vm4718 = vcmp.ge.f32.partialorder %v4638, 0.0
        %vm4719 = vcmp.ge.f32.partialorder %v4639, 0.0
        %vm4720 = vcmp.ge.f32.partialorder %v4640, 0.0
        %v4721 = vsub.f32 0.0, %v4713
        %v4722 = vsub.f32 0.0, %v4714
        %v4723 = vsub.f32 0.0, %v4715
        %v4724 = vsub.f32 0.0, %v4716
        %v4725 = vsel %vm4717, %v4713, %v4721
        %v4726 = vsel %vm4718, %v4714, %v4722
        %v4727 = vsel %vm4719, %v4715, %v4723
        %v4728 = vsel %vm4720, %v4716, %v4724
        %v4729 = vadd.f32 %v4725, 1.0
        %v4730 = vadd.f32 %v4726, 1.0
        %v4731 = vadd.f32 %v4727, 1.0
        %v4732 = vadd.f32 %v4728, 1.0
        %v4733 = vmul.f32 %v4633, %v4729
        %v4734 = vmul.f32 %v4634, %v4730
        %v4735 = vmul.f32 %v4635, %v4731
        %v4736 = vmul.f32 %v4636, %v4732
        %v4737 = vpack.c.bf16 %v4735, %v4733
        %v4738 = vpack.c.bf16 %v4736, %v4734
        %v4739 = vld [vmem:[%s11] sm:$0xf]
        %vm4740 = vcmask 130048
        %v4742 = vsel %vm4740, %v4739, 0
        %4744 = vmatprep.subr.bf16.mxu0 0
        %4745 = vmatpush1.bf16.msra.mxu0 0
        %4746 = vmatprep.subr.bf16.mxu0 0
        %4747 = vmatpush1.bf16.msra.mxu0 0
        %4748 = vmatprep.subr.bf16.mxu0 0
        %4749 = vmatpush1.bf16.msra.mxu0 0
        %4750 = vmatprep.subr.bf16.mxu0 0
        %4751 = vmatpush1.bf16.msra.mxu0 0
        %4752 = vmatprep.subr.bf16.mxu0 0
        %4753 = vmatpush1.bf16.msra.mxu0 0
        %4754 = vmatprep.subr.bf16.mxu0 0
        %4755 = vmatpush1.bf16.msra.mxu0 0
        %4756 = vmatprep.subr.bf16.mxu0 0
        %4757 = vmatpush1.bf16.msra.mxu0 0
        %4758 = vmatprep.subr.bf16.mxu0 %v4738
        %4759 = vmatpush1.bf16.msra.mxu0 %v4737
        %4760 = vmatprep.subr.bf16.mxu0 0
        %4761 = vmatpush2.bf16.msra.mxu0 0
        %4762 = vmatprep.subr.bf16.mxu0 0
        %4763 = vmatpush2.bf16.msra.mxu0 0
        %4764 = vmatprep.subr.bf16.mxu0 0
        %4765 = vmatpush2.bf16.msra.mxu0 0
        %4766 = vmatprep.subr.bf16.mxu0 0
        %4767 = vmatpush2.bf16.msra.mxu0 0
        %4768 = vmatprep.subr.bf16.mxu0 0
        %4769 = vmatpush2.bf16.msra.mxu0 0
        %4770 = vmatprep.subr.bf16.mxu0 0
        %4771 = vmatpush2.bf16.msra.mxu0 0
        %4772 = vmatprep.subr.bf16.mxu0 0
        %4773 = vmatpush2.bf16.msra.mxu0 0
        %4774 = vmatprep.subr.bf16.mxu0 0
        %4775 = vmatpush2.bf16.msra.mxu0 0
        %4776 = vmatprep.mubr.bf16.mxu0 0
        %4777 = vmatmul.mubr.bf16.gmra.mxu0 %v4742
        %v4778 = vpop.f32.mrf.mxu0
        %v4779 = vadd.f32 0.0, %v4778
        %v4780 = vpop.f32.mrf.mxu0
        %v4781 = vadd.f32 0.0, %v4780
        %v4782 = vpop.f32.mrf.mxu0
        %v4783 = vpop.f32.mrf.mxu0
        %4784 = vdwg.mxu0
        %v4785 = vpack.c.bf16 %v4779, %v4779
        %v4786 = vpack.c.bf16 %v4781, %v4781
        %v4787 = vld [vmem:[%s12] sm:$0xf]
        %v4788 = vld [vmem:[%s12 + $0x4] sm:$0xf]
        %v4789 = vld [vmem:[%s12 + $0x8] sm:$0xf]
        %v4790 = vld [vmem:[%s12 + $0xc] sm:$0xf]
        %v4791 = vld [vmem:[%s12 + $0x10] sm:$0xf]
        %v4792 = vld [vmem:[%s12 + $0x14] sm:$0xf]
        %v4793 = vld [vmem:[%s12 + $0x18] sm:$0xf]
        %v4794 = vld [vmem:[%s12 + $0x1c] sm:$0xf]
        %v4795 = vld [vmem:[%s12 + $0x20] sm:$0xf]
        %v4796 = vld [vmem:[%s12 + $0x24] sm:$0xf]
        %v4797 = vld [vmem:[%s12 + $0x28] sm:$0xf]
        %v4798 = vld [vmem:[%s12 + $0x2c] sm:$0xf]
        %v4799 = vld [vmem:[%s12 + $0x30] sm:$0xf]
        %v4800 = vld [vmem:[%s12 + $0x34] sm:$0xf]
        %v4801 = vld [vmem:[%s12 + $0x38] sm:$0xf]
        %v4802 = vld [vmem:[%s12 + $0x3c] sm:$0xf]
        %v4803 = vld [vmem:[%s12 + $0x40] sm:$0xf]
        %v4804 = vld [vmem:[%s12 + $0x44] sm:$0xf]
        %v4805 = vld [vmem:[%s12 + $0x48] sm:$0xf]
        %v4806 = vld [vmem:[%s12 + $0x4c] sm:$0xf]
        %v4807 = vld [vmem:[%s12 + $0x50] sm:$0xf]
        %v4808 = vld [vmem:[%s12 + $0x54] sm:$0xf]
        %v4809 = vld [vmem:[%s12 + $0x58] sm:$0xf]
        %v4810 = vld [vmem:[%s12 + $0x5c] sm:$0xf]
        %v4811 = vld [vmem:[%s12 + $0x60] sm:$0xf]
        %v4812 = vld [vmem:[%s12 + $0x64] sm:$0xf]
        %v4813 = vld [vmem:[%s12 + $0x68] sm:$0xf]
        %v4814 = vld [vmem:[%s12 + $0x6c] sm:$0xf]
        %v4815 = vld [vmem:[%s12 + $0x70] sm:$0xf]
        %v4816 = vld [vmem:[%s12 + $0x74] sm:$0xf]
        %v4817 = vld [vmem:[%s12 + $0x78] sm:$0xf]
        %v4818 = vld [vmem:[%s12 + $0x7c] sm:$0xf]
        %s4819 = scalar_lea.vmem %s11, 4
        %v4820 = vld [vmem:[%s4819] sm:$0xf]
        %v4822 = vsel %vm4740, %v4820, 0
        %4824 = vmatprep.subr.bf16.mxu0 0
        %4825 = vmatpush1.bf16.msra.mxu0 0
        %4826 = vmatprep.subr.bf16.mxu0 0
        %4827 = vmatpush1.bf16.msra.mxu0 0
        %4828 = vmatprep.subr.bf16.mxu0 0
        %4829 = vmatpush1.bf16.msra.mxu0 0
        %4830 = vmatprep.subr.bf16.mxu0 0
        %4831 = vmatpush1.bf16.msra.mxu0 0
        %4832 = vmatprep.subr.bf16.mxu0 0
        %4833 = vmatpush1.bf16.msra.mxu0 0
        %4834 = vmatprep.subr.bf16.mxu0 0
        %4835 = vmatpush1.bf16.msra.mxu0 0
        %4836 = vmatprep.subr.bf16.mxu0 0
        %4837 = vmatpush1.bf16.msra.mxu0 0
        %4838 = vmatprep.subr.bf16.mxu0 %v4738
        %4839 = vmatpush1.bf16.msra.mxu0 %v4737
        %4840 = vmatprep.subr.bf16.mxu0 0
        %4841 = vmatpush2.bf16.msra.mxu0 0
        %4842 = vmatprep.subr.bf16.mxu0 0
        %4843 = vmatpush2.bf16.msra.mxu0 0
        %4844 = vmatprep.subr.bf16.mxu0 0
        %4845 = vmatpush2.bf16.msra.mxu0 0
        %4846 = vmatprep.subr.bf16.mxu0 0
        %4847 = vmatpush2.bf16.msra.mxu0 0
        %4848 = vmatprep.subr.bf16.mxu0 0
        %4849 = vmatpush2.bf16.msra.mxu0 0
        %4850 = vmatprep.subr.bf16.mxu0 0
        %4851 = vmatpush2.bf16.msra.mxu0 0
        %4852 = vmatprep.subr.bf16.mxu0 0
        %4853 = vmatpush2.bf16.msra.mxu0 0
        %4854 = vmatprep.subr.bf16.mxu0 0
        %4855 = vmatpush2.bf16.msra.mxu0 0
        %4856 = vmatprep.mubr.bf16.mxu0 0
        %4857 = vmatmul.mubr.bf16.gmra.mxu0 %v4822
        %v4858 = vpop.f32.mrf.mxu0
        %v4859 = vadd.f32 0.0, %v4858
        %v4860 = vpop.f32.mrf.mxu0
        %v4861 = vadd.f32 0.0, %v4860
        %v4862 = vpop.f32.mrf.mxu0
        %v4863 = vpop.f32.mrf.mxu0
        %4864 = vdwg.mxu0
        %v4865 = vpack.c.bf16 %v4859, %v4859
        %v4866 = vpack.c.bf16 %v4861, %v4861
        %s4867 = scalar_lea.vmem %s12, 128
        %v4868 = vld [vmem:[%s4867] sm:$0xf]
        %v4869 = vld [vmem:[%s4867 + $0x4] sm:$0xf]
        %v4870 = vld [vmem:[%s4867 + $0x8] sm:$0xf]
        %v4871 = vld [vmem:[%s4867 + $0xc] sm:$0xf]
        %v4872 = vld [vmem:[%s4867 + $0x10] sm:$0xf]
        %v4873 = vld [vmem:[%s4867 + $0x14] sm:$0xf]
        %v4874 = vld [vmem:[%s4867 + $0x18] sm:$0xf]
        %v4875 = vld [vmem:[%s4867 + $0x1c] sm:$0xf]
        %v4876 = vld [vmem:[%s4867 + $0x20] sm:$0xf]
        %v4877 = vld [vmem:[%s4867 + $0x24] sm:$0xf]
        %v4878 = vld [vmem:[%s4867 + $0x28] sm:$0xf]
        %v4879 = vld [vmem:[%s4867 + $0x2c] sm:$0xf]
        %v4880 = vld [vmem:[%s4867 + $0x30] sm:$0xf]
        %v4881 = vld [vmem:[%s4867 + $0x34] sm:$0xf]
        %v4882 = vld [vmem:[%s4867 + $0x38] sm:$0xf]
        %v4883 = vld [vmem:[%s4867 + $0x3c] sm:$0xf]
        %v4884 = vld [vmem:[%s4867 + $0x40] sm:$0xf]
        %v4885 = vld [vmem:[%s4867 + $0x44] sm:$0xf]
        %v4886 = vld [vmem:[%s4867 + $0x48] sm:$0xf]
        %v4887 = vld [vmem:[%s4867 + $0x4c] sm:$0xf]
        %v4888 = vld [vmem:[%s4867 + $0x50] sm:$0xf]
        %v4889 = vld [vmem:[%s4867 + $0x54] sm:$0xf]
        %v4890 = vld [vmem:[%s4867 + $0x58] sm:$0xf]
        %v4891 = vld [vmem:[%s4867 + $0x5c] sm:$0xf]
        %v4892 = vld [vmem:[%s4867 + $0x60] sm:$0xf]
        %v4893 = vld [vmem:[%s4867 + $0x64] sm:$0xf]
        %v4894 = vld [vmem:[%s4867 + $0x68] sm:$0xf]
        %v4895 = vld [vmem:[%s4867 + $0x6c] sm:$0xf]
        %v4896 = vld [vmem:[%s4867 + $0x70] sm:$0xf]
        %v4897 = vld [vmem:[%s4867 + $0x74] sm:$0xf]
        %v4898 = vld [vmem:[%s4867 + $0x78] sm:$0xf]
        %v4899 = vld [vmem:[%s4867 + $0x7c] sm:$0xf]
        %v4932 = vunpack.c.l.b16 %v4868
        %v4933 = vunpack.c.l.b16 %v4869
        %v4934 = vunpack.c.l.b16 %v4870
        %v4935 = vunpack.c.l.b16 %v4871
        %v4936 = vunpack.c.l.b16 %v4872
        %v4937 = vunpack.c.l.b16 %v4873
        %v4938 = vunpack.c.l.b16 %v4874
        %v4939 = vunpack.c.l.b16 %v4875
        %v4940 = vunpack.c.l.b16 %v4876
        %v4941 = vunpack.c.l.b16 %v4877
        %v4942 = vunpack.c.l.b16 %v4878
        %v4943 = vunpack.c.l.b16 %v4879
        %v4944 = vunpack.c.l.b16 %v4880
        %v4945 = vunpack.c.l.b16 %v4881
        %v4946 = vunpack.c.l.b16 %v4882
        %v4947 = vunpack.c.l.b16 %v4883
        %v4948 = vunpack.c.l.b16 %v4884
        %v4949 = vunpack.c.l.b16 %v4885
        %v4950 = vunpack.c.l.b16 %v4886
        %v4951 = vunpack.c.l.b16 %v4887
        %v4952 = vunpack.c.l.b16 %v4888
        %v4953 = vunpack.c.l.b16 %v4889
        %v4954 = vunpack.c.l.b16 %v4890
        %v4955 = vunpack.c.l.b16 %v4891
        %v4956 = vunpack.c.l.b16 %v4892
        %v4957 = vunpack.c.l.b16 %v4893
        %v4958 = vunpack.c.l.b16 %v4894
        %v4959 = vunpack.c.l.b16 %v4895
        %v4960 = vunpack.c.l.b16 %v4896
        %v4961 = vunpack.c.l.b16 %v4897
        %v4962 = vunpack.c.l.b16 %v4898
        %v4963 = vunpack.c.l.b16 %v4899
        %v4964 = vpack.c.b16 %v4933, %v4932
        %v4965 = vpack.c.b16 %v4935, %v4934
        %v4966 = vpack.c.b16 %v4937, %v4936
        %v4967 = vpack.c.b16 %v4939, %v4938
        %v4968 = vpack.c.b16 %v4941, %v4940
        %v4969 = vpack.c.b16 %v4943, %v4942
        %v4970 = vpack.c.b16 %v4945, %v4944
        %v4971 = vpack.c.b16 %v4947, %v4946
        %v4972 = vpack.c.b16 %v4949, %v4948
        %v4973 = vpack.c.b16 %v4951, %v4950
        %v4974 = vpack.c.b16 %v4953, %v4952
        %v4975 = vpack.c.b16 %v4955, %v4954
        %v4976 = vpack.c.b16 %v4957, %v4956
        %v4977 = vpack.c.b16 %v4959, %v4958
        %v4978 = vpack.c.b16 %v4961, %v4960
        %v4979 = vpack.c.b16 %v4963, %v4962
        %4996 = vmatprep.subr.bf16.mxu0 0
        %4997 = vmatpush1.bf16.msra.mxu0 %v4971
        %4998 = vmatprep.subr.bf16.mxu0 0
        %4999 = vmatpush1.bf16.msra.mxu0 %v4970
        %5000 = vmatprep.subr.bf16.mxu0 0
        %5001 = vmatpush1.bf16.msra.mxu0 %v4969
        %5002 = vmatprep.subr.bf16.mxu0 0
        %5003 = vmatpush1.bf16.msra.mxu0 %v4968
        %5004 = vmatprep.subr.bf16.mxu0 0
        %5005 = vmatpush1.bf16.msra.mxu0 %v4967
        %5006 = vmatprep.subr.bf16.mxu0 0
        %5007 = vmatpush1.bf16.msra.mxu0 %v4966
        %5008 = vmatprep.subr.bf16.mxu0 0
        %5009 = vmatpush1.bf16.msra.mxu0 %v4965
        %5010 = vmatprep.subr.bf16.mxu0 0
        %5011 = vmatpush1.bf16.msra.mxu0 %v4964
        %5012 = vmatprep.subr.bf16.mxu0 0
        %5013 = vmatpush2.bf16.msra.mxu0 %v4979
        %5014 = vmatprep.subr.bf16.mxu0 0
        %5015 = vmatpush2.bf16.msra.mxu0 %v4978
        %5016 = vmatprep.subr.bf16.mxu0 0
        %5017 = vmatpush2.bf16.msra.mxu0 %v4977
        %5018 = vmatprep.subr.bf16.mxu0 0
        %5019 = vmatpush2.bf16.msra.mxu0 %v4976
        %5020 = vmatprep.subr.bf16.mxu0 0
        %5021 = vmatpush2.bf16.msra.mxu0 %v4975
        %5022 = vmatprep.subr.bf16.mxu0 0
        %5023 = vmatpush2.bf16.msra.mxu0 %v4974
        %5024 = vmatprep.subr.bf16.mxu0 0
        %5025 = vmatpush2.bf16.msra.mxu0 %v4973
        %5026 = vmatprep.subr.bf16.mxu0 0
        %5027 = vmatpush2.bf16.msra.mxu0 %v4972
        %5028 = vmatprep.mubr.bf16.mxu0 %v4866
        %5029 = vmatmul.mubr.bf16.gmra.mxu0 %v4865
        %v5030 = vpop.f32.mrf.mxu0
        %v5031 = vadd.f32 0.0, %v5030
        %v5032 = vpop.f32.mrf.mxu0
        %v5033 = vpop.f32.mrf.mxu0
        %v5034 = vpop.f32.mrf.mxu0
        %5035 = vdwg.mxu0
        %v5068 = vunpack.c.l.b16 %v4787
        %v5069 = vunpack.c.l.b16 %v4788
        %v5070 = vunpack.c.l.b16 %v4789
        %v5071 = vunpack.c.l.b16 %v4790
        %v5072 = vunpack.c.l.b16 %v4791
        %v5073 = vunpack.c.l.b16 %v4792
        %v5074 = vunpack.c.l.b16 %v4793
        %v5075 = vunpack.c.l.b16 %v4794
        %v5076 = vunpack.c.l.b16 %v4795
        %v5077 = vunpack.c.l.b16 %v4796
        %v5078 = vunpack.c.l.b16 %v4797
        %v5079 = vunpack.c.l.b16 %v4798
        %v5080 = vunpack.c.l.b16 %v4799
        %v5081 = vunpack.c.l.b16 %v4800
        %v5082 = vunpack.c.l.b16 %v4801
        %v5083 = vunpack.c.l.b16 %v4802
        %v5084 = vunpack.c.l.b16 %v4803
        %v5085 = vunpack.c.l.b16 %v4804
        %v5086 = vunpack.c.l.b16 %v4805
        %v5087 = vunpack.c.l.b16 %v4806
        %v5088 = vunpack.c.l.b16 %v4807
        %v5089 = vunpack.c.l.b16 %v4808
        %v5090 = vunpack.c.l.b16 %v4809
        %v5091 = vunpack.c.l.b16 %v4810
        %v5092 = vunpack.c.l.b16 %v4811
        %v5093 = vunpack.c.l.b16 %v4812
        %v5094 = vunpack.c.l.b16 %v4813
        %v5095 = vunpack.c.l.b16 %v4814
        %v5096 = vunpack.c.l.b16 %v4815
        %v5097 = vunpack.c.l.b16 %v4816
        %v5098 = vunpack.c.l.b16 %v4817
        %v5099 = vunpack.c.l.b16 %v4818
        %v5100 = vpack.c.b16 %v5069, %v5068
        %v5101 = vpack.c.b16 %v5071, %v5070
        %v5102 = vpack.c.b16 %v5073, %v5072
        %v5103 = vpack.c.b16 %v5075, %v5074
        %v5104 = vpack.c.b16 %v5077, %v5076
        %v5105 = vpack.c.b16 %v5079, %v5078
        %v5106 = vpack.c.b16 %v5081, %v5080
        %v5107 = vpack.c.b16 %v5083, %v5082
        %v5108 = vpack.c.b16 %v5085, %v5084
        %v5109 = vpack.c.b16 %v5087, %v5086
        %v5110 = vpack.c.b16 %v5089, %v5088
        %v5111 = vpack.c.b16 %v5091, %v5090
        %v5112 = vpack.c.b16 %v5093, %v5092
        %v5113 = vpack.c.b16 %v5095, %v5094
        %v5114 = vpack.c.b16 %v5097, %v5096
        %v5115 = vpack.c.b16 %v5099, %v5098
        %5132 = vmatprep.subr.bf16.mxu0 0
        %5133 = vmatpush1.bf16.msra.mxu0 %v5107
        %5134 = vmatprep.subr.bf16.mxu0 0
        %5135 = vmatpush1.bf16.msra.mxu0 %v5106
        %5136 = vmatprep.subr.bf16.mxu0 0
        %5137 = vmatpush1.bf16.msra.mxu0 %v5105
        %5138 = vmatprep.subr.bf16.mxu0 0
        %5139 = vmatpush1.bf16.msra.mxu0 %v5104
        %5140 = vmatprep.subr.bf16.mxu0 0
        %5141 = vmatpush1.bf16.msra.mxu0 %v5103
        %5142 = vmatprep.subr.bf16.mxu0 0
        %5143 = vmatpush1.bf16.msra.mxu0 %v5102
        %5144 = vmatprep.subr.bf16.mxu0 0
        %5145 = vmatpush1.bf16.msra.mxu0 %v5101
        %5146 = vmatprep.subr.bf16.mxu0 0
        %5147 = vmatpush1.bf16.msra.mxu0 %v5100
        %5148 = vmatprep.subr.bf16.mxu0 0
        %5149 = vmatpush2.bf16.msra.mxu0 %v5115
        %5150 = vmatprep.subr.bf16.mxu0 0
        %5151 = vmatpush2.bf16.msra.mxu0 %v5114
        %5152 = vmatprep.subr.bf16.mxu0 0
        %5153 = vmatpush2.bf16.msra.mxu0 %v5113
        %5154 = vmatprep.subr.bf16.mxu0 0
        %5155 = vmatpush2.bf16.msra.mxu0 %v5112
        %5156 = vmatprep.subr.bf16.mxu0 0
        %5157 = vmatpush2.bf16.msra.mxu0 %v5111
        %5158 = vmatprep.subr.bf16.mxu0 0
        %5159 = vmatpush2.bf16.msra.mxu0 %v5110
        %5160 = vmatprep.subr.bf16.mxu0 0
        %5161 = vmatpush2.bf16.msra.mxu0 %v5109
        %5162 = vmatprep.subr.bf16.mxu0 0
        %5163 = vmatpush2.bf16.msra.mxu0 %v5108
        %5164 = vmatprep.mubr.bf16.mxu0 %v4786
        %5165 = vmatmul.mubr.bf16.gmra.mxu0 %v4785
        %v5166 = vpop.f32.mrf.mxu0
        %v5167 = vadd.f32 %v5031, %v5166
        %v5168 = vpop.f32.mrf.mxu0
        %v5169 = vpop.f32.mrf.mxu0
        %v5170 = vpop.f32.mrf.mxu0
        %5171 = vdwg.mxu0
        %s5172 = scalar_lea.vmem %s11, 8
        %v5173 = vld [vmem:[%s5172] sm:$0xf]
        %v5175 = vsel %vm4740, %v5173, 0
        %5177 = vmatprep.subr.bf16.mxu0 0
        %5178 = vmatpush1.bf16.msra.mxu0 0
        %5179 = vmatprep.subr.bf16.mxu0 0
        %5180 = vmatpush1.bf16.msra.mxu0 0
        %5181 = vmatprep.subr.bf16.mxu0 0
        %5182 = vmatpush1.bf16.msra.mxu0 0
        %5183 = vmatprep.subr.bf16.mxu0 0
        %5184 = vmatpush1.bf16.msra.mxu0 0
        %5185 = vmatprep.subr.bf16.mxu0 0
        %5186 = vmatpush1.bf16.msra.mxu0 0
        %5187 = vmatprep.subr.bf16.mxu0 0
        %5188 = vmatpush1.bf16.msra.mxu0 0
        %5189 = vmatprep.subr.bf16.mxu0 0
        %5190 = vmatpush1.bf16.msra.mxu0 0
        %5191 = vmatprep.subr.bf16.mxu0 %v4738
        %5192 = vmatpush1.bf16.msra.mxu0 %v4737
        %5193 = vmatprep.subr.bf16.mxu0 0
        %5194 = vmatpush2.bf16.msra.mxu0 0
        %5195 = vmatprep.subr.bf16.mxu0 0
        %5196 = vmatpush2.bf16.msra.mxu0 0
        %5197 = vmatprep.subr.bf16.mxu0 0
        %5198 = vmatpush2.bf16.msra.mxu0 0
        %5199 = vmatprep.subr.bf16.mxu0 0
        %5200 = vmatpush2.bf16.msra.mxu0 0
        %5201 = vmatprep.subr.bf16.mxu0 0
        %5202 = vmatpush2.bf16.msra.mxu0 0
        %5203 = vmatprep.subr.bf16.mxu0 0
        %5204 = vmatpush2.bf16.msra.mxu0 0
        %5205 = vmatprep.subr.bf16.mxu0 0
        %5206 = vmatpush2.bf16.msra.mxu0 0
        %5207 = vmatprep.subr.bf16.mxu0 0
        %5208 = vmatpush2.bf16.msra.mxu0 0
        %5209 = vmatprep.mubr.bf16.mxu0 0
        %5210 = vmatmul.mubr.bf16.gmra.mxu0 %v5175
        %v5211 = vpop.f32.mrf.mxu0
        %v5212 = vadd.f32 0.0, %v5211
        %v5213 = vpop.f32.mrf.mxu0
        %v5214 = vadd.f32 0.0, %v5213
        %v5215 = vpop.f32.mrf.mxu0
        %v5216 = vpop.f32.mrf.mxu0
        %5217 = vdwg.mxu0
        %v5218 = vpack.c.bf16 %v5212, %v5212
        %v5219 = vpack.c.bf16 %v5214, %v5214
        %s5220 = scalar_lea.vmem %s12, 256
        %v5221 = vld [vmem:[%s5220] sm:$0xf]
        %v5222 = vld [vmem:[%s5220 + $0x4] sm:$0xf]
        %v5223 = vld [vmem:[%s5220 + $0x8] sm:$0xf]
        %v5224 = vld [vmem:[%s5220 + $0xc] sm:$0xf]
        %v5225 = vld [vmem:[%s5220 + $0x10] sm:$0xf]
        %v5226 = vld [vmem:[%s5220 + $0x14] sm:$0xf]
        %v5227 = vld [vmem:[%s5220 + $0x18] sm:$0xf]
        %v5228 = vld [vmem:[%s5220 + $0x1c] sm:$0xf]
        %v5229 = vld [vmem:[%s5220 + $0x20] sm:$0xf]
        %v5230 = vld [vmem:[%s5220 + $0x24] sm:$0xf]
        %v5231 = vld [vmem:[%s5220 + $0x28] sm:$0xf]
        %v5232 = vld [vmem:[%s5220 + $0x2c] sm:$0xf]
        %v5233 = vld [vmem:[%s5220 + $0x30] sm:$0xf]
        %v5234 = vld [vmem:[%s5220 + $0x34] sm:$0xf]
        %v5235 = vld [vmem:[%s5220 + $0x38] sm:$0xf]
        %v5236 = vld [vmem:[%s5220 + $0x3c] sm:$0xf]
        %v5237 = vld [vmem:[%s5220 + $0x40] sm:$0xf]
        %v5238 = vld [vmem:[%s5220 + $0x44] sm:$0xf]
        %v5239 = vld [vmem:[%s5220 + $0x48] sm:$0xf]
        %v5240 = vld [vmem:[%s5220 + $0x4c] sm:$0xf]
        %v5241 = vld [vmem:[%s5220 + $0x50] sm:$0xf]
        %v5242 = vld [vmem:[%s5220 + $0x54] sm:$0xf]
        %v5243 = vld [vmem:[%s5220 + $0x58] sm:$0xf]
        %v5244 = vld [vmem:[%s5220 + $0x5c] sm:$0xf]
        %v5245 = vld [vmem:[%s5220 + $0x60] sm:$0xf]
        %v5246 = vld [vmem:[%s5220 + $0x64] sm:$0xf]
        %v5247 = vld [vmem:[%s5220 + $0x68] sm:$0xf]
        %v5248 = vld [vmem:[%s5220 + $0x6c] sm:$0xf]
        %v5249 = vld [vmem:[%s5220 + $0x70] sm:$0xf]
        %v5250 = vld [vmem:[%s5220 + $0x74] sm:$0xf]
        %v5251 = vld [vmem:[%s5220 + $0x78] sm:$0xf]
        %v5252 = vld [vmem:[%s5220 + $0x7c] sm:$0xf]
        %v5285 = vunpack.c.l.b16 %v5221
        %v5286 = vunpack.c.l.b16 %v5222
        %v5287 = vunpack.c.l.b16 %v5223
        %v5288 = vunpack.c.l.b16 %v5224
        %v5289 = vunpack.c.l.b16 %v5225
        %v5290 = vunpack.c.l.b16 %v5226
        %v5291 = vunpack.c.l.b16 %v5227
        %v5292 = vunpack.c.l.b16 %v5228
        %v5293 = vunpack.c.l.b16 %v5229
        %v5294 = vunpack.c.l.b16 %v5230
        %v5295 = vunpack.c.l.b16 %v5231
        %v5296 = vunpack.c.l.b16 %v5232
        %v5297 = vunpack.c.l.b16 %v5233
        %v5298 = vunpack.c.l.b16 %v5234
        %v5299 = vunpack.c.l.b16 %v5235
        %v5300 = vunpack.c.l.b16 %v5236
        %v5301 = vunpack.c.l.b16 %v5237
        %v5302 = vunpack.c.l.b16 %v5238
        %v5303 = vunpack.c.l.b16 %v5239
        %v5304 = vunpack.c.l.b16 %v5240
        %v5305 = vunpack.c.l.b16 %v5241
        %v5306 = vunpack.c.l.b16 %v5242
        %v5307 = vunpack.c.l.b16 %v5243
        %v5308 = vunpack.c.l.b16 %v5244
        %v5309 = vunpack.c.l.b16 %v5245
        %v5310 = vunpack.c.l.b16 %v5246
        %v5311 = vunpack.c.l.b16 %v5247
        %v5312 = vunpack.c.l.b16 %v5248
        %v5313 = vunpack.c.l.b16 %v5249
        %v5314 = vunpack.c.l.b16 %v5250
        %v5315 = vunpack.c.l.b16 %v5251
        %v5316 = vunpack.c.l.b16 %v5252
        %v5317 = vpack.c.b16 %v5286, %v5285
        %v5318 = vpack.c.b16 %v5288, %v5287
        %v5319 = vpack.c.b16 %v5290, %v5289
        %v5320 = vpack.c.b16 %v5292, %v5291
        %v5321 = vpack.c.b16 %v5294, %v5293
        %v5322 = vpack.c.b16 %v5296, %v5295
        %v5323 = vpack.c.b16 %v5298, %v5297
        %v5324 = vpack.c.b16 %v5300, %v5299
        %v5325 = vpack.c.b16 %v5302, %v5301
        %v5326 = vpack.c.b16 %v5304, %v5303
        %v5327 = vpack.c.b16 %v5306, %v5305
        %v5328 = vpack.c.b16 %v5308, %v5307
        %v5329 = vpack.c.b16 %v5310, %v5309
        %v5330 = vpack.c.b16 %v5312, %v5311
        %v5331 = vpack.c.b16 %v5314, %v5313
        %v5332 = vpack.c.b16 %v5316, %v5315
        %5349 = vmatprep.subr.bf16.mxu0 0
        %5350 = vmatpush1.bf16.msra.mxu0 %v5324
        %5351 = vmatprep.subr.bf16.mxu0 0
        %5352 = vmatpush1.bf16.msra.mxu0 %v5323
        %5353 = vmatprep.subr.bf16.mxu0 0
        %5354 = vmatpush1.bf16.msra.mxu0 %v5322
        %5355 = vmatprep.subr.bf16.mxu0 0
        %5356 = vmatpush1.bf16.msra.mxu0 %v5321
        %5357 = vmatprep.subr.bf16.mxu0 0
        %5358 = vmatpush1.bf16.msra.mxu0 %v5320
        %5359 = vmatprep.subr.bf16.mxu0 0
        %5360 = vmatpush1.bf16.msra.mxu0 %v5319
        %5361 = vmatprep.subr.bf16.mxu0 0
        %5362 = vmatpush1.bf16.msra.mxu0 %v5318
        %5363 = vmatprep.subr.bf16.mxu0 0
        %5364 = vmatpush1.bf16.msra.mxu0 %v5317
        %5365 = vmatprep.subr.bf16.mxu0 0
        %5366 = vmatpush2.bf16.msra.mxu0 %v5332
        %5367 = vmatprep.subr.bf16.mxu0 0
        %5368 = vmatpush2.bf16.msra.mxu0 %v5331
        %5369 = vmatprep.subr.bf16.mxu0 0
        %5370 = vmatpush2.bf16.msra.mxu0 %v5330
        %5371 = vmatprep.subr.bf16.mxu0 0
        %5372 = vmatpush2.bf16.msra.mxu0 %v5329
        %5373 = vmatprep.subr.bf16.mxu0 0
        %5374 = vmatpush2.bf16.msra.mxu0 %v5328
        %5375 = vmatprep.subr.bf16.mxu0 0
        %5376 = vmatpush2.bf16.msra.mxu0 %v5327
        %5377 = vmatprep.subr.bf16.mxu0 0
        %5378 = vmatpush2.bf16.msra.mxu0 %v5326
        %5379 = vmatprep.subr.bf16.mxu0 0
        %5380 = vmatpush2.bf16.msra.mxu0 %v5325
        %5381 = vmatprep.mubr.bf16.mxu0 %v5219
        %5382 = vmatmul.mubr.bf16.gmra.mxu0 %v5218
        %v5383 = vpop.f32.mrf.mxu0
        %v5384 = vadd.f32 0.0, %v5383
        %v5385 = vpop.f32.mrf.mxu0
        %v5386 = vpop.f32.mrf.mxu0
        %v5387 = vpop.f32.mrf.mxu0
        %5388 = vdwg.mxu0
        %v5389 = vadd.f32 %v5167, %v5384
        %v5390 = vld [vmem:[%s13] sm:$0x1]
        %v5392 = vlaneseq
        %v5393 = vshrl.u32 %v5392, 7
        %v5394 = vsub.s32 0, %v5393
        %v5395 = vrot.slane %v5390, %v5394
        %v5397 = vadd.f32 %v5389, %v5395
        %v5398 = vmul.f32 %v5397, 0.5
        %v5399 = vmul.f32 %v5397, 0.70710677
        %v5400 = vand.u32 2147483647, %v5399
        %v5401 = vmul.f32 %v5400, 0.3275911
        %v5402 = vadd.f32 %v5401, 1.0
        %v5403 = vrcp.pop %v5402
        %v5404 = vmul.f32 %v5403, 1.0614054
        %v5405 = vadd.f32 %v5404, -1.4531521
        %v5406 = vmul.f32 %v5405, %v5403
        %v5407 = vadd.f32 %v5406, 1.4214138
        %v5408 = vmul.f32 %v5407, %v5403
        %v5409 = vadd.f32 %v5408, -0.28449672
        %v5410 = vmul.f32 %v5409, %v5403
        %v5411 = vadd.f32 %v5410, 0.2548296
        %v5412 = vmul.f32 %v5411, %v5403
        %v5413 = vsub.f32 0.0, %v5400
        %v5414 = vmul.f32 %v5413, %v5400
        %v5415 = vmul.f32 %v5414, 1.442695
        %v5416 = vpow.pop %v5415
        %v5417 = vmul.f32 %v5412, %v5416
        %v5418 = vsub.f32 1.0, %v5417
        %vm5419 = vcmp.ge.f32.partialorder %v5399, 0.0
        %v5420 = vsub.f32 0.0, %v5418
        %v5421 = vsel %vm5419, %v5418, %v5420
        %v5422 = vadd.f32 %v5421, 1.0
        %v5423 = vmul.f32 %v5398, %v5422
        %v5424 = vpack.c.bf16 %v5423, %v5423
        %v5425 = vld [vmem:[%s15] sm:$0x1]
        %v5426 = vld [vmem:[%s14] sm:$0xf]
        %v5427 = vld [vmem:[%s14 + $0x4] sm:$0xf]
        %v5428 = vld [vmem:[%s14 + $0x8] sm:$0xf]
        %v5429 = vld [vmem:[%s14 + $0xc] sm:$0xf]
        %v5430 = vld [vmem:[%s14 + $0x10] sm:$0xf]
        %v5431 = vld [vmem:[%s14 + $0x14] sm:$0xf]
        %v5432 = vld [vmem:[%s14 + $0x18] sm:$0xf]
        %v5433 = vld [vmem:[%s14 + $0x1c] sm:$0xf]
        %v5434 = vld [vmem:[%s14 + $0x20] sm:$0xf]
        %v5435 = vld [vmem:[%s14 + $0x24] sm:$0xf]
        %v5436 = vld [vmem:[%s14 + $0x28] sm:$0xf]
        %v5437 = vld [vmem:[%s14 + $0x2c] sm:$0xf]
        %v5438 = vld [vmem:[%s14 + $0x30] sm:$0xf]
        %v5439 = vld [vmem:[%s14 + $0x34] sm:$0xf]
        %v5440 = vld [vmem:[%s14 + $0x38] sm:$0xf]
        %v5441 = vld [vmem:[%s14 + $0x3c] sm:$0xf]
        %v5458 = vunpack.c.l.b16 %v5426
        %v5459 = vunpack.c.l.b16 %v5427
        %v5460 = vunpack.c.l.b16 %v5428
        %v5461 = vunpack.c.l.b16 %v5429
        %v5462 = vunpack.c.l.b16 %v5430
        %v5463 = vunpack.c.l.b16 %v5431
        %v5464 = vunpack.c.l.b16 %v5432
        %v5465 = vunpack.c.l.b16 %v5433
        %v5466 = vunpack.c.l.b16 %v5434
        %v5467 = vunpack.c.l.b16 %v5435
        %v5468 = vunpack.c.l.b16 %v5436
        %v5469 = vunpack.c.l.b16 %v5437
        %v5470 = vunpack.c.l.b16 %v5438
        %v5471 = vunpack.c.l.b16 %v5439
        %v5472 = vunpack.c.l.b16 %v5440
        %v5473 = vunpack.c.l.b16 %v5441
        %v5474 = vpack.c.b16 %v5459, %v5458
        %v5475 = vpack.c.b16 %v5461, %v5460
        %v5476 = vpack.c.b16 %v5463, %v5462
        %v5477 = vpack.c.b16 %v5465, %v5464
        %v5478 = vpack.c.b16 %v5467, %v5466
        %v5479 = vpack.c.b16 %v5469, %v5468
        %v5480 = vpack.c.b16 %v5471, %v5470
        %v5481 = vpack.c.b16 %v5473, %v5472
        %5490 = vmatprep.subr.bf16.mxu0 0
        %5491 = vmatpush1.bf16.msra.mxu0 %v5481
        %5492 = vmatprep.subr.bf16.mxu0 0
        %5493 = vmatpush1.bf16.msra.mxu0 %v5480
        %5494 = vmatprep.subr.bf16.mxu0 0
        %5495 = vmatpush1.bf16.msra.mxu0 %v5479
        %5496 = vmatprep.subr.bf16.mxu0 0
        %5497 = vmatpush1.bf16.msra.mxu0 %v5478
        %5498 = vmatprep.subr.bf16.mxu0 0
        %5499 = vmatpush1.bf16.msra.mxu0 %v5477
        %5500 = vmatprep.subr.bf16.mxu0 0
        %5501 = vmatpush1.bf16.msra.mxu0 %v5476
        %5502 = vmatprep.subr.bf16.mxu0 0
        %5503 = vmatpush1.bf16.msra.mxu0 %v5475
        %5504 = vmatprep.subr.bf16.mxu0 0
        %5505 = vmatpush1.bf16.msra.mxu0 %v5474
        %5506 = vmatprep.subr.bf16.mxu0 0
        %5507 = vmatpush2.bf16.msra.mxu0 0
        %5508 = vmatprep.subr.bf16.mxu0 0
        %5509 = vmatpush2.bf16.msra.mxu0 0
        %5510 = vmatprep.subr.bf16.mxu0 0
        %5511 = vmatpush2.bf16.msra.mxu0 0
        %5512 = vmatprep.subr.bf16.mxu0 0
        %5513 = vmatpush2.bf16.msra.mxu0 0
        %5514 = vmatprep.subr.bf16.mxu0 0
        %5515 = vmatpush2.bf16.msra.mxu0 0
        %5516 = vmatprep.subr.bf16.mxu0 0
        %5517 = vmatpush2.bf16.msra.mxu0 0
        %5518 = vmatprep.subr.bf16.mxu0 0
        %5519 = vmatpush2.bf16.msra.mxu0 0
        %5520 = vmatprep.subr.bf16.mxu0 0
        %5521 = vmatpush2.bf16.msra.mxu0 0
        %5522 = vmatprep.mubr.bf16.mxu0 0
        %5523 = vmatmul.mubr.bf16.gmra.mxu0 %v5424
        %v5524 = vpop.f32.mrf.mxu0
        %v5525 = vadd.f32 0.0, %v5524
        %v5526 = vpop.f32.mrf.mxu0
        %v5527 = vpop.f32.mrf.mxu0
        %v5528 = vpop.f32.mrf.mxu0
        %5529 = vdwg.mxu0
        %v5530 = vadd.f32 %v5425, %v5525
        %s5531 = scalar_lea.vmem %s14, 64
        %v5532 = vld [vmem:[%s5531] sm:$0xf]
        %v5533 = vld [vmem:[%s5531 + $0x4] sm:$0xf]
        %v5534 = vld [vmem:[%s5531 + $0x8] sm:$0xf]
        %v5535 = vld [vmem:[%s5531 + $0xc] sm:$0xf]
        %v5536 = vld [vmem:[%s5531 + $0x10] sm:$0xf]
        %v5537 = vld [vmem:[%s5531 + $0x14] sm:$0xf]
        %v5538 = vld [vmem:[%s5531 + $0x18] sm:$0xf]
        %v5539 = vld [vmem:[%s5531 + $0x1c] sm:$0xf]
        %v5540 = vld [vmem:[%s5531 + $0x20] sm:$0xf]
        %v5541 = vld [vmem:[%s5531 + $0x24] sm:$0xf]
        %v5542 = vld [vmem:[%s5531 + $0x28] sm:$0xf]
        %v5543 = vld [vmem:[%s5531 + $0x2c] sm:$0xf]
        %v5544 = vld [vmem:[%s5531 + $0x30] sm:$0xf]
        %v5545 = vld [vmem:[%s5531 + $0x34] sm:$0xf]
        %v5546 = vld [vmem:[%s5531 + $0x38] sm:$0xf]
        %v5547 = vld [vmem:[%s5531 + $0x3c] sm:$0xf]
        %v5549 = vshrl.u32 %v5424, 16
        %v5568 = vunpack.c.l.b16 %v5532
        %v5569 = vunpack.c.l.b16 %v5533
        %v5570 = vunpack.c.l.b16 %v5534
        %v5571 = vunpack.c.l.b16 %v5535
        %v5572 = vunpack.c.l.b16 %v5536
        %v5573 = vunpack.c.l.b16 %v5537
        %v5574 = vunpack.c.l.b16 %v5538
        %v5575 = vunpack.c.l.b16 %v5539
        %v5576 = vunpack.c.l.b16 %v5540
        %v5577 = vunpack.c.l.b16 %v5541
        %v5578 = vunpack.c.l.b16 %v5542
        %v5579 = vunpack.c.l.b16 %v5543
        %v5580 = vunpack.c.l.b16 %v5544
        %v5581 = vunpack.c.l.b16 %v5545
        %v5582 = vunpack.c.l.b16 %v5546
        %v5583 = vunpack.c.l.b16 %v5547
        %v5584 = vpack.c.b16 %v5569, %v5568
        %v5585 = vpack.c.b16 %v5571, %v5570
        %v5586 = vpack.c.b16 %v5573, %v5572
        %v5587 = vpack.c.b16 %v5575, %v5574
        %v5588 = vpack.c.b16 %v5577, %v5576
        %v5589 = vpack.c.b16 %v5579, %v5578
        %v5590 = vpack.c.b16 %v5581, %v5580
        %v5591 = vpack.c.b16 %v5583, %v5582
        %5600 = vmatprep.subr.bf16.mxu0 0
        %5601 = vmatpush1.bf16.msra.mxu0 %v5591
        %5602 = vmatprep.subr.bf16.mxu0 0
        %5603 = vmatpush1.bf16.msra.mxu0 %v5590
        %5604 = vmatprep.subr.bf16.mxu0 0
        %5605 = vmatpush1.bf16.msra.mxu0 %v5589
        %5606 = vmatprep.subr.bf16.mxu0 0
        %5607 = vmatpush1.bf16.msra.mxu0 %v5588
        %5608 = vmatprep.subr.bf16.mxu0 0
        %5609 = vmatpush1.bf16.msra.mxu0 %v5587
        %5610 = vmatprep.subr.bf16.mxu0 0
        %5611 = vmatpush1.bf16.msra.mxu0 %v5586
        %5612 = vmatprep.subr.bf16.mxu0 0
        %5613 = vmatpush1.bf16.msra.mxu0 %v5585
        %5614 = vmatprep.subr.bf16.mxu0 0
        %5615 = vmatpush1.bf16.msra.mxu0 %v5584
        %5616 = vmatprep.subr.bf16.mxu0 0
        %5617 = vmatpush2.bf16.msra.mxu0 0
        %5618 = vmatprep.subr.bf16.mxu0 0
        %5619 = vmatpush2.bf16.msra.mxu0 0
        %5620 = vmatprep.subr.bf16.mxu0 0
        %5621 = vmatpush2.bf16.msra.mxu0 0
        %5622 = vmatprep.subr.bf16.mxu0 0
        %5623 = vmatpush2.bf16.msra.mxu0 0
        %5624 = vmatprep.subr.bf16.mxu0 0
        %5625 = vmatpush2.bf16.msra.mxu0 0
        %5626 = vmatprep.subr.bf16.mxu0 0
        %5627 = vmatpush2.bf16.msra.mxu0 0
        %5628 = vmatprep.subr.bf16.mxu0 0
        %5629 = vmatpush2.bf16.msra.mxu0 0
        %5630 = vmatprep.subr.bf16.mxu0 0
        %5631 = vmatpush2.bf16.msra.mxu0 0
        %5632 = vmatprep.mubr.bf16.mxu0 0
        %5633 = vmatmul.mubr.bf16.gmra.mxu0 %v5549
        %v5634 = vpop.f32.mrf.mxu0
        %v5635 = vadd.f32 0.0, %v5634
        %v5636 = vpop.f32.mrf.mxu0
        %v5637 = vpop.f32.mrf.mxu0
        %v5638 = vpop.f32.mrf.mxu0
        %5639 = vdwg.mxu0
        %v5640 = vadd.f32 %v5530, %v5635
        %s5641 = scalar_lea.vmem %s14, 128
        %v5642 = vld [vmem:[%s5641] sm:$0xf]
        %v5643 = vld [vmem:[%s5641 + $0x4] sm:$0xf]
        %v5644 = vld [vmem:[%s5641 + $0x8] sm:$0xf]
        %v5645 = vld [vmem:[%s5641 + $0xc] sm:$0xf]
        %v5646 = vld [vmem:[%s5641 + $0x10] sm:$0xf]
        %v5647 = vld [vmem:[%s5641 + $0x14] sm:$0xf]
        %v5648 = vld [vmem:[%s5641 + $0x18] sm:$0xf]
        %v5649 = vld [vmem:[%s5641 + $0x1c] sm:$0xf]
        %v5650 = vld [vmem:[%s5641 + $0x20] sm:$0xf]
        %v5651 = vld [vmem:[%s5641 + $0x24] sm:$0xf]
        %v5652 = vld [vmem:[%s5641 + $0x28] sm:$0xf]
        %v5653 = vld [vmem:[%s5641 + $0x2c] sm:$0xf]
        %v5654 = vld [vmem:[%s5641 + $0x30] sm:$0xf]
        %v5655 = vld [vmem:[%s5641 + $0x34] sm:$0xf]
        %v5656 = vld [vmem:[%s5641 + $0x38] sm:$0xf]
        %v5657 = vld [vmem:[%s5641 + $0x3c] sm:$0xf]
        %v5659 = vrot.slane %v5424, 1
        %v5677 = vunpack.c.l.b16 %v5642
        %v5678 = vunpack.c.l.b16 %v5643
        %v5679 = vunpack.c.l.b16 %v5644
        %v5680 = vunpack.c.l.b16 %v5645
        %v5681 = vunpack.c.l.b16 %v5646
        %v5682 = vunpack.c.l.b16 %v5647
        %v5683 = vunpack.c.l.b16 %v5648
        %v5684 = vunpack.c.l.b16 %v5649
        %v5685 = vunpack.c.l.b16 %v5650
        %v5686 = vunpack.c.l.b16 %v5651
        %v5687 = vunpack.c.l.b16 %v5652
        %v5688 = vunpack.c.l.b16 %v5653
        %v5689 = vunpack.c.l.b16 %v5654
        %v5690 = vunpack.c.l.b16 %v5655
        %v5691 = vunpack.c.l.b16 %v5656
        %v5692 = vunpack.c.l.b16 %v5657
        %v5693 = vpack.c.b16 %v5678, %v5677
        %v5694 = vpack.c.b16 %v5680, %v5679
        %v5695 = vpack.c.b16 %v5682, %v5681
        %v5696 = vpack.c.b16 %v5684, %v5683
        %v5697 = vpack.c.b16 %v5686, %v5685
        %v5698 = vpack.c.b16 %v5688, %v5687
        %v5699 = vpack.c.b16 %v5690, %v5689
        %v5700 = vpack.c.b16 %v5692, %v5691
        %5709 = vmatprep.subr.bf16.mxu0 0
        %5710 = vmatpush1.bf16.msra.mxu0 %v5700
        %5711 = vmatprep.subr.bf16.mxu0 0
        %5712 = vmatpush1.bf16.msra.mxu0 %v5699
        %5713 = vmatprep.subr.bf16.mxu0 0
        %5714 = vmatpush1.bf16.msra.mxu0 %v5698
        %5715 = vmatprep.subr.bf16.mxu0 0
        %5716 = vmatpush1.bf16.msra.mxu0 %v5697
        %5717 = vmatprep.subr.bf16.mxu0 0
        %5718 = vmatpush1.bf16.msra.mxu0 %v5696
        %5719 = vmatprep.subr.bf16.mxu0 0
        %5720 = vmatpush1.bf16.msra.mxu0 %v5695
        %5721 = vmatprep.subr.bf16.mxu0 0
        %5722 = vmatpush1.bf16.msra.mxu0 %v5694
        %5723 = vmatprep.subr.bf16.mxu0 0
        %5724 = vmatpush1.bf16.msra.mxu0 %v5693
        %5725 = vmatprep.subr.bf16.mxu0 0
        %5726 = vmatpush2.bf16.msra.mxu0 0
        %5727 = vmatprep.subr.bf16.mxu0 0
        %5728 = vmatpush2.bf16.msra.mxu0 0
        %5729 = vmatprep.subr.bf16.mxu0 0
        %5730 = vmatpush2.bf16.msra.mxu0 0
        %5731 = vmatprep.subr.bf16.mxu0 0
        %5732 = vmatpush2.bf16.msra.mxu0 0
        %5733 = vmatprep.subr.bf16.mxu0 0
        %5734 = vmatpush2.bf16.msra.mxu0 0
        %5735 = vmatprep.subr.bf16.mxu0 0
        %5736 = vmatpush2.bf16.msra.mxu0 0
        %5737 = vmatprep.subr.bf16.mxu0 0
        %5738 = vmatpush2.bf16.msra.mxu0 0
        %5739 = vmatprep.subr.bf16.mxu0 0
        %5740 = vmatpush2.bf16.msra.mxu0 0
        %5741 = vmatprep.mubr.bf16.mxu0 0
        %5742 = vmatmul.mubr.bf16.gmra.mxu0 %v5659
        %v5743 = vpop.f32.mrf.mxu0
        %v5744 = vadd.f32 0.0, %v5743
        %v5745 = vpop.f32.mrf.mxu0
        %v5746 = vpop.f32.mrf.mxu0
        %v5747 = vpop.f32.mrf.mxu0
        %5748 = vdwg.mxu0
        %v5749 = vadd.f32 %v5640, %v5744
        %s5750 = scalar_lea.vmem %s14, 192
        %v5751 = vld [vmem:[%s5750] sm:$0xf]
        %v5752 = vld [vmem:[%s5750 + $0x4] sm:$0xf]
        %v5753 = vld [vmem:[%s5750 + $0x8] sm:$0xf]
        %v5754 = vld [vmem:[%s5750 + $0xc] sm:$0xf]
        %v5755 = vld [vmem:[%s5750 + $0x10] sm:$0xf]
        %v5756 = vld [vmem:[%s5750 + $0x14] sm:$0xf]
        %v5757 = vld [vmem:[%s5750 + $0x18] sm:$0xf]
        %v5758 = vld [vmem:[%s5750 + $0x1c] sm:$0xf]
        %v5759 = vld [vmem:[%s5750 + $0x20] sm:$0xf]
        %v5760 = vld [vmem:[%s5750 + $0x24] sm:$0xf]
        %v5761 = vld [vmem:[%s5750 + $0x28] sm:$0xf]
        %v5762 = vld [vmem:[%s5750 + $0x2c] sm:$0xf]
        %v5763 = vld [vmem:[%s5750 + $0x30] sm:$0xf]
        %v5764 = vld [vmem:[%s5750 + $0x34] sm:$0xf]
        %v5765 = vld [vmem:[%s5750 + $0x38] sm:$0xf]
        %v5766 = vld [vmem:[%s5750 + $0x3c] sm:$0xf]
        %v5767 = vrot.slane %v5549, 1
        %v5785 = vunpack.c.l.b16 %v5751
        %v5786 = vunpack.c.l.b16 %v5752
        %v5787 = vunpack.c.l.b16 %v5753
        %v5788 = vunpack.c.l.b16 %v5754
        %v5789 = vunpack.c.l.b16 %v5755
        %v5790 = vunpack.c.l.b16 %v5756
        %v5791 = vunpack.c.l.b16 %v5757
        %v5792 = vunpack.c.l.b16 %v5758
        %v5793 = vunpack.c.l.b16 %v5759
        %v5794 = vunpack.c.l.b16 %v5760
        %v5795 = vunpack.c.l.b16 %v5761
        %v5796 = vunpack.c.l.b16 %v5762
        %v5797 = vunpack.c.l.b16 %v5763
        %v5798 = vunpack.c.l.b16 %v5764
        %v5799 = vunpack.c.l.b16 %v5765
        %v5800 = vunpack.c.l.b16 %v5766
        %v5801 = vpack.c.b16 %v5786, %v5785
        %v5802 = vpack.c.b16 %v5788, %v5787
        %v5803 = vpack.c.b16 %v5790, %v5789
        %v5804 = vpack.c.b16 %v5792, %v5791
        %v5805 = vpack.c.b16 %v5794, %v5793
        %v5806 = vpack.c.b16 %v5796, %v5795
        %v5807 = vpack.c.b16 %v5798, %v5797
        %v5808 = vpack.c.b16 %v5800, %v5799
        %5817 = vmatprep.subr.bf16.mxu0 0
        %5818 = vmatpush1.bf16.msra.mxu0 %v5808
        %5819 = vmatprep.subr.bf16.mxu0 0
        %5820 = vmatpush1.bf16.msra.mxu0 %v5807
        %5821 = vmatprep.subr.bf16.mxu0 0
        %5822 = vmatpush1.bf16.msra.mxu0 %v5806
        %5823 = vmatprep.subr.bf16.mxu0 0
        %5824 = vmatpush1.bf16.msra.mxu0 %v5805
        %5825 = vmatprep.subr.bf16.mxu0 0
        %5826 = vmatpush1.bf16.msra.mxu0 %v5804
        %5827 = vmatprep.subr.bf16.mxu0 0
        %5828 = vmatpush1.bf16.msra.mxu0 %v5803
        %5829 = vmatprep.subr.bf16.mxu0 0
        %5830 = vmatpush1.bf16.msra.mxu0 %v5802
        %5831 = vmatprep.subr.bf16.mxu0 0
        %5832 = vmatpush1.bf16.msra.mxu0 %v5801
        %5833 = vmatprep.subr.bf16.mxu0 0
        %5834 = vmatpush2.bf16.msra.mxu0 0
        %5835 = vmatprep.subr.bf16.mxu0 0
        %5836 = vmatpush2.bf16.msra.mxu0 0
        %5837 = vmatprep.subr.bf16.mxu0 0
        %5838 = vmatpush2.bf16.msra.mxu0 0
        %5839 = vmatprep.subr.bf16.mxu0 0
        %5840 = vmatpush2.bf16.msra.mxu0 0
        %5841 = vmatprep.subr.bf16.mxu0 0
        %5842 = vmatpush2.bf16.msra.mxu0 0
        %5843 = vmatprep.subr.bf16.mxu0 0
        %5844 = vmatpush2.bf16.msra.mxu0 0
        %5845 = vmatprep.subr.bf16.mxu0 0
        %5846 = vmatpush2.bf16.msra.mxu0 0
        %5847 = vmatprep.subr.bf16.mxu0 0
        %5848 = vmatpush2.bf16.msra.mxu0 0
        %5849 = vmatprep.mubr.bf16.mxu0 0
        %5850 = vmatmul.mubr.bf16.gmra.mxu0 %v5767
        %v5851 = vpop.f32.mrf.mxu0
        %v5852 = vadd.f32 0.0, %v5851
        %v5853 = vpop.f32.mrf.mxu0
        %v5854 = vpop.f32.mrf.mxu0
        %v5855 = vpop.f32.mrf.mxu0
        %5856 = vdwg.mxu0
        %v5857 = vadd.f32 %v5749, %v5852
        %s5858 = scalar_lea.vmem %s14, 256
        %v5859 = vld [vmem:[%s5858] sm:$0xf]
        %v5860 = vld [vmem:[%s5858 + $0x4] sm:$0xf]
        %v5861 = vld [vmem:[%s5858 + $0x8] sm:$0xf]
        %v5862 = vld [vmem:[%s5858 + $0xc] sm:$0xf]
        %v5863 = vld [vmem:[%s5858 + $0x10] sm:$0xf]
        %v5864 = vld [vmem:[%s5858 + $0x14] sm:$0xf]
        %v5865 = vld [vmem:[%s5858 + $0x18] sm:$0xf]
        %v5866 = vld [vmem:[%s5858 + $0x1c] sm:$0xf]
        %v5867 = vld [vmem:[%s5858 + $0x20] sm:$0xf]
        %v5868 = vld [vmem:[%s5858 + $0x24] sm:$0xf]
        %v5869 = vld [vmem:[%s5858 + $0x28] sm:$0xf]
        %v5870 = vld [vmem:[%s5858 + $0x2c] sm:$0xf]
        %v5871 = vld [vmem:[%s5858 + $0x30] sm:$0xf]
        %v5872 = vld [vmem:[%s5858 + $0x34] sm:$0xf]
        %v5873 = vld [vmem:[%s5858 + $0x38] sm:$0xf]
        %v5874 = vld [vmem:[%s5858 + $0x3c] sm:$0xf]
        %v5875 = vrot.slane %v5424, 2
        %v5893 = vunpack.c.l.b16 %v5859
        %v5894 = vunpack.c.l.b16 %v5860
        %v5895 = vunpack.c.l.b16 %v5861
        %v5896 = vunpack.c.l.b16 %v5862
        %v5897 = vunpack.c.l.b16 %v5863
        %v5898 = vunpack.c.l.b16 %v5864
        %v5899 = vunpack.c.l.b16 %v5865
        %v5900 = vunpack.c.l.b16 %v5866
        %v5901 = vunpack.c.l.b16 %v5867
        %v5902 = vunpack.c.l.b16 %v5868
        %v5903 = vunpack.c.l.b16 %v5869
        %v5904 = vunpack.c.l.b16 %v5870
        %v5905 = vunpack.c.l.b16 %v5871
        %v5906 = vunpack.c.l.b16 %v5872
        %v5907 = vunpack.c.l.b16 %v5873
        %v5908 = vunpack.c.l.b16 %v5874
        %v5909 = vpack.c.b16 %v5894, %v5893
        %v5910 = vpack.c.b16 %v5896, %v5895
        %v5911 = vpack.c.b16 %v5898, %v5897
        %v5912 = vpack.c.b16 %v5900, %v5899
        %v5913 = vpack.c.b16 %v5902, %v5901
        %v5914 = vpack.c.b16 %v5904, %v5903
        %v5915 = vpack.c.b16 %v5906, %v5905
        %v5916 = vpack.c.b16 %v5908, %v5907
        %5925 = vmatprep.subr.bf16.mxu0 0
        %5926 = vmatpush1.bf16.msra.mxu0 %v5916
        %5927 = vmatprep.subr.bf16.mxu0 0
        %5928 = vmatpush1.bf16.msra.mxu0 %v5915
        %5929 = vmatprep.subr.bf16.mxu0 0
        %5930 = vmatpush1.bf16.msra.mxu0 %v5914
        %5931 = vmatprep.subr.bf16.mxu0 0
        %5932 = vmatpush1.bf16.msra.mxu0 %v5913
        %5933 = vmatprep.subr.bf16.mxu0 0
        %5934 = vmatpush1.bf16.msra.mxu0 %v5912
        %5935 = vmatprep.subr.bf16.mxu0 0
        %5936 = vmatpush1.bf16.msra.mxu0 %v5911
        %5937 = vmatprep.subr.bf16.mxu0 0
        %5938 = vmatpush1.bf16.msra.mxu0 %v5910
        %5939 = vmatprep.subr.bf16.mxu0 0
        %5940 = vmatpush1.bf16.msra.mxu0 %v5909
        %5941 = vmatprep.subr.bf16.mxu0 0
        %5942 = vmatpush2.bf16.msra.mxu0 0
        %5943 = vmatprep.subr.bf16.mxu0 0
        %5944 = vmatpush2.bf16.msra.mxu0 0
        %5945 = vmatprep.subr.bf16.mxu0 0
        %5946 = vmatpush2.bf16.msra.mxu0 0
        %5947 = vmatprep.subr.bf16.mxu0 0
        %5948 = vmatpush2.bf16.msra.mxu0 0
        %5949 = vmatprep.subr.bf16.mxu0 0
        %5950 = vmatpush2.bf16.msra.mxu0 0
        %5951 = vmatprep.subr.bf16.mxu0 0
        %5952 = vmatpush2.bf16.msra.mxu0 0
        %5953 = vmatprep.subr.bf16.mxu0 0
        %5954 = vmatpush2.bf16.msra.mxu0 0
        %5955 = vmatprep.subr.bf16.mxu0 0
        %5956 = vmatpush2.bf16.msra.mxu0 0
        %5957 = vmatprep.mubr.bf16.mxu0 0
        %5958 = vmatmul.mubr.bf16.gmra.mxu0 %v5875
        %v5959 = vpop.f32.mrf.mxu0
        %v5960 = vadd.f32 0.0, %v5959
        %v5961 = vpop.f32.mrf.mxu0
        %v5962 = vpop.f32.mrf.mxu0
        %v5963 = vpop.f32.mrf.mxu0
        %5964 = vdwg.mxu0
        %v5965 = vadd.f32 %v5857, %v5960
        %s5966 = scalar_lea.vmem %s14, 320
        %v5967 = vld [vmem:[%s5966] sm:$0xf]
        %v5968 = vld [vmem:[%s5966 + $0x4] sm:$0xf]
        %v5969 = vld [vmem:[%s5966 + $0x8] sm:$0xf]
        %v5970 = vld [vmem:[%s5966 + $0xc] sm:$0xf]
        %v5971 = vld [vmem:[%s5966 + $0x10] sm:$0xf]
        %v5972 = vld [vmem:[%s5966 + $0x14] sm:$0xf]
        %v5973 = vld [vmem:[%s5966 + $0x18] sm:$0xf]
        %v5974 = vld [vmem:[%s5966 + $0x1c] sm:$0xf]
        %v5975 = vld [vmem:[%s5966 + $0x20] sm:$0xf]
        %v5976 = vld [vmem:[%s5966 + $0x24] sm:$0xf]
        %v5977 = vld [vmem:[%s5966 + $0x28] sm:$0xf]
        %v5978 = vld [vmem:[%s5966 + $0x2c] sm:$0xf]
        %v5979 = vld [vmem:[%s5966 + $0x30] sm:$0xf]
        %v5980 = vld [vmem:[%s5966 + $0x34] sm:$0xf]
        %v5981 = vld [vmem:[%s5966 + $0x38] sm:$0xf]
        %v5982 = vld [vmem:[%s5966 + $0x3c] sm:$0xf]
        %v5983 = vrot.slane %v5549, 2
        %v6001 = vunpack.c.l.b16 %v5967
        %v6002 = vunpack.c.l.b16 %v5968
        %v6003 = vunpack.c.l.b16 %v5969
        %v6004 = vunpack.c.l.b16 %v5970
        %v6005 = vunpack.c.l.b16 %v5971
        %v6006 = vunpack.c.l.b16 %v5972
        %v6007 = vunpack.c.l.b16 %v5973
        %v6008 = vunpack.c.l.b16 %v5974
        %v6009 = vunpack.c.l.b16 %v5975
        %v6010 = vunpack.c.l.b16 %v5976
        %v6011 = vunpack.c.l.b16 %v5977
        %v6012 = vunpack.c.l.b16 %v5978
        %v6013 = vunpack.c.l.b16 %v5979
        %v6014 = vunpack.c.l.b16 %v5980
        %v6015 = vunpack.c.l.b16 %v5981
        %v6016 = vunpack.c.l.b16 %v5982
        %v6017 = vpack.c.b16 %v6002, %v6001
        %v6018 = vpack.c.b16 %v6004, %v6003
        %v6019 = vpack.c.b16 %v6006, %v6005
        %v6020 = vpack.c.b16 %v6008, %v6007
        %v6021 = vpack.c.b16 %v6010, %v6009
        %v6022 = vpack.c.b16 %v6012, %v6011
        %v6023 = vpack.c.b16 %v6014, %v6013
        %v6024 = vpack.c.b16 %v6016, %v6015
        %6033 = vmatprep.subr.bf16.mxu0 0
        %6034 = vmatpush1.bf16.msra.mxu0 %v6024
        %6035 = vmatprep.subr.bf16.mxu0 0
        %6036 = vmatpush1.bf16.msra.mxu0 %v6023
        %6037 = vmatprep.subr.bf16.mxu0 0
        %6038 = vmatpush1.bf16.msra.mxu0 %v6022
        %6039 = vmatprep.subr.bf16.mxu0 0
        %6040 = vmatpush1.bf16.msra.mxu0 %v6021
        %6041 = vmatprep.subr.bf16.mxu0 0
        %6042 = vmatpush1.bf16.msra.mxu0 %v6020
        %6043 = vmatprep.subr.bf16.mxu0 0
        %6044 = vmatpush1.bf16.msra.mxu0 %v6019
        %6045 = vmatprep.subr.bf16.mxu0 0
        %6046 = vmatpush1.bf16.msra.mxu0 %v6018
        %6047 = vmatprep.subr.bf16.mxu0 0
        %6048 = vmatpush1.bf16.msra.mxu0 %v6017
        %6049 = vmatprep.subr.bf16.mxu0 0
        %6050 = vmatpush2.bf16.msra.mxu0 0
        %6051 = vmatprep.subr.bf16.mxu0 0
        %6052 = vmatpush2.bf16.msra.mxu0 0
        %6053 = vmatprep.subr.bf16.mxu0 0
        %6054 = vmatpush2.bf16.msra.mxu0 0
        %6055 = vmatprep.subr.bf16.mxu0 0
        %6056 = vmatpush2.bf16.msra.mxu0 0
        %6057 = vmatprep.subr.bf16.mxu0 0
        %6058 = vmatpush2.bf16.msra.mxu0 0
        %6059 = vmatprep.subr.bf16.mxu0 0
        %6060 = vmatpush2.bf16.msra.mxu0 0
        %6061 = vmatprep.subr.bf16.mxu0 0
        %6062 = vmatpush2.bf16.msra.mxu0 0
        %6063 = vmatprep.subr.bf16.mxu0 0
        %6064 = vmatpush2.bf16.msra.mxu0 0
        %6065 = vmatprep.mubr.bf16.mxu0 0
        %6066 = vmatmul.mubr.bf16.gmra.mxu0 %v5983
        %v6067 = vpop.f32.mrf.mxu0
        %v6068 = vadd.f32 0.0, %v6067
        %v6069 = vpop.f32.mrf.mxu0
        %v6070 = vpop.f32.mrf.mxu0
        %v6071 = vpop.f32.mrf.mxu0
        %6072 = vdwg.mxu0
        %v6073 = vadd.f32 %v5965, %v6068
        %s6074 = scalar_lea.vmem %s14, 384
        %v6075 = vld [vmem:[%s6074] sm:$0xf]
        %v6076 = vld [vmem:[%s6074 + $0x4] sm:$0xf]
        %v6077 = vld [vmem:[%s6074 + $0x8] sm:$0xf]
        %v6078 = vld [vmem:[%s6074 + $0xc] sm:$0xf]
        %v6079 = vld [vmem:[%s6074 + $0x10] sm:$0xf]
        %v6080 = vld [vmem:[%s6074 + $0x14] sm:$0xf]
        %v6081 = vld [vmem:[%s6074 + $0x18] sm:$0xf]
        %v6082 = vld [vmem:[%s6074 + $0x1c] sm:$0xf]
        %v6083 = vld [vmem:[%s6074 + $0x20] sm:$0xf]
        %v6084 = vld [vmem:[%s6074 + $0x24] sm:$0xf]
        %v6085 = vld [vmem:[%s6074 + $0x28] sm:$0xf]
        %v6086 = vld [vmem:[%s6074 + $0x2c] sm:$0xf]
        %v6087 = vld [vmem:[%s6074 + $0x30] sm:$0xf]
        %v6088 = vld [vmem:[%s6074 + $0x34] sm:$0xf]
        %v6089 = vld [vmem:[%s6074 + $0x38] sm:$0xf]
        %v6090 = vld [vmem:[%s6074 + $0x3c] sm:$0xf]
        %v6091 = vrot.slane %v5424, 3
        %v6109 = vunpack.c.l.b16 %v6075
        %v6110 = vunpack.c.l.b16 %v6076
        %v6111 = vunpack.c.l.b16 %v6077
        %v6112 = vunpack.c.l.b16 %v6078
        %v6113 = vunpack.c.l.b16 %v6079
        %v6114 = vunpack.c.l.b16 %v6080
        %v6115 = vunpack.c.l.b16 %v6081
        %v6116 = vunpack.c.l.b16 %v6082
        %v6117 = vunpack.c.l.b16 %v6083
        %v6118 = vunpack.c.l.b16 %v6084
        %v6119 = vunpack.c.l.b16 %v6085
        %v6120 = vunpack.c.l.b16 %v6086
        %v6121 = vunpack.c.l.b16 %v6087
        %v6122 = vunpack.c.l.b16 %v6088
        %v6123 = vunpack.c.l.b16 %v6089
        %v6124 = vunpack.c.l.b16 %v6090
        %v6125 = vpack.c.b16 %v6110, %v6109
        %v6126 = vpack.c.b16 %v6112, %v6111
        %v6127 = vpack.c.b16 %v6114, %v6113
        %v6128 = vpack.c.b16 %v6116, %v6115
        %v6129 = vpack.c.b16 %v6118, %v6117
        %v6130 = vpack.c.b16 %v6120, %v6119
        %v6131 = vpack.c.b16 %v6122, %v6121
        %v6132 = vpack.c.b16 %v6124, %v6123
        %6141 = vmatprep.subr.bf16.mxu0 0
        %6142 = vmatpush1.bf16.msra.mxu0 %v6132
        %6143 = vmatprep.subr.bf16.mxu0 0
        %6144 = vmatpush1.bf16.msra.mxu0 %v6131
        %6145 = vmatprep.subr.bf16.mxu0 0
        %6146 = vmatpush1.bf16.msra.mxu0 %v6130
        %6147 = vmatprep.subr.bf16.mxu0 0
        %6148 = vmatpush1.bf16.msra.mxu0 %v6129
        %6149 = vmatprep.subr.bf16.mxu0 0
        %6150 = vmatpush1.bf16.msra.mxu0 %v6128
        %6151 = vmatprep.subr.bf16.mxu0 0
        %6152 = vmatpush1.bf16.msra.mxu0 %v6127
        %6153 = vmatprep.subr.bf16.mxu0 0
        %6154 = vmatpush1.bf16.msra.mxu0 %v6126
        %6155 = vmatprep.subr.bf16.mxu0 0
        %6156 = vmatpush1.bf16.msra.mxu0 %v6125
        %6157 = vmatprep.subr.bf16.mxu0 0
        %6158 = vmatpush2.bf16.msra.mxu0 0
        %6159 = vmatprep.subr.bf16.mxu0 0
        %6160 = vmatpush2.bf16.msra.mxu0 0
        %6161 = vmatprep.subr.bf16.mxu0 0
        %6162 = vmatpush2.bf16.msra.mxu0 0
        %6163 = vmatprep.subr.bf16.mxu0 0
        %6164 = vmatpush2.bf16.msra.mxu0 0
        %6165 = vmatprep.subr.bf16.mxu0 0
        %6166 = vmatpush2.bf16.msra.mxu0 0
        %6167 = vmatprep.subr.bf16.mxu0 0
        %6168 = vmatpush2.bf16.msra.mxu0 0
        %6169 = vmatprep.subr.bf16.mxu0 0
        %6170 = vmatpush2.bf16.msra.mxu0 0
        %6171 = vmatprep.subr.bf16.mxu0 0
        %6172 = vmatpush2.bf16.msra.mxu0 0
        %6173 = vmatprep.mubr.bf16.mxu0 0
        %6174 = vmatmul.mubr.bf16.gmra.mxu0 %v6091
        %v6175 = vpop.f32.mrf.mxu0
        %v6176 = vadd.f32 0.0, %v6175
        %v6177 = vpop.f32.mrf.mxu0
        %v6178 = vpop.f32.mrf.mxu0
        %v6179 = vpop.f32.mrf.mxu0
        %6180 = vdwg.mxu0
        %v6181 = vadd.f32 %v6073, %v6176
        %s6182 = scalar_lea.vmem %s14, 448
        %v6183 = vld [vmem:[%s6182] sm:$0xf]
        %v6184 = vld [vmem:[%s6182 + $0x4] sm:$0xf]
        %v6185 = vld [vmem:[%s6182 + $0x8] sm:$0xf]
        %v6186 = vld [vmem:[%s6182 + $0xc] sm:$0xf]
        %v6187 = vld [vmem:[%s6182 + $0x10] sm:$0xf]
        %v6188 = vld [vmem:[%s6182 + $0x14] sm:$0xf]
        %v6189 = vld [vmem:[%s6182 + $0x18] sm:$0xf]
        %v6190 = vld [vmem:[%s6182 + $0x1c] sm:$0xf]
        %v6191 = vld [vmem:[%s6182 + $0x20] sm:$0xf]
        %v6192 = vld [vmem:[%s6182 + $0x24] sm:$0xf]
        %v6193 = vld [vmem:[%s6182 + $0x28] sm:$0xf]
        %v6194 = vld [vmem:[%s6182 + $0x2c] sm:$0xf]
        %v6195 = vld [vmem:[%s6182 + $0x30] sm:$0xf]
        %v6196 = vld [vmem:[%s6182 + $0x34] sm:$0xf]
        %v6197 = vld [vmem:[%s6182 + $0x38] sm:$0xf]
        %v6198 = vld [vmem:[%s6182 + $0x3c] sm:$0xf]
        %v6199 = vrot.slane %v5549, 3
        %v6217 = vunpack.c.l.b16 %v6183
        %v6218 = vunpack.c.l.b16 %v6184
        %v6219 = vunpack.c.l.b16 %v6185
        %v6220 = vunpack.c.l.b16 %v6186
        %v6221 = vunpack.c.l.b16 %v6187
        %v6222 = vunpack.c.l.b16 %v6188
        %v6223 = vunpack.c.l.b16 %v6189
        %v6224 = vunpack.c.l.b16 %v6190
        %v6225 = vunpack.c.l.b16 %v6191
        %v6226 = vunpack.c.l.b16 %v6192
        %v6227 = vunpack.c.l.b16 %v6193
        %v6228 = vunpack.c.l.b16 %v6194
        %v6229 = vunpack.c.l.b16 %v6195
        %v6230 = vunpack.c.l.b16 %v6196
        %v6231 = vunpack.c.l.b16 %v6197
        %v6232 = vunpack.c.l.b16 %v6198
        %v6233 = vpack.c.b16 %v6218, %v6217
        %v6234 = vpack.c.b16 %v6220, %v6219
        %v6235 = vpack.c.b16 %v6222, %v6221
        %v6236 = vpack.c.b16 %v6224, %v6223
        %v6237 = vpack.c.b16 %v6226, %v6225
        %v6238 = vpack.c.b16 %v6228, %v6227
        %v6239 = vpack.c.b16 %v6230, %v6229
        %v6240 = vpack.c.b16 %v6232, %v6231
        %6249 = vmatprep.subr.bf16.mxu0 0
        %6250 = vmatpush1.bf16.msra.mxu0 %v6240
        %6251 = vmatprep.subr.bf16.mxu0 0
        %6252 = vmatpush1.bf16.msra.mxu0 %v6239
        %6253 = vmatprep.subr.bf16.mxu0 0
        %6254 = vmatpush1.bf16.msra.mxu0 %v6238
        %6255 = vmatprep.subr.bf16.mxu0 0
        %6256 = vmatpush1.bf16.msra.mxu0 %v6237
        %6257 = vmatprep.subr.bf16.mxu0 0
        %6258 = vmatpush1.bf16.msra.mxu0 %v6236
        %6259 = vmatprep.subr.bf16.mxu0 0
        %6260 = vmatpush1.bf16.msra.mxu0 %v6235
        %6261 = vmatprep.subr.bf16.mxu0 0
        %6262 = vmatpush1.bf16.msra.mxu0 %v6234
        %6263 = vmatprep.subr.bf16.mxu0 0
        %6264 = vmatpush1.bf16.msra.mxu0 %v6233
        %6265 = vmatprep.subr.bf16.mxu0 0
        %6266 = vmatpush2.bf16.msra.mxu0 0
        %6267 = vmatprep.subr.bf16.mxu0 0
        %6268 = vmatpush2.bf16.msra.mxu0 0
        %6269 = vmatprep.subr.bf16.mxu0 0
        %6270 = vmatpush2.bf16.msra.mxu0 0
        %6271 = vmatprep.subr.bf16.mxu0 0
        %6272 = vmatpush2.bf16.msra.mxu0 0
        %6273 = vmatprep.subr.bf16.mxu0 0
        %6274 = vmatpush2.bf16.msra.mxu0 0
        %6275 = vmatprep.subr.bf16.mxu0 0
        %6276 = vmatpush2.bf16.msra.mxu0 0
        %6277 = vmatprep.subr.bf16.mxu0 0
        %6278 = vmatpush2.bf16.msra.mxu0 0
        %6279 = vmatprep.subr.bf16.mxu0 0
        %6280 = vmatpush2.bf16.msra.mxu0 0
        %6281 = vmatprep.mubr.bf16.mxu0 0
        %6282 = vmatmul.mubr.bf16.gmra.mxu0 %v6199
        %v6283 = vpop.f32.mrf.mxu0
        %v6284 = vadd.f32 0.0, %v6283
        %v6285 = vpop.f32.mrf.mxu0
        %v6286 = vpop.f32.mrf.mxu0
        %v6287 = vpop.f32.mrf.mxu0
        %6288 = vdwg.mxu0
        %v6289 = vadd.f32 %v6181, %v6284
        %vm6290 = vcmask 253952
        %6291 = vst.msk [vmem:[%s626] sm:$0x1] %vm6290, %v6289
        %p6292 = scmp.lt.s32.totalorder %s32, 1
        %s6293 = scalar_select %p6292, %s32, 1
        %s6294 = scalar_lea.vmem %s16, %s6293
        // Predicated region
        $region117: #{encoder_forward.1} parent=83 // pred_check
          %p6295 = pneg %p391
        $region118: #{encoder_forward.1} parent=83 // pred_check_branch
          %6297 = sbr.rel (%p6295) target = $region120
        $region119: #{encoder_forward.1} parent=83 // pred_region
          _
        $region120: #{encoder_forward.1} parent=83 // pred_fallthru
          _
      $region84: #{encoder_forward.1} parent=5 // pred_fallthru
        _
      %p6298 = scmp.le.s32.totalorder 2, %s27
      // Predicated region
      $region121: #{encoder_forward.1} parent=5 // pred_check
        %p6299 = pneg %p6298
      $region122: #{encoder_forward.1} parent=5 // pred_check_branch
        %6301 = sbr.rel (%p6299) target = $region124
      $region123: #{encoder_forward.1} parent=5 // pred_region
        %s6302 = ssub.s32 %s27, 2
        // Predicated region
        $region125: #{encoder_forward.1} parent=123 // pred_check
          %p6303 = pneg %p397
        $region126: #{encoder_forward.1} parent=123 // pred_check_branch
          %6305 = sbr.rel (%p6303) target = $region128
        $region127: #{encoder_forward.1} parent=123 // pred_region
          %p6306 = scmp.lt.s32.totalorder %s33, 1
          %s6307 = scalar_select %p6306, %s33, 1
          %s6308 = scalar_lea.vmem %s16, %s6307
        $region128: #{encoder_forward.1} parent=123 // pred_fallthru
          _
      $region124: #{encoder_forward.1} parent=5 // pred_fallthru
        _
    $region6: #{encoder_forward.1} parent=1 // loop_footer
      %s31 = sadd.s32 1, %s27
    $region7: #{encoder_forward.1} parent=1 // loop_footer_branch
      %26 = sbr.rel target = $region3
    $region8: #{encoder_forward.1} parent=1 // loop_exit
      _
    %6309 = vsyncpa [#allocation3], 1
    %s6310 = scalar_lea.sflag [#allocation3], 1
    %6311 = vsyncpa %s6310, 1
    %6312 = vsyncpa [#allocation5], 1
    %6313 = vsyncpa [#allocation8], 1
    %6314 = vsyncpa [#allocation11], 1
    %6315 = vsyncpa [#allocation14], 1

</llo_original>
